<compile_context>
chip_gen: v6e
topology: v6e:2x2x1
jax: 0.10.0
libtpu: 0.0.40
codegen_flags: <defaults>
</compile_context>

<pallas_src>
import numpy as np
import jax
import jax.numpy as jnp
from jax import lax
from jax.experimental import pallas as pl
from jax.experimental.pallas import tpu as pltpu


_NB = 8  # batch rows per grid step (sublane-aligned batch tile)


# ----------------------------- Pallas kernel --------------------------------

def _encoder_kernel(x_ref, m1_ref, b1_ref, w2_ref, b2_ref, wh_ref, bh_ref,
                    out_ref):
    f32 = jnp.float32
    bf16 = jnp.bfloat16
    row1 = w2_ref.shape[1]              # h1 * 32 lanes per conv1 output row
    h1 = m1_ref.shape[1] // row1        # conv1 output height
    h2 = wh_ref.shape[0]                # conv2 output height
    nb = out_ref.shape[0]               # batch rows in this block
    c2 = w2_ref.shape[2]                # h2 * 64 conv2 lanes per output row

    # ---- conv1 + ReLU: one dense bf16 matmul against the unrolled-conv
    #      (Toeplitz) matrix; output columns ordered (ph, pw, ci). ----
    x = x_ref[...].astype(bf16)
    y1 = jnp.dot(x, m1_ref[...], preferred_element_type=f32)
    y1 = jnp.maximum(y1 + b1_ref[...], 0.0).astype(bf16)       # (nb, h1*h1*32)

    # ---- conv2 + ReLU + fused fc_mu/fc_logvar heads, decomposed over the
    #      conv2 output row qh and kernel row kh.  Height taps = 256-lane
    #      aligned static slices of y1; only compact per-kh width-Toeplitz
    #      weights are streamed from HBM.  Out-of-range taps (zero padding)
    #      are simply skipped. ----
    out = jnp.zeros((nb, wh_ref.shape[2]), f32)
    for qh in range(h2):
        acc = jnp.zeros((nb, c2), f32)
        for kh in range(3):
            ph = 2 * qh + kh - 1                      # conv1 row for this tap
            if 0 <= ph < h1:
                acc = acc + jnp.dot(y1[:, ph * row1:(ph + 1) * row1],
                                    w2_ref[kh], preferred_element_type=f32)
        y2 = jnp.maximum(acc + b2_ref[...], 0.0).astype(bf16)   # (nb, h2*64)
        out = out + jnp.dot(y2, wh_ref[qh], preferred_element_type=f32)
    out_ref[...] = out + bh_ref[...]


# ------------------------------- Wrapper -------------------------------------

@jax.jit
def _encoder_forward(x_nchw, m1, b1e, w2t, b2e, wht, bh):
    n = x_nchw.shape[0]
    nq2 = x_nchw.shape[2] * x_nchw.shape[3]
    two_l = wht.shape[2]
    h1 = w2t.shape[1] // 32
    h2 = wht.shape[0]

    # C == 1, so PyTorch's NCHW .view flatten equals a row-major (h, w) flatten.
    x_flat = x_nchw.reshape(n, nq2).astype(jnp.float32)
    n_pad = ((n + _NB - 1) // _NB) * _NB
    if n_pad != n:
        x_flat = jnp.pad(x_flat, ((0, n_pad - n), (0, 0)))
    nblk = n_pad // _NB

    n_taps = sum(1 for qh in range(h2) for kh in range(3)
                 if 0 <= 2 * qh + kh - 1 < h1)
    flops = nblk * 2 * _NB * (nq2 * m1.shape[1]
                              + n_taps * w2t.shape[1] * w2t.shape[2]
                              + h2 * wht.shape[1] * wht.shape[2])
    bytes_accessed = (2 * (m1.size + w2t.size + wht.size)          # bf16 weights
                      + 4 * (b1e.size + b2e.size + bh.size)        # f32 biases
                      + 4 * (x_flat.size + n_pad * two_l))         # f32 act I/O

    out = pl.pallas_call(
        _encoder_kernel,
        out_shape=jax.ShapeDtypeStruct((n_pad, two_l), jnp.float32),
        grid_spec=pltpu.PrefetchScalarGridSpec(
            num_scalar_prefetch=0,
            grid=(nblk,),
            in_specs=[
                pl.BlockSpec((_NB, nq2), lambda i: (i, 0)),          # x tile
                pl.BlockSpec(tuple(m1.shape), lambda i: (0, 0)),     # weights:
                pl.BlockSpec(tuple(b1e.shape), lambda i: (0, 0)),    # constant
                pl.BlockSpec(tuple(w2t.shape), lambda i: (0, 0, 0)), # index ->
                pl.BlockSpec(tuple(b2e.shape), lambda i: (0, 0)),    # fetched
                pl.BlockSpec(tuple(wht.shape), lambda i: (0, 0, 0)), # once,
                pl.BlockSpec(tuple(bh.shape), lambda i: (0, 0)),     # VMEM-res.
            ],
            out_specs=pl.BlockSpec((_NB, two_l), lambda i: (i, 0)),
        ),
        compiler_params=pltpu.CompilerParams(
            dimension_semantics=("parallel",),
            vmem_limit_bytes=32 * 1024 * 1024),
        cost_estimate=pl.CostEstimate(flops=int(flops), transcendentals=0,
                                      bytes_accessed=int(bytes_accessed)),
    )(x_flat, m1, b1e, w2t, b2e, wht, bh)

    latent = two_l // 2
    return out[:n, :latent], out[:n, latent:]


# ------------------------------- Module --------------------------------------

class EncoderPallas:
    def __init__(self, latent_dim, nq, key):
        k1, k2, k3, k4, k5, k6, k7, k8 = jax.random.split(key, 8)
        # Parameters kept in PyTorch layout (also used by the pure-JAX check).
        self.w1 = jax.random.normal(k1, (32, 1, 3, 3), jnp.float32) * 0.10
        self.b1 = jax.random.normal(k2, (32,), jnp.float32) * 0.10
        self.w2 = jax.random.normal(k3, (64, 32, 3, 3), jnp.float32) * 0.05
        self.b2 = jax.random.normal(k4, (64,), jnp.float32) * 0.05

        h1 = (nq + 2 - 3) // 2 + 1
        h2 = (h1 + 2 - 3) // 2 + 1
        self.nq, self.h1, self.h2 = nq, h1, h2
        self.flatten_dim = 64 * h2 * h2
        self.latent_dim = latent_dim

        self.w_mu = jax.random.normal(k5, (latent_dim, self.flatten_dim),
                                      jnp.float32) * 0.02
        self.b_mu = jax.random.normal(k6, (latent_dim,), jnp.float32) * 0.02
        self.w_lv = jax.random.normal(k7, (latent_dim, self.flatten_dim),
                                      jnp.float32) * 0.02
        self.b_lv = jax.random.normal(k8, (latent_dim,), jnp.float32) * 0.02

        self._build_fused_params()

    def _build_fused_params(self):
        """One-time: fold conv1's stride/pad/im2col into a dense Toeplitz
        matrix, conv2 into 3 compact per-kernel-row width-Toeplitz blocks, and
        the NCHW-flatten permutation into per-output-row head weight slabs.
        All matmul weights stored in bf16 (f32 accumulation in the kernel)."""
        nq, h1, h2 = self.nq, self.h1, self.h2
        L = self.latent_dim
        w1 = np.asarray(self.w1); b1 = np.asarray(self.b1)
        w2 = np.asarray(self.w2); b2 = np.asarray(self.b2)
        w_mu = np.asarray(self.w_mu); w_lv = np.asarray(self.w_lv)
        b_mu = np.asarray(self.b_mu); b_lv = np.asarray(self.b_lv)

        # conv1 -> dense (nq*nq, h1*h1*32) Toeplitz; output cols = (ph, pw, ci).
        m1 = np.zeros((nq * nq, h1 * h1 * 32), np.float32)
        for ph in range(h1):
            for pw in range(h1):
                q = ph * h1 + pw
                for kh in range(3):
                    for kw in range(3):
                        ih, iw = 2 * ph + kh - 1, 2 * pw + kw - 1
                        if 0 <= ih < nq and 0 <= iw < nq:
                            m1[ih * nq + iw, q * 32:(q + 1) * 32] = w1[:, 0, kh, kw]
        b1e = np.tile(b1, h1 * h1).reshape(1, -1)

        # conv2 -> 3 per-kh width-Toeplitz blocks (h1*32, h2*64); the height
        # taps (and their zero padding) are handled by slicing y1 in-kernel.
        w2t = np.zeros((3, h1 * 32, h2 * 64), np.float32)
        for kh in range(3):
            for qw in range(h2):
                for kw in range(3):
                    pw = 2 * qw + kw - 1
                    if 0 <= pw < h1:
                        w2t[kh, pw * 32:(pw + 1) * 32, qw * 64:(qw + 1) * 64] = \
                            w2[:, :, kh, kw].T          # (Cin, Cout)
        b2e = np.tile(b2, h2).reshape(1, -1)

        # fc_mu / fc_logvar fused and split per conv2 output row qh:
        #   PyTorch flatten index f = co*h2*h2 + qh*h2 + qw  (NCHW .view order)
        #   kernel per-qh activation column c = qw*64 + co.
        whead = np.concatenate([w_mu, w_lv], axis=0)    # (2L, F)
        qw_idx = np.repeat(np.arange(h2), 64)           # c -> qw
        co_idx = np.tile(np.arange(64), h2)             # c -> co
        wht = np.zeros((h2, h2 * 64, 2 * L), np.float32)
        for qh in range(h2):
            f_idx = co_idx * (h2 * h2) + qh * h2 + qw_idx
            wht[qh] = whead[:, f_idx].T                 # (h2*64, 2L)
        bh = np.concatenate([b_mu, b_lv]).reshape(1, -1)

        self.m1 = jnp.asarray(m1, jnp.bfloat16)
        self.b1e = jnp.asarray(b1e, jnp.float32)
        self.w2t = jnp.asarray(w2t, jnp.bfloat16)
        self.b2e = jnp.asarray(b2e, jnp.float32)
        self.wht = jnp.asarray(wht, jnp.bfloat16)
        self.bh = jnp.asarray(bh, jnp.float32)

    def __call__(self, x_nchw):
        return _encoder_forward(x_nchw, self.m1, self.b1e, self.w2t, self.b2e,
                                self.wht, self.bh)


# -------------------- pure-JAX reference (for validation) -------------------

def _reference_forward(enc, x_nchw):
    dn = ("NCHW", "OIHW", "NCHW")
    y = lax.conv_general_dilated(x_nchw, enc.w1, (2, 2), ((1, 1), (1, 1)),
                                 dimension_numbers=dn,
                                 precision=lax.Precision.HIGHEST)
    y = jnp.maximum(y + enc.b1.reshape(1, -1, 1, 1), 0.0)
    y = lax.conv_general_dilated(y, enc.w2, (2, 2), ((1, 1), (1, 1)),
                                 dimension_numbers=dn,
                                 precision=lax.Precision.HIGHEST)
    y = jnp.maximum(y + enc.b2.reshape(1, -1, 1, 1), 0.0)
    flat = y.reshape(x_nchw.shape[0], -1)       # NCHW flatten, like PyTorch
    mu = jnp.dot(flat, enc.w_mu.T, precision=lax.Precision.HIGHEST) + enc.b_mu
    lv = jnp.dot(flat, enc.w_lv.T, precision=lax.Precision.HIGHEST) + enc.b_lv
    return mu, lv


if __name__ == "__main__":
    batch, nq, latent_dim = 2, 16, 8
    key = jax.random.PRNGKey(0)
    k_params, k_x = jax.random.split(key)

    enc = EncoderPallas(latent_dim, nq, k_params)
    x = jax.random.normal(k_x, (batch, 1, nq, nq), jnp.float32)   # NCHW input

    mu, logvar = enc(x)
    jax.block_until_ready((mu, logvar))
    assert mu.shape == (batch, latent_dim)
    assert logvar.shape == (batch, latent_dim)

    # Validate the fused Pallas kernel against a plain XLA (f32) implementation
    # of the original PyTorch module.  Tolerances account for bf16 weights.
    mu_ref, lv_ref = _reference_forward(enc, x)
    np.testing.assert_allclose(np.asarray(mu), np.asarray(mu_ref),
                               rtol=2e-2, atol=5e-3)
    np.testing.assert_allclose(np.asarray(logvar), np.asarray(lv_ref),
                               rtol=2e-2, atol=5e-3)

    print("KERNEL_OK")
</pallas_src>

<mosaic_0001>
module attributes {stable_mosaic.version = 11 : i64} {
  func.func @_encoder_kernel(%arg0: i32, %arg1: memref<8x256xf32, #tpu.memory_space<vmem>>, %arg2: memref<256x2048xbf16, #tpu.memory_space<vmem>>, %arg3: memref<1x2048xf32, #tpu.memory_space<vmem>>, %arg4: memref<3x256x256xbf16, #tpu.memory_space<vmem>>, %arg5: memref<1x256xf32, #tpu.memory_space<vmem>>, %arg6: memref<4x256x16xbf16, #tpu.memory_space<vmem>>, %arg7: memref<1x16xf32, #tpu.memory_space<vmem>>, %arg8: memref<8x16xf32, #tpu.memory_space<vmem>>) attributes {dimension_semantics = [#tpu.dimension_semantics<parallel>], iteration_bounds = array<i64: 1>, scalar_prefetch = 0 : i64, scratch_operands = 0 : i64, tpu.core_type = #tpu.core_type<tc>, window_params = [{transform_indices = @transform_0, window_bounds = array<i64: 8, 256>}, {pipeline_mode = #tpu.pipeline_mode<synchronous>, transform_indices = @transform_1, window_bounds = array<i64: 256, 2048>}, {pipeline_mode = #tpu.pipeline_mode<synchronous>, transform_indices = @transform_2, window_bounds = array<i64: 1, 2048>}, {pipeline_mode = #tpu.pipeline_mode<synchronous>, transform_indices = @transform_3, window_bounds = array<i64: 3, 256, 256>}, {pipeline_mode = #tpu.pipeline_mode<synchronous>, transform_indices = @transform_4, window_bounds = array<i64: 1, 256>}, {pipeline_mode = #tpu.pipeline_mode<synchronous>, transform_indices = @transform_5, window_bounds = array<i64: 4, 256, 16>}, {pipeline_mode = #tpu.pipeline_mode<synchronous>, transform_indices = @transform_6, window_bounds = array<i64: 1, 16>}, {transform_indices = @transform_7, window_bounds = array<i64: 8, 16>}]} {
    %c0 = arith.constant 0 : index
    %c0_0 = arith.constant 0 : index
    %0 = vector.load %arg1[%c0, %c0_0] : memref<8x256xf32, #tpu.memory_space<vmem>>, vector<8x256xf32>
    %1 = arith.truncf %0 : vector<8x256xf32> to vector<8x256xbf16>
    %c0_1 = arith.constant 0 : index
    %c0_2 = arith.constant 0 : index
    %2 = vector.load %arg2[%c0_1, %c0_2] : memref<256x2048xbf16, #tpu.memory_space<vmem>>, vector<256x2048xbf16>
    %cst = arith.constant dense<0.000000e+00> : vector<8x2048xf32>
    %3 = tpu.matmul %1, %2, %cst {dimension_numbers = #tpu.dot_dimension_numbers<[1], [0], [0], [1], [0, 0, 1, 1], [], []>} : vector<8x256xbf16>, vector<256x2048xbf16>, vector<8x2048xf32> -> vector<8x2048xf32>
    %c0_3 = arith.constant 0 : index
    %c0_4 = arith.constant 0 : index
    %4 = vector.load %arg3[%c0_3, %c0_4] : memref<1x2048xf32, #tpu.memory_space<vmem>>, vector<1x2048xf32>
    %5 = vector.broadcast %4 : vector<1x2048xf32> to vector<8x2048xf32>
    %6 = arith.addf %3, %5 : vector<8x2048xf32>
    %cst_5 = arith.constant 0.000000e+00 : f32
    %7 = vector.broadcast %cst_5 : f32 to vector<8x2048xf32>
    %8 = arith.maximumf %6, %7 : vector<8x2048xf32>
    %9 = arith.truncf %8 : vector<8x2048xf32> to vector<8x2048xbf16>
    %cst_6 = arith.constant 0.000000e+00 : f32
    %10 = vector.broadcast %cst_6 : f32 to vector<8x16xf32>
    %cst_7 = arith.constant 0.000000e+00 : f32
    %11 = vector.broadcast %cst_7 : f32 to vector<8x256xf32>
    %12 = vector.extract_strided_slice %9 {offsets = [0, 0], sizes = [8, 256], strides = [1, 1]} : vector<8x2048xbf16> to vector<8x256xbf16>
    %c1 = arith.constant 1 : index
    %c0_8 = arith.constant 0 : index
    %c0_9 = arith.constant 0 : index
    %13 = vector.load %arg4[%c1, %c0_8, %c0_9] : memref<3x256x256xbf16, #tpu.memory_space<vmem>>, vector<1x256x256xbf16>
    %14 = vector.shape_cast %13 : vector<1x256x256xbf16> to vector<256x256xbf16>
    %cst_10 = arith.constant dense<0.000000e+00> : vector<8x256xf32>
    %15 = tpu.matmul %12, %14, %cst_10 {dimension_numbers = #tpu.dot_dimension_numbers<[1], [0], [0], [1], [0, 0, 1, 1], [], []>} : vector<8x256xbf16>, vector<256x256xbf16>, vector<8x256xf32> -> vector<8x256xf32>
    %16 = arith.addf %11, %15 : vector<8x256xf32>
    %17 = vector.extract_strided_slice %9 {offsets = [0, 256], sizes = [8, 256], strides = [1, 1]} : vector<8x2048xbf16> to vector<8x256xbf16>
    %c2 = arith.constant 2 : index
    %c0_11 = arith.constant 0 : index
    %c0_12 = arith.constant 0 : index
    %18 = vector.load %arg4[%c2, %c0_11, %c0_12] : memref<3x256x256xbf16, #tpu.memory_space<vmem>>, vector<1x256x256xbf16>
    %19 = vector.shape_cast %18 : vector<1x256x256xbf16> to vector<256x256xbf16>
    %cst_13 = arith.constant dense<0.000000e+00> : vector<8x256xf32>
    %20 = tpu.matmul %17, %19, %cst_13 {dimension_numbers = #tpu.dot_dimension_numbers<[1], [0], [0], [1], [0, 0, 1, 1], [], []>} : vector<8x256xbf16>, vector<256x256xbf16>, vector<8x256xf32> -> vector<8x256xf32>
    %21 = arith.addf %16, %20 : vector<8x256xf32>
    %c0_14 = arith.constant 0 : index
    %c0_15 = arith.constant 0 : index
    %22 = vector.load %arg5[%c0_14, %c0_15] : memref<1x256xf32, #tpu.memory_space<vmem>>, vector<1x256xf32>
    %23 = vector.broadcast %22 : vector<1x256xf32> to vector<8x256xf32>
    %24 = arith.addf %21, %23 : vector<8x256xf32>
    %cst_16 = arith.constant 0.000000e+00 : f32
    %25 = vector.broadcast %cst_16 : f32 to vector<8x256xf32>
    %26 = arith.maximumf %24, %25 : vector<8x256xf32>
    %27 = arith.truncf %26 : vector<8x256xf32> to vector<8x256xbf16>
    %c0_17 = arith.constant 0 : index
    %c0_18 = arith.constant 0 : index
    %c0_19 = arith.constant 0 : index
    %28 = vector.load %arg6[%c0_17, %c0_18, %c0_19] : memref<4x256x16xbf16, #tpu.memory_space<vmem>>, vector<1x256x16xbf16>
    %29 = vector.shape_cast %28 : vector<1x256x16xbf16> to vector<256x16xbf16>
    %cst_20 = arith.constant dense<0.000000e+00> : vector<8x16xf32>
    %30 = tpu.matmul %27, %29, %cst_20 {dimension_numbers = #tpu.dot_dimension_numbers<[1], [0], [0], [1], [0, 0, 1, 1], [], []>} : vector<8x256xbf16>, vector<256x16xbf16>, vector<8x16xf32> -> vector<8x16xf32>
    %31 = arith.addf %10, %30 : vector<8x16xf32>
    %cst_21 = arith.constant 0.000000e+00 : f32
    %32 = vector.broadcast %cst_21 : f32 to vector<8x256xf32>
    %33 = vector.extract_strided_slice %9 {offsets = [0, 256], sizes = [8, 256], strides = [1, 1]} : vector<8x2048xbf16> to vector<8x256xbf16>
    %c0_22 = arith.constant 0 : index
    %c0_23 = arith.constant 0 : index
    %c0_24 = arith.constant 0 : index
    %34 = vector.load %arg4[%c0_22, %c0_23, %c0_24] : memref<3x256x256xbf16, #tpu.memory_space<vmem>>, vector<1x256x256xbf16>
    %35 = vector.shape_cast %34 : vector<1x256x256xbf16> to vector<256x256xbf16>
    %cst_25 = arith.constant dense<0.000000e+00> : vector<8x256xf32>
    %36 = tpu.matmul %33, %35, %cst_25 {dimension_numbers = #tpu.dot_dimension_numbers<[1], [0], [0], [1], [0, 0, 1, 1], [], []>} : vector<8x256xbf16>, vector<256x256xbf16>, vector<8x256xf32> -> vector<8x256xf32>
    %37 = arith.addf %32, %36 : vector<8x256xf32>
    %38 = vector.extract_strided_slice %9 {offsets = [0, 512], sizes = [8, 256], strides = [1, 1]} : vector<8x2048xbf16> to vector<8x256xbf16>
    %c1_26 = arith.constant 1 : index
    %c0_27 = arith.constant 0 : index
    %c0_28 = arith.constant 0 : index
    %39 = vector.load %arg4[%c1_26, %c0_27, %c0_28] : memref<3x256x256xbf16, #tpu.memory_space<vmem>>, vector<1x256x256xbf16>
    %40 = vector.shape_cast %39 : vector<1x256x256xbf16> to vector<256x256xbf16>
    %cst_29 = arith.constant dense<0.000000e+00> : vector<8x256xf32>
    %41 = tpu.matmul %38, %40, %cst_29 {dimension_numbers = #tpu.dot_dimension_numbers<[1], [0], [0], [1], [0, 0, 1, 1], [], []>} : vector<8x256xbf16>, vector<256x256xbf16>, vector<8x256xf32> -> vector<8x256xf32>
    %42 = arith.addf %37, %41 : vector<8x256xf32>
    %43 = vector.extract_strided_slice %9 {offsets = [0, 768], sizes = [8, 256], strides = [1, 1]} : vector<8x2048xbf16> to vector<8x256xbf16>
    %c2_30 = arith.constant 2 : index
    %c0_31 = arith.constant 0 : index
    %c0_32 = arith.constant 0 : index
    %44 = vector.load %arg4[%c2_30, %c0_31, %c0_32] : memref<3x256x256xbf16, #tpu.memory_space<vmem>>, vector<1x256x256xbf16>
    %45 = vector.shape_cast %44 : vector<1x256x256xbf16> to vector<256x256xbf16>
    %cst_33 = arith.constant dense<0.000000e+00> : vector<8x256xf32>
    %46 = tpu.matmul %43, %45, %cst_33 {dimension_numbers = #tpu.dot_dimension_numbers<[1], [0], [0], [1], [0, 0, 1, 1], [], []>} : vector<8x256xbf16>, vector<256x256xbf16>, vector<8x256xf32> -> vector<8x256xf32>
    %47 = arith.addf %42, %46 : vector<8x256xf32>
    %c0_34 = arith.constant 0 : index
    %c0_35 = arith.constant 0 : index
    %48 = vector.load %arg5[%c0_34, %c0_35] : memref<1x256xf32, #tpu.memory_space<vmem>>, vector<1x256xf32>
    %49 = vector.broadcast %48 : vector<1x256xf32> to vector<8x256xf32>
    %50 = arith.addf %47, %49 : vector<8x256xf32>
    %cst_36 = arith.constant 0.000000e+00 : f32
    %51 = vector.broadcast %cst_36 : f32 to vector<8x256xf32>
    %52 = arith.maximumf %50, %51 : vector<8x256xf32>
    %53 = arith.truncf %52 : vector<8x256xf32> to vector<8x256xbf16>
    %c1_37 = arith.constant 1 : index
    %c0_38 = arith.constant 0 : index
    %c0_39 = arith.constant 0 : index
    %54 = vector.load %arg6[%c1_37, %c0_38, %c0_39] : memref<4x256x16xbf16, #tpu.memory_space<vmem>>, vector<1x256x16xbf16>
    %55 = vector.shape_cast %54 : vector<1x256x16xbf16> to vector<256x16xbf16>
    %cst_40 = arith.constant dense<0.000000e+00> : vector<8x16xf32>
    %56 = tpu.matmul %53, %55, %cst_40 {dimension_numbers = #tpu.dot_dimension_numbers<[1], [0], [0], [1], [0, 0, 1, 1], [], []>} : vector<8x256xbf16>, vector<256x16xbf16>, vector<8x16xf32> -> vector<8x16xf32>
    %57 = arith.addf %31, %56 : vector<8x16xf32>
    %cst_41 = arith.constant 0.000000e+00 : f32
    %58 = vector.broadcast %cst_41 : f32 to vector<8x256xf32>
    %59 = vector.extract_strided_slice %9 {offsets = [0, 768], sizes = [8, 256], strides = [1, 1]} : vector<8x2048xbf16> to vector<8x256xbf16>
    %c0_42 = arith.constant 0 : index
    %c0_43 = arith.constant 0 : index
    %c0_44 = arith.constant 0 : index
    %60 = vector.load %arg4[%c0_42, %c0_43, %c0_44] : memref<3x256x256xbf16, #tpu.memory_space<vmem>>, vector<1x256x256xbf16>
    %61 = vector.shape_cast %60 : vector<1x256x256xbf16> to vector<256x256xbf16>
    %cst_45 = arith.constant dense<0.000000e+00> : vector<8x256xf32>
    %62 = tpu.matmul %59, %61, %cst_45 {dimension_numbers = #tpu.dot_dimension_numbers<[1], [0], [0], [1], [0, 0, 1, 1], [], []>} : vector<8x256xbf16>, vector<256x256xbf16>, vector<8x256xf32> -> vector<8x256xf32>
    %63 = arith.addf %58, %62 : vector<8x256xf32>
    %64 = vector.extract_strided_slice %9 {offsets = [0, 1024], sizes = [8, 256], strides = [1, 1]} : vector<8x2048xbf16> to vector<8x256xbf16>
    %c1_46 = arith.constant 1 : index
    %c0_47 = arith.constant 0 : index
    %c0_48 = arith.constant 0 : index
    %65 = vector.load %arg4[%c1_46, %c0_47, %c0_48] : memref<3x256x256xbf16, #tpu.memory_space<vmem>>, vector<1x256x256xbf16>
    %66 = vector.shape_cast %65 : vector<1x256x256xbf16> to vector<256x256xbf16>
    %cst_49 = arith.constant dense<0.000000e+00> : vector<8x256xf32>
    %67 = tpu.matmul %64, %66, %cst_49 {dimension_numbers = #tpu.dot_dimension_numbers<[1], [0], [0], [1], [0, 0, 1, 1], [], []>} : vector<8x256xbf16>, vector<256x256xbf16>, vector<8x256xf32> -> vector<8x256xf32>
    %68 = arith.addf %63, %67 : vector<8x256xf32>
    %69 = vector.extract_strided_slice %9 {offsets = [0, 1280], sizes = [8, 256], strides = [1, 1]} : vector<8x2048xbf16> to vector<8x256xbf16>
    %c2_50 = arith.constant 2 : index
    %c0_51 = arith.constant 0 : index
    %c0_52 = arith.constant 0 : index
    %70 = vector.load %arg4[%c2_50, %c0_51, %c0_52] : memref<3x256x256xbf16, #tpu.memory_space<vmem>>, vector<1x256x256xbf16>
    %71 = vector.shape_cast %70 : vector<1x256x256xbf16> to vector<256x256xbf16>
    %cst_53 = arith.constant dense<0.000000e+00> : vector<8x256xf32>
    %72 = tpu.matmul %69, %71, %cst_53 {dimension_numbers = #tpu.dot_dimension_numbers<[1], [0], [0], [1], [0, 0, 1, 1], [], []>} : vector<8x256xbf16>, vector<256x256xbf16>, vector<8x256xf32> -> vector<8x256xf32>
    %73 = arith.addf %68, %72 : vector<8x256xf32>
    %c0_54 = arith.constant 0 : index
    %c0_55 = arith.constant 0 : index
    %74 = vector.load %arg5[%c0_54, %c0_55] : memref<1x256xf32, #tpu.memory_space<vmem>>, vector<1x256xf32>
    %75 = vector.broadcast %74 : vector<1x256xf32> to vector<8x256xf32>
    %76 = arith.addf %73, %75 : vector<8x256xf32>
    %cst_56 = arith.constant 0.000000e+00 : f32
    %77 = vector.broadcast %cst_56 : f32 to vector<8x256xf32>
    %78 = arith.maximumf %76, %77 : vector<8x256xf32>
    %79 = arith.truncf %78 : vector<8x256xf32> to vector<8x256xbf16>
    %c2_57 = arith.constant 2 : index
    %c0_58 = arith.constant 0 : index
    %c0_59 = arith.constant 0 : index
    %80 = vector.load %arg6[%c2_57, %c0_58, %c0_59] : memref<4x256x16xbf16, #tpu.memory_space<vmem>>, vector<1x256x16xbf16>
    %81 = vector.shape_cast %80 : vector<1x256x16xbf16> to vector<256x16xbf16>
    %cst_60 = arith.constant dense<0.000000e+00> : vector<8x16xf32>
    %82 = tpu.matmul %79, %81, %cst_60 {dimension_numbers = #tpu.dot_dimension_numbers<[1], [0], [0], [1], [0, 0, 1, 1], [], []>} : vector<8x256xbf16>, vector<256x16xbf16>, vector<8x16xf32> -> vector<8x16xf32>
    %83 = arith.addf %57, %82 : vector<8x16xf32>
    %cst_61 = arith.constant 0.000000e+00 : f32
    %84 = vector.broadcast %cst_61 : f32 to vector<8x256xf32>
    %85 = vector.extract_strided_slice %9 {offsets = [0, 1280], sizes = [8, 256], strides = [1, 1]} : vector<8x2048xbf16> to vector<8x256xbf16>
    %c0_62 = arith.constant 0 : index
    %c0_63 = arith.constant 0 : index
    %c0_64 = arith.constant 0 : index
    %86 = vector.load %arg4[%c0_62, %c0_63, %c0_64] : memref<3x256x256xbf16, #tpu.memory_space<vmem>>, vector<1x256x256xbf16>
    %87 = vector.shape_cast %86 : vector<1x256x256xbf16> to vector<256x256xbf16>
    %cst_65 = arith.constant dense<0.000000e+00> : vector<8x256xf32>
    %88 = tpu.matmul %85, %87, %cst_65 {dimension_numbers = #tpu.dot_dimension_numbers<[1], [0], [0], [1], [0, 0, 1, 1], [], []>} : vector<8x256xbf16>, vector<256x256xbf16>, vector<8x256xf32> -> vector<8x256xf32>
    %89 = arith.addf %84, %88 : vector<8x256xf32>
    %90 = vector.extract_strided_slice %9 {offsets = [0, 1536], sizes = [8, 256], strides = [1, 1]} : vector<8x2048xbf16> to vector<8x256xbf16>
    %c1_66 = arith.constant 1 : index
    %c0_67 = arith.constant 0 : index
    %c0_68 = arith.constant 0 : index
    %91 = vector.load %arg4[%c1_66, %c0_67, %c0_68] : memref<3x256x256xbf16, #tpu.memory_space<vmem>>, vector<1x256x256xbf16>
    %92 = vector.shape_cast %91 : vector<1x256x256xbf16> to vector<256x256xbf16>
    %cst_69 = arith.constant dense<0.000000e+00> : vector<8x256xf32>
    %93 = tpu.matmul %90, %92, %cst_69 {dimension_numbers = #tpu.dot_dimension_numbers<[1], [0], [0], [1], [0, 0, 1, 1], [], []>} : vector<8x256xbf16>, vector<256x256xbf16>, vector<8x256xf32> -> vector<8x256xf32>
    %94 = arith.addf %89, %93 : vector<8x256xf32>
    %95 = vector.extract_strided_slice %9 {offsets = [0, 1792], sizes = [8, 256], strides = [1, 1]} : vector<8x2048xbf16> to vector<8x256xbf16>
    %c2_70 = arith.constant 2 : index
    %c0_71 = arith.constant 0 : index
    %c0_72 = arith.constant 0 : index
    %96 = vector.load %arg4[%c2_70, %c0_71, %c0_72] : memref<3x256x256xbf16, #tpu.memory_space<vmem>>, vector<1x256x256xbf16>
    %97 = vector.shape_cast %96 : vector<1x256x256xbf16> to vector<256x256xbf16>
    %cst_73 = arith.constant dense<0.000000e+00> : vector<8x256xf32>
    %98 = tpu.matmul %95, %97, %cst_73 {dimension_numbers = #tpu.dot_dimension_numbers<[1], [0], [0], [1], [0, 0, 1, 1], [], []>} : vector<8x256xbf16>, vector<256x256xbf16>, vector<8x256xf32> -> vector<8x256xf32>
    %99 = arith.addf %94, %98 : vector<8x256xf32>
    %c0_74 = arith.constant 0 : index
    %c0_75 = arith.constant 0 : index
    %100 = vector.load %arg5[%c0_74, %c0_75] : memref<1x256xf32, #tpu.memory_space<vmem>>, vector<1x256xf32>
    %101 = vector.broadcast %100 : vector<1x256xf32> to vector<8x256xf32>
    %102 = arith.addf %99, %101 : vector<8x256xf32>
    %cst_76 = arith.constant 0.000000e+00 : f32
    %103 = vector.broadcast %cst_76 : f32 to vector<8x256xf32>
    %104 = arith.maximumf %102, %103 : vector<8x256xf32>
    %105 = arith.truncf %104 : vector<8x256xf32> to vector<8x256xbf16>
    %c3 = arith.constant 3 : index
    %c0_77 = arith.constant 0 : index
    %c0_78 = arith.constant 0 : index
    %106 = vector.load %arg6[%c3, %c0_77, %c0_78] : memref<4x256x16xbf16, #tpu.memory_space<vmem>>, vector<1x256x16xbf16>
    %107 = vector.shape_cast %106 : vector<1x256x16xbf16> to vector<256x16xbf16>
    %cst_79 = arith.constant dense<0.000000e+00> : vector<8x16xf32>
    %108 = tpu.matmul %105, %107, %cst_79 {dimension_numbers = #tpu.dot_dimension_numbers<[1], [0], [0], [1], [0, 0, 1, 1], [], []>} : vector<8x256xbf16>, vector<256x16xbf16>, vector<8x16xf32> -> vector<8x16xf32>
    %109 = arith.addf %83, %108 : vector<8x16xf32>
    %c0_80 = arith.constant 0 : index
    %c0_81 = arith.constant 0 : index
    %110 = vector.load %arg7[%c0_80, %c0_81] : memref<1x16xf32, #tpu.memory_space<vmem>>, vector<1x16xf32>
    %111 = vector.broadcast %110 : vector<1x16xf32> to vector<8x16xf32>
    %112 = arith.addf %109, %111 : vector<8x16xf32>
    %c0_82 = arith.constant 0 : index
    %c0_83 = arith.constant 0 : index
    %113 = vector.load %arg8[%c0_82, %c0_83] : memref<8x16xf32, #tpu.memory_space<vmem>>, vector<8x16xf32>
    tpu.vector_store %arg8[%c0_82, %c0_83], %112 {strides = array<i32>} : memref<8x16xf32, #tpu.memory_space<vmem>>, vector<8x16xf32>,
    return
  }
  func.func @transform_0(%arg0: i32) -> (i32, i32) {
    %c0_i32 = arith.constant 0 : i32
    %c0_i32_0 = arith.constant 0 : i32
    return %arg0, %c0_i32 : i32, i32
  }
  func.func @transform_1(%arg0: i32) -> (i32, i32) {
    %c0_i32 = arith.constant 0 : i32
    %c0_i32_0 = arith.constant 0 : i32
    %c0_i32_1 = arith.constant 0 : i32
    return %c0_i32, %c0_i32_0 : i32, i32
  }
  func.func @transform_2(%arg0: i32) -> (i32, i32) {
    %c0_i32 = arith.constant 0 : i32
    %c0_i32_0 = arith.constant 0 : i32
    %c0_i32_1 = arith.constant 0 : i32
    return %c0_i32, %c0_i32_0 : i32, i32
  }
  func.func @transform_3(%arg0: i32) -> (i32, i32, i32) {
    %c0_i32 = arith.constant 0 : i32
    %c0_i32_0 = arith.constant 0 : i32
    %c0_i32_1 = arith.constant 0 : i32
    %c0_i32_2 = arith.constant 0 : i32
    return %c0_i32, %c0_i32_0, %c0_i32_1 : i32, i32, i32
  }
  func.func @transform_4(%arg0: i32) -> (i32, i32) {
    %c0_i32 = arith.constant 0 : i32
    %c0_i32_0 = arith.constant 0 : i32
    %c0_i32_1 = arith.constant 0 : i32
    return %c0_i32, %c0_i32_0 : i32, i32
  }
  func.func @transform_5(%arg0: i32) -> (i32, i32, i32) {
    %c0_i32 = arith.constant 0 : i32
    %c0_i32_0 = arith.constant 0 : i32
    %c0_i32_1 = arith.constant 0 : i32
    %c0_i32_2 = arith.constant 0 : i32
    return %c0_i32, %c0_i32_0, %c0_i32_1 : i32, i32, i32
  }
  func.func @transform_6(%arg0: i32) -> (i32, i32) {
    %c0_i32 = arith.constant 0 : i32
    %c0_i32_0 = arith.constant 0 : i32
    %c0_i32_1 = arith.constant 0 : i32
    return %c0_i32, %c0_i32_0 : i32, i32
  }
  func.func @transform_7(%arg0: i32) -> (i32, i32) {
    %c0_i32 = arith.constant 0 : i32
    %c0_i32_0 = arith.constant 0 : i32
    return %arg0, %c0_i32 : i32, i32
  }
}

</mosaic_0001>

<llo_original>
// kernel: _encoder_forward.1
$region0: #{_encoder_forward.1}
  #allocation0 [shape = 'u32[]', space=smem, size = 0x4, offset = 0x4, fixed_abs, tag = 'smem constant byte address 0x4 - core index']
  #allocation1 [shape = 'u32[144,128]{1,0:T(1,128)}', space=vmem, size = 0x12000, scoped, tag = 'internal scratch']
  %s0 = inlined_call_operand.vmem [shape: f32[8,256], index: 0, kind: input, shape index: {}]
  %s1 = inlined_call_operand.hbm [shape: bf16[256,2048], index: 1, kind: input, shape index: {}]
  %s2 = inlined_call_operand.vmem [shape: f32[1,2048], index: 2, kind: input, shape index: {}]
  %s3 = inlined_call_operand.hbm [shape: bf16[3,256,256], index: 3, kind: input, shape index: {}]
  %s4 = inlined_call_operand.vmem [shape: f32[1,256], index: 4, kind: input, shape index: {}]
  %s5 = inlined_call_operand.vmem [shape: bf16[4,256,16], index: 5, kind: input, shape index: {}]
  %s6 = inlined_call_operand.vmem [shape: f32[1,16], index: 6, kind: input, shape index: {}]
  %s7 = inlined_call_operand.vmem [shape: f32[8,16], index: 7, kind: output, shape index: {}]
  %s8 = sld [smem:[#allocation0]]
  $region46: #{_encoder_forward.1} parent=0
    _
  %s10 = ssub.s32 1, %s8
  %s11 = scalar_select 0, %s10, %s8
  $region1: #{_encoder_forward.1} parent=0
    #allocation2 [shape = 'u8[1048576]{0}', space=vmem, size = 0x100000, scoped, tag = 'input window, operand 1, single buffered']
    #allocation3 [shape = 's32[1]{0}', space=sflag, size = 0x4, scoped, tag = 'scoped memory for _encoder_forward.1']
    #allocation4 [shape = 'u8[393216]{0}', space=vmem, size = 0x60000, scoped, tag = 'input window, operand 3, single buffered']
    #allocation5 [shape = 's32[1]{0}', space=sflag, size = 0x4, scoped, tag = 'scoped memory for _encoder_forward.1']
    %12 = vsyncpa [#allocation3], 0
    %13 = vsyncpa [#allocation5], 0
    // Predicated region
    $region2: #{_encoder_forward.1} parent=1 // pred_check
      _
    $region3: #{_encoder_forward.1} parent=1 // pred_check_branch
      %15 = sbr.rel (0) target = $region5
    $region4: #{_encoder_forward.1} parent=1 // pred_region
      _
    $region5: #{_encoder_forward.1} parent=1 // pred_fallthru
      _
    // Predicated region
    $region6: #{_encoder_forward.1} parent=1 // pred_check
      _
    $region7: #{_encoder_forward.1} parent=1 // pred_check_branch
      %17 = sbr.rel (0) target = $region9
    $region8: #{_encoder_forward.1} parent=1 // pred_region
      %s19 = ssub.s32 32768, 32768
      %20 = vsyncadd [#allocation3], %s19
      %s21 = sshll.u32 [#allocation2], 4
      %s22 = int_to_ptr.vmem [resolvable:$true] %s21
      %27 = dma.hbm_to_vmem [thread:$0]  %s1, 32768, %s22, [#allocation3], 1024, 1024, 64
    $region9: #{_encoder_forward.1} parent=1 // pred_fallthru
      _
    // Predicated region
    $region10: #{_encoder_forward.1} parent=1 // pred_check
      _
    $region11: #{_encoder_forward.1} parent=1 // pred_check_branch
      %29 = sbr.rel (0) target = $region13
    $region12: #{_encoder_forward.1} parent=1 // pred_region
      _
    $region13: #{_encoder_forward.1} parent=1 // pred_fallthru
      _
    // Predicated region
    $region14: #{_encoder_forward.1} parent=1 // pred_check
      _
    $region15: #{_encoder_forward.1} parent=1 // pred_check_branch
      %31 = sbr.rel (0) target = $region17
    $region16: #{_encoder_forward.1} parent=1 // pred_region
      %s33 = ssub.s32 12288, 12288
      %34 = vsyncadd [#allocation5], %s33
      %s35 = sshll.u32 [#allocation4], 4
      %s36 = int_to_ptr.vmem [resolvable:$true] %s35
      %41 = dma.hbm_to_vmem [thread:$0]  %s3, 12288, %s36, [#allocation5], 128, 128, 8
    $region17: #{_encoder_forward.1} parent=1 // pred_fallthru
      _
    // Predicated region
    $region18: #{_encoder_forward.1} parent=1 // pred_check
      _
    $region19: #{_encoder_forward.1} parent=1 // pred_check_branch
      %43 = sbr.rel (0) target = $region21
    $region20: #{_encoder_forward.1} parent=1 // pred_region
      _
    $region21: #{_encoder_forward.1} parent=1 // pred_fallthru
      _
    // Predicated region
    $region22: #{_encoder_forward.1} parent=1 // pred_check
      _
    $region23: #{_encoder_forward.1} parent=1 // pred_check_branch
      %45 = sbr.rel (0) target = $region25
    $region24: #{_encoder_forward.1} parent=1 // pred_region
      _
    $region25: #{_encoder_forward.1} parent=1 // pred_fallthru
      _
    // Predicated region
    $region26: #{_encoder_forward.1} parent=1 // pred_check
      _
    $region27: #{_encoder_forward.1} parent=1 // pred_check_branch
      %47 = sbr.rel (0) target = $region29
    $region28: #{_encoder_forward.1} parent=1 // pred_region
      _
    $region29: #{_encoder_forward.1} parent=1 // pred_fallthru
      _
    // Predicated region
    $region30: #{_encoder_forward.1} parent=1 // pred_check
      _
    $region31: #{_encoder_forward.1} parent=1 // pred_check_branch
      %49 = sbr.rel (0) target = $region33
    $region32: #{_encoder_forward.1} parent=1 // pred_region
      %50 = dma.done [#allocation3], 32768
    $region33: #{_encoder_forward.1} parent=1 // pred_fallthru
      _
    // Predicated region
    $region34: #{_encoder_forward.1} parent=1 // pred_check
      _
    $region35: #{_encoder_forward.1} parent=1 // pred_check_branch
      %52 = sbr.rel (0) target = $region37
    $region36: #{_encoder_forward.1} parent=1 // pred_region
      %53 = dma.done [#allocation5], 12288
    $region37: #{_encoder_forward.1} parent=1 // pred_fallthru
      _
    %v55 = vld [vmem:[%s0] sm:$0xff]
    %v56 = vld [vmem:[%s0 + $0x8] sm:$0xff]
    %v57 = vpack.c.bf16 %v55, %v55
    %v58 = vpack.c.bf16 %v56, %v56
    %v59 = vld [vmem:[#allocation2] sm:$0xff]
    %v60 = vld [vmem:[#allocation2 + $0x8] sm:$0xff]
    %v61 = vld [vmem:[#allocation2 + $0x10] sm:$0xff]
    %v62 = vld [vmem:[#allocation2 + $0x18] sm:$0xff]
    %v63 = vld [vmem:[#allocation2 + $0x20] sm:$0xff]
    %v64 = vld [vmem:[#allocation2 + $0x28] sm:$0xff]
    %v65 = vld [vmem:[#allocation2 + $0x30] sm:$0xff]
    %v66 = vld [vmem:[#allocation2 + $0x38] sm:$0xff]
    %v67 = vld [vmem:[#allocation2 + $0x40] sm:$0xff]
    %v68 = vld [vmem:[#allocation2 + $0x48] sm:$0xff]
    %v69 = vld [vmem:[#allocation2 + $0x50] sm:$0xff]
    %v70 = vld [vmem:[#allocation2 + $0x58] sm:$0xff]
    %v71 = vld [vmem:[#allocation2 + $0x60] sm:$0xff]
    %v72 = vld [vmem:[#allocation2 + $0x68] sm:$0xff]
    %v73 = vld [vmem:[#allocation2 + $0x70] sm:$0xff]
    %v74 = vld [vmem:[#allocation2 + $0x78] sm:$0xff]
    %v75 = vld [vmem:[#allocation2 + $0x80] sm:$0xff]
    %v76 = vld [vmem:[#allocation2 + $0x88] sm:$0xff]
    %v77 = vld [vmem:[#allocation2 + $0x90] sm:$0xff]
    %v78 = vld [vmem:[#allocation2 + $0x98] sm:$0xff]
    %v79 = vld [vmem:[#allocation2 + $0xa0] sm:$0xff]
    %v80 = vld [vmem:[#allocation2 + $0xa8] sm:$0xff]
    %v81 = vld [vmem:[#allocation2 + $0xb0] sm:$0xff]
    %v82 = vld [vmem:[#allocation2 + $0xb8] sm:$0xff]
    %v83 = vld [vmem:[#allocation2 + $0xc0] sm:$0xff]
    %v84 = vld [vmem:[#allocation2 + $0xc8] sm:$0xff]
    %v85 = vld [vmem:[#allocation2 + $0xd0] sm:$0xff]
    %v86 = vld [vmem:[#allocation2 + $0xd8] sm:$0xff]
    %v87 = vld [vmem:[#allocation2 + $0xe0] sm:$0xff]
    %v88 = vld [vmem:[#allocation2 + $0xe8] sm:$0xff]
    %v89 = vld [vmem:[#allocation2 + $0xf0] sm:$0xff]
    %v90 = vld [vmem:[#allocation2 + $0xf8] sm:$0xff]
    %v91 = vld [vmem:[#allocation2 + $0x100] sm:$0xff]
    %v92 = vld [vmem:[#allocation2 + $0x108] sm:$0xff]
    %v93 = vld [vmem:[#allocation2 + $0x110] sm:$0xff]
    %v94 = vld [vmem:[#allocation2 + $0x118] sm:$0xff]
    %v95 = vld [vmem:[#allocation2 + $0x120] sm:$0xff]
    %v96 = vld [vmem:[#allocation2 + $0x128] sm:$0xff]
    %v97 = vld [vmem:[#allocation2 + $0x130] sm:$0xff]
    %v98 = vld [vmem:[#allocation2 + $0x138] sm:$0xff]
    %v99 = vld [vmem:[#allocation2 + $0x140] sm:$0xff]
    %v100 = vld [vmem:[#allocation2 + $0x148] sm:$0xff]
    %v101 = vld [vmem:[#allocation2 + $0x150] sm:$0xff]
    %v102 = vld [vmem:[#allocation2 + $0x158] sm:$0xff]
    %v103 = vld [vmem:[#allocation2 + $0x160] sm:$0xff]
    %v104 = vld [vmem:[#allocation2 + $0x168] sm:$0xff]
    %v105 = vld [vmem:[#allocation2 + $0x170] sm:$0xff]
    %v106 = vld [vmem:[#allocation2 + $0x178] sm:$0xff]
    %v107 = vld [vmem:[#allocation2 + $0x180] sm:$0xff]
    %v108 = vld [vmem:[#allocation2 + $0x188] sm:$0xff]
    %v109 = vld [vmem:[#allocation2 + $0x190] sm:$0xff]
    %v110 = vld [vmem:[#allocation2 + $0x198] sm:$0xff]
    %v111 = vld [vmem:[#allocation2 + $0x1a0] sm:$0xff]
    %v112 = vld [vmem:[#allocation2 + $0x1a8] sm:$0xff]
    %v113 = vld [vmem:[#allocation2 + $0x1b0] sm:$0xff]
    %v114 = vld [vmem:[#allocation2 + $0x1b8] sm:$0xff]
    %v115 = vld [vmem:[#allocation2 + $0x1c0] sm:$0xff]
    %v116 = vld [vmem:[#allocation2 + $0x1c8] sm:$0xff]
    %v117 = vld [vmem:[#allocation2 + $0x1d0] sm:$0xff]
    %v118 = vld [vmem:[#allocation2 + $0x1d8] sm:$0xff]
    %v119 = vld [vmem:[#allocation2 + $0x1e0] sm:$0xff]
    %v120 = vld [vmem:[#allocation2 + $0x1e8] sm:$0xff]
    %v121 = vld [vmem:[#allocation2 + $0x1f0] sm:$0xff]
    %v122 = vld [vmem:[#allocation2 + $0x1f8] sm:$0xff]
    %v123 = vld [vmem:[#allocation2 + $0x200] sm:$0xff]
    %v124 = vld [vmem:[#allocation2 + $0x208] sm:$0xff]
    %v125 = vld [vmem:[#allocation2 + $0x210] sm:$0xff]
    %v126 = vld [vmem:[#allocation2 + $0x218] sm:$0xff]
    %v127 = vld [vmem:[#allocation2 + $0x220] sm:$0xff]
    %v128 = vld [vmem:[#allocation2 + $0x228] sm:$0xff]
    %v129 = vld [vmem:[#allocation2 + $0x230] sm:$0xff]
    %v130 = vld [vmem:[#allocation2 + $0x238] sm:$0xff]
    %v131 = vld [vmem:[#allocation2 + $0x240] sm:$0xff]
    %v132 = vld [vmem:[#allocation2 + $0x248] sm:$0xff]
    %v133 = vld [vmem:[#allocation2 + $0x250] sm:$0xff]
    %v134 = vld [vmem:[#allocation2 + $0x258] sm:$0xff]
    %v135 = vld [vmem:[#allocation2 + $0x260] sm:$0xff]
    %v136 = vld [vmem:[#allocation2 + $0x268] sm:$0xff]
    %v137 = vld [vmem:[#allocation2 + $0x270] sm:$0xff]
    %v138 = vld [vmem:[#allocation2 + $0x278] sm:$0xff]
    %v139 = vld [vmem:[#allocation2 + $0x280] sm:$0xff]
    %v140 = vld [vmem:[#allocation2 + $0x288] sm:$0xff]
    %v141 = vld [vmem:[#allocation2 + $0x290] sm:$0xff]
    %v142 = vld [vmem:[#allocation2 + $0x298] sm:$0xff]
    %v143 = vld [vmem:[#allocation2 + $0x2a0] sm:$0xff]
    %v144 = vld [vmem:[#allocation2 + $0x2a8] sm:$0xff]
    %v145 = vld [vmem:[#allocation2 + $0x2b0] sm:$0xff]
    %v146 = vld [vmem:[#allocation2 + $0x2b8] sm:$0xff]
    %v147 = vld [vmem:[#allocation2 + $0x2c0] sm:$0xff]
    %v148 = vld [vmem:[#allocation2 + $0x2c8] sm:$0xff]
    %v149 = vld [vmem:[#allocation2 + $0x2d0] sm:$0xff]
    %v150 = vld [vmem:[#allocation2 + $0x2d8] sm:$0xff]
    %v151 = vld [vmem:[#allocation2 + $0x2e0] sm:$0xff]
    %v152 = vld [vmem:[#allocation2 + $0x2e8] sm:$0xff]
    %v153 = vld [vmem:[#allocation2 + $0x2f0] sm:$0xff]
    %v154 = vld [vmem:[#allocation2 + $0x2f8] sm:$0xff]
    %v155 = vld [vmem:[#allocation2 + $0x300] sm:$0xff]
    %v156 = vld [vmem:[#allocation2 + $0x308] sm:$0xff]
    %v157 = vld [vmem:[#allocation2 + $0x310] sm:$0xff]
    %v158 = vld [vmem:[#allocation2 + $0x318] sm:$0xff]
    %v159 = vld [vmem:[#allocation2 + $0x320] sm:$0xff]
    %v160 = vld [vmem:[#allocation2 + $0x328] sm:$0xff]
    %v161 = vld [vmem:[#allocation2 + $0x330] sm:$0xff]
    %v162 = vld [vmem:[#allocation2 + $0x338] sm:$0xff]
    %v163 = vld [vmem:[#allocation2 + $0x340] sm:$0xff]
    %v164 = vld [vmem:[#allocation2 + $0x348] sm:$0xff]
    %v165 = vld [vmem:[#allocation2 + $0x350] sm:$0xff]
    %v166 = vld [vmem:[#allocation2 + $0x358] sm:$0xff]
    %v167 = vld [vmem:[#allocation2 + $0x360] sm:$0xff]
    %v168 = vld [vmem:[#allocation2 + $0x368] sm:$0xff]
    %v169 = vld [vmem:[#allocation2 + $0x370] sm:$0xff]
    %v170 = vld [vmem:[#allocation2 + $0x378] sm:$0xff]
    %v171 = vld [vmem:[#allocation2 + $0x380] sm:$0xff]
    %v172 = vld [vmem:[#allocation2 + $0x388] sm:$0xff]
    %v173 = vld [vmem:[#allocation2 + $0x390] sm:$0xff]
    %v174 = vld [vmem:[#allocation2 + $0x398] sm:$0xff]
    %v175 = vld [vmem:[#allocation2 + $0x3a0] sm:$0xff]
    %v176 = vld [vmem:[#allocation2 + $0x3a8] sm:$0xff]
    %v177 = vld [vmem:[#allocation2 + $0x3b0] sm:$0xff]
    %v178 = vld [vmem:[#allocation2 + $0x3b8] sm:$0xff]
    %v179 = vld [vmem:[#allocation2 + $0x3c0] sm:$0xff]
    %v180 = vld [vmem:[#allocation2 + $0x3c8] sm:$0xff]
    %v181 = vld [vmem:[#allocation2 + $0x3d0] sm:$0xff]
    %v182 = vld [vmem:[#allocation2 + $0x3d8] sm:$0xff]
    %v183 = vld [vmem:[#allocation2 + $0x3e0] sm:$0xff]
    %v184 = vld [vmem:[#allocation2 + $0x3e8] sm:$0xff]
    %v185 = vld [vmem:[#allocation2 + $0x3f0] sm:$0xff]
    %v186 = vld [vmem:[#allocation2 + $0x3f8] sm:$0xff]
    %v187 = vld [vmem:[#allocation2 + $0x400] sm:$0xff]
    %v188 = vld [vmem:[#allocation2 + $0x408] sm:$0xff]
    %v189 = vld [vmem:[#allocation2 + $0x410] sm:$0xff]
    %v190 = vld [vmem:[#allocation2 + $0x418] sm:$0xff]
    %v191 = vld [vmem:[#allocation2 + $0x420] sm:$0xff]
    %v192 = vld [vmem:[#allocation2 + $0x428] sm:$0xff]
    %v193 = vld [vmem:[#allocation2 + $0x430] sm:$0xff]
    %v194 = vld [vmem:[#allocation2 + $0x438] sm:$0xff]
    %v195 = vld [vmem:[#allocation2 + $0x440] sm:$0xff]
    %v196 = vld [vmem:[#allocation2 + $0x448] sm:$0xff]
    %v197 = vld [vmem:[#allocation2 + $0x450] sm:$0xff]
    %v198 = vld [vmem:[#allocation2 + $0x458] sm:$0xff]
    %v199 = vld [vmem:[#allocation2 + $0x460] sm:$0xff]
    %v200 = vld [vmem:[#allocation2 + $0x468] sm:$0xff]
    %v201 = vld [vmem:[#allocation2 + $0x470] sm:$0xff]
    %v202 = vld [vmem:[#allocation2 + $0x478] sm:$0xff]
    %v203 = vld [vmem:[#allocation2 + $0x480] sm:$0xff]
    %v204 = vld [vmem:[#allocation2 + $0x488] sm:$0xff]
    %v205 = vld [vmem:[#allocation2 + $0x490] sm:$0xff]
    %v206 = vld [vmem:[#allocation2 + $0x498] sm:$0xff]
    %v207 = vld [vmem:[#allocation2 + $0x4a0] sm:$0xff]
    %v208 = vld [vmem:[#allocation2 + $0x4a8] sm:$0xff]
    %v209 = vld [vmem:[#allocation2 + $0x4b0] sm:$0xff]
    %v210 = vld [vmem:[#allocation2 + $0x4b8] sm:$0xff]
    %v211 = vld [vmem:[#allocation2 + $0x4c0] sm:$0xff]
    %v212 = vld [vmem:[#allocation2 + $0x4c8] sm:$0xff]
    %v213 = vld [vmem:[#allocation2 + $0x4d0] sm:$0xff]
    %v214 = vld [vmem:[#allocation2 + $0x4d8] sm:$0xff]
    %v215 = vld [vmem:[#allocation2 + $0x4e0] sm:$0xff]
    %v216 = vld [vmem:[#allocation2 + $0x4e8] sm:$0xff]
    %v217 = vld [vmem:[#allocation2 + $0x4f0] sm:$0xff]
    %v218 = vld [vmem:[#allocation2 + $0x4f8] sm:$0xff]
    %v219 = vld [vmem:[#allocation2 + $0x500] sm:$0xff]
    %v220 = vld [vmem:[#allocation2 + $0x508] sm:$0xff]
    %v221 = vld [vmem:[#allocation2 + $0x510] sm:$0xff]
    %v222 = vld [vmem:[#allocation2 + $0x518] sm:$0xff]
    %v223 = vld [vmem:[#allocation2 + $0x520] sm:$0xff]
    %v224 = vld [vmem:[#allocation2 + $0x528] sm:$0xff]
    %v225 = vld [vmem:[#allocation2 + $0x530] sm:$0xff]
    %v226 = vld [vmem:[#allocation2 + $0x538] sm:$0xff]
    %v227 = vld [vmem:[#allocation2 + $0x540] sm:$0xff]
    %v228 = vld [vmem:[#allocation2 + $0x548] sm:$0xff]
    %v229 = vld [vmem:[#allocation2 + $0x550] sm:$0xff]
    %v230 = vld [vmem:[#allocation2 + $0x558] sm:$0xff]
    %v231 = vld [vmem:[#allocation2 + $0x560] sm:$0xff]
    %v232 = vld [vmem:[#allocation2 + $0x568] sm:$0xff]
    %v233 = vld [vmem:[#allocation2 + $0x570] sm:$0xff]
    %v234 = vld [vmem:[#allocation2 + $0x578] sm:$0xff]
    %v235 = vld [vmem:[#allocation2 + $0x580] sm:$0xff]
    %v236 = vld [vmem:[#allocation2 + $0x588] sm:$0xff]
    %v237 = vld [vmem:[#allocation2 + $0x590] sm:$0xff]
    %v238 = vld [vmem:[#allocation2 + $0x598] sm:$0xff]
    %v239 = vld [vmem:[#allocation2 + $0x5a0] sm:$0xff]
    %v240 = vld [vmem:[#allocation2 + $0x5a8] sm:$0xff]
    %v241 = vld [vmem:[#allocation2 + $0x5b0] sm:$0xff]
    %v242 = vld [vmem:[#allocation2 + $0x5b8] sm:$0xff]
    %v243 = vld [vmem:[#allocation2 + $0x5c0] sm:$0xff]
    %v244 = vld [vmem:[#allocation2 + $0x5c8] sm:$0xff]
    %v245 = vld [vmem:[#allocation2 + $0x5d0] sm:$0xff]
    %v246 = vld [vmem:[#allocation2 + $0x5d8] sm:$0xff]
    %v247 = vld [vmem:[#allocation2 + $0x5e0] sm:$0xff]
    %v248 = vld [vmem:[#allocation2 + $0x5e8] sm:$0xff]
    %v249 = vld [vmem:[#allocation2 + $0x5f0] sm:$0xff]
    %v250 = vld [vmem:[#allocation2 + $0x5f8] sm:$0xff]
    %v251 = vld [vmem:[#allocation2 + $0x600] sm:$0xff]
    %v252 = vld [vmem:[#allocation2 + $0x608] sm:$0xff]
    %v253 = vld [vmem:[#allocation2 + $0x610] sm:$0xff]
    %v254 = vld [vmem:[#allocation2 + $0x618] sm:$0xff]
    %v255 = vld [vmem:[#allocation2 + $0x620] sm:$0xff]
    %v256 = vld [vmem:[#allocation2 + $0x628] sm:$0xff]
    %v257 = vld [vmem:[#allocation2 + $0x630] sm:$0xff]
    %v258 = vld [vmem:[#allocation2 + $0x638] sm:$0xff]
    %v259 = vld [vmem:[#allocation2 + $0x640] sm:$0xff]
    %v260 = vld [vmem:[#allocation2 + $0x648] sm:$0xff]
    %v261 = vld [vmem:[#allocation2 + $0x650] sm:$0xff]
    %v262 = vld [vmem:[#allocation2 + $0x658] sm:$0xff]
    %v263 = vld [vmem:[#allocation2 + $0x660] sm:$0xff]
    %v264 = vld [vmem:[#allocation2 + $0x668] sm:$0xff]
    %v265 = vld [vmem:[#allocation2 + $0x670] sm:$0xff]
    %v266 = vld [vmem:[#allocation2 + $0x678] sm:$0xff]
    %v267 = vld [vmem:[#allocation2 + $0x680] sm:$0xff]
    %v268 = vld [vmem:[#allocation2 + $0x688] sm:$0xff]
    %v269 = vld [vmem:[#allocation2 + $0x690] sm:$0xff]
    %v270 = vld [vmem:[#allocation2 + $0x698] sm:$0xff]
    %v271 = vld [vmem:[#allocation2 + $0x6a0] sm:$0xff]
    %v272 = vld [vmem:[#allocation2 + $0x6a8] sm:$0xff]
    %v273 = vld [vmem:[#allocation2 + $0x6b0] sm:$0xff]
    %v274 = vld [vmem:[#allocation2 + $0x6b8] sm:$0xff]
    %v275 = vld [vmem:[#allocation2 + $0x6c0] sm:$0xff]
    %v276 = vld [vmem:[#allocation2 + $0x6c8] sm:$0xff]
    %v277 = vld [vmem:[#allocation2 + $0x6d0] sm:$0xff]
    %v278 = vld [vmem:[#allocation2 + $0x6d8] sm:$0xff]
    %v279 = vld [vmem:[#allocation2 + $0x6e0] sm:$0xff]
    %v280 = vld [vmem:[#allocation2 + $0x6e8] sm:$0xff]
    %v281 = vld [vmem:[#allocation2 + $0x6f0] sm:$0xff]
    %v282 = vld [vmem:[#allocation2 + $0x6f8] sm:$0xff]
    %v283 = vld [vmem:[#allocation2 + $0x700] sm:$0xff]
    %v284 = vld [vmem:[#allocation2 + $0x708] sm:$0xff]
    %v285 = vld [vmem:[#allocation2 + $0x710] sm:$0xff]
    %v286 = vld [vmem:[#allocation2 + $0x718] sm:$0xff]
    %v287 = vld [vmem:[#allocation2 + $0x720] sm:$0xff]
    %v288 = vld [vmem:[#allocation2 + $0x728] sm:$0xff]
    %v289 = vld [vmem:[#allocation2 + $0x730] sm:$0xff]
    %v290 = vld [vmem:[#allocation2 + $0x738] sm:$0xff]
    %v291 = vld [vmem:[#allocation2 + $0x740] sm:$0xff]
    %v292 = vld [vmem:[#allocation2 + $0x748] sm:$0xff]
    %v293 = vld [vmem:[#allocation2 + $0x750] sm:$0xff]
    %v294 = vld [vmem:[#allocation2 + $0x758] sm:$0xff]
    %v295 = vld [vmem:[#allocation2 + $0x760] sm:$0xff]
    %v296 = vld [vmem:[#allocation2 + $0x768] sm:$0xff]
    %v297 = vld [vmem:[#allocation2 + $0x770] sm:$0xff]
    %v298 = vld [vmem:[#allocation2 + $0x778] sm:$0xff]
    %v299 = vld [vmem:[#allocation2 + $0x780] sm:$0xff]
    %v300 = vld [vmem:[#allocation2 + $0x788] sm:$0xff]
    %v301 = vld [vmem:[#allocation2 + $0x790] sm:$0xff]
    %v302 = vld [vmem:[#allocation2 + $0x798] sm:$0xff]
    %v303 = vld [vmem:[#allocation2 + $0x7a0] sm:$0xff]
    %v304 = vld [vmem:[#allocation2 + $0x7a8] sm:$0xff]
    %v305 = vld [vmem:[#allocation2 + $0x7b0] sm:$0xff]
    %v306 = vld [vmem:[#allocation2 + $0x7b8] sm:$0xff]
    %v307 = vld [vmem:[#allocation2 + $0x7c0] sm:$0xff]
    %v308 = vld [vmem:[#allocation2 + $0x7c8] sm:$0xff]
    %v309 = vld [vmem:[#allocation2 + $0x7d0] sm:$0xff]
    %v310 = vld [vmem:[#allocation2 + $0x7d8] sm:$0xff]
    %v311 = vld [vmem:[#allocation2 + $0x7e0] sm:$0xff]
    %v312 = vld [vmem:[#allocation2 + $0x7e8] sm:$0xff]
    %v313 = vld [vmem:[#allocation2 + $0x7f0] sm:$0xff]
    %v314 = vld [vmem:[#allocation2 + $0x7f8] sm:$0xff]
    %v315 = vld [vmem:[%s2] sm:$0xff]
    %v316 = vld [vmem:[%s2 + $0x8] sm:$0xff]
    %v319 = vlaneseq
    %v320 = vshrl.u32 %v319, 7
    %v321 = vsub.s32 0, %v320
    %v322 = vrot.slane %v315, %v321
    %v323 = vlaneseq
    %v324 = vshrl.u32 %v323, 7
    %v325 = vsub.s32 1, %v324
    %v326 = vrot.slane %v315, %v325
    %v327 = vlaneseq
    %v328 = vshrl.u32 %v327, 7
    %v329 = vsub.s32 2, %v328
    %v330 = vrot.slane %v315, %v329
    %v331 = vlaneseq
    %v332 = vshrl.u32 %v331, 7
    %v333 = vsub.s32 3, %v332
    %v334 = vrot.slane %v315, %v333
    %v335 = vlaneseq
    %v336 = vshrl.u32 %v335, 7
    %v337 = vsub.s32 4, %v336
    %v338 = vrot.slane %v315, %v337
    %v339 = vlaneseq
    %v340 = vshrl.u32 %v339, 7
    %v341 = vsub.s32 5, %v340
    %v342 = vrot.slane %v315, %v341
    %v343 = vlaneseq
    %v344 = vshrl.u32 %v343, 7
    %v345 = vsub.s32 6, %v344
    %v346 = vrot.slane %v315, %v345
    %v347 = vlaneseq
    %v348 = vshrl.u32 %v347, 7
    %v349 = vsub.s32 7, %v348
    %v350 = vrot.slane %v315, %v349
    %v351 = vlaneseq
    %v352 = vshrl.u32 %v351, 7
    %v353 = vsub.s32 0, %v352
    %v354 = vrot.slane %v316, %v353
    %v355 = vlaneseq
    %v356 = vshrl.u32 %v355, 7
    %v357 = vsub.s32 1, %v356
    %v358 = vrot.slane %v316, %v357
    %v359 = vlaneseq
    %v360 = vshrl.u32 %v359, 7
    %v361 = vsub.s32 2, %v360
    %v362 = vrot.slane %v316, %v361
    %v363 = vlaneseq
    %v364 = vshrl.u32 %v363, 7
    %v365 = vsub.s32 3, %v364
    %v366 = vrot.slane %v316, %v365
    %v367 = vlaneseq
    %v368 = vshrl.u32 %v367, 7
    %v369 = vsub.s32 4, %v368
    %v370 = vrot.slane %v316, %v369
    %v371 = vlaneseq
    %v372 = vshrl.u32 %v371, 7
    %v373 = vsub.s32 5, %v372
    %v374 = vrot.slane %v316, %v373
    %v375 = vlaneseq
    %v376 = vshrl.u32 %v375, 7
    %v377 = vsub.s32 6, %v376
    %v378 = vrot.slane %v316, %v377
    %v379 = vlaneseq
    %v380 = vshrl.u32 %v379, 7
    %v381 = vsub.s32 7, %v380
    %v382 = vrot.slane %v316, %v381
    %v655 = vunpack.c.l.b16 %v59
    %v656 = vunpack.c.h.b16 %v59
    %v657 = vunpack.c.l.b16 %v60
    %v658 = vunpack.c.h.b16 %v60
    %v659 = vunpack.c.l.b16 %v61
    %v660 = vunpack.c.h.b16 %v61
    %v661 = vunpack.c.l.b16 %v62
    %v662 = vunpack.c.h.b16 %v62
    %v663 = vunpack.c.l.b16 %v63
    %v664 = vunpack.c.h.b16 %v63
    %v665 = vunpack.c.l.b16 %v64
    %v666 = vunpack.c.h.b16 %v64
    %v667 = vunpack.c.l.b16 %v65
    %v668 = vunpack.c.h.b16 %v65
    %v669 = vunpack.c.l.b16 %v66
    %v670 = vunpack.c.h.b16 %v66
    %v671 = vunpack.c.l.b16 %v67
    %v672 = vunpack.c.h.b16 %v67
    %v673 = vunpack.c.l.b16 %v68
    %v674 = vunpack.c.h.b16 %v68
    %v675 = vunpack.c.l.b16 %v69
    %v676 = vunpack.c.h.b16 %v69
    %v677 = vunpack.c.l.b16 %v70
    %v678 = vunpack.c.h.b16 %v70
    %v679 = vunpack.c.l.b16 %v71
    %v680 = vunpack.c.h.b16 %v71
    %v681 = vunpack.c.l.b16 %v72
    %v682 = vunpack.c.h.b16 %v72
    %v683 = vunpack.c.l.b16 %v73
    %v684 = vunpack.c.h.b16 %v73
    %v685 = vunpack.c.l.b16 %v74
    %v686 = vunpack.c.h.b16 %v74
    %v687 = vunpack.c.l.b16 %v75
    %v688 = vunpack.c.h.b16 %v75
    %v689 = vunpack.c.l.b16 %v76
    %v690 = vunpack.c.h.b16 %v76
    %v691 = vunpack.c.l.b16 %v77
    %v692 = vunpack.c.h.b16 %v77
    %v693 = vunpack.c.l.b16 %v78
    %v694 = vunpack.c.h.b16 %v78
    %v695 = vunpack.c.l.b16 %v79
    %v696 = vunpack.c.h.b16 %v79
    %v697 = vunpack.c.l.b16 %v80
    %v698 = vunpack.c.h.b16 %v80
    %v699 = vunpack.c.l.b16 %v81
    %v700 = vunpack.c.h.b16 %v81
    %v701 = vunpack.c.l.b16 %v82
    %v702 = vunpack.c.h.b16 %v82
    %v703 = vunpack.c.l.b16 %v83
    %v704 = vunpack.c.h.b16 %v83
    %v705 = vunpack.c.l.b16 %v84
    %v706 = vunpack.c.h.b16 %v84
    %v707 = vunpack.c.l.b16 %v85
    %v708 = vunpack.c.h.b16 %v85
    %v709 = vunpack.c.l.b16 %v86
    %v710 = vunpack.c.h.b16 %v86
    %v711 = vunpack.c.l.b16 %v87
    %v712 = vunpack.c.h.b16 %v87
    %v713 = vunpack.c.l.b16 %v88
    %v714 = vunpack.c.h.b16 %v88
    %v715 = vunpack.c.l.b16 %v89
    %v716 = vunpack.c.h.b16 %v89
    %v717 = vunpack.c.l.b16 %v90
    %v718 = vunpack.c.h.b16 %v90
    %v719 = vunpack.c.l.b16 %v91
    %v720 = vunpack.c.h.b16 %v91
    %v721 = vunpack.c.l.b16 %v92
    %v722 = vunpack.c.h.b16 %v92
    %v723 = vunpack.c.l.b16 %v93
    %v724 = vunpack.c.h.b16 %v93
    %v725 = vunpack.c.l.b16 %v94
    %v726 = vunpack.c.h.b16 %v94
    %v727 = vunpack.c.l.b16 %v95
    %v728 = vunpack.c.h.b16 %v95
    %v729 = vunpack.c.l.b16 %v96
    %v730 = vunpack.c.h.b16 %v96
    %v731 = vunpack.c.l.b16 %v97
    %v732 = vunpack.c.h.b16 %v97
    %v733 = vunpack.c.l.b16 %v98
    %v734 = vunpack.c.h.b16 %v98
    %v735 = vunpack.c.l.b16 %v99
    %v736 = vunpack.c.h.b16 %v99
    %v737 = vunpack.c.l.b16 %v100
    %v738 = vunpack.c.h.b16 %v100
    %v739 = vunpack.c.l.b16 %v101
    %v740 = vunpack.c.h.b16 %v101
    %v741 = vunpack.c.l.b16 %v102
    %v742 = vunpack.c.h.b16 %v102
    %v743 = vunpack.c.l.b16 %v103
    %v744 = vunpack.c.h.b16 %v103
    %v745 = vunpack.c.l.b16 %v104
    %v746 = vunpack.c.h.b16 %v104
    %v747 = vunpack.c.l.b16 %v105
    %v748 = vunpack.c.h.b16 %v105
    %v749 = vunpack.c.l.b16 %v106
    %v750 = vunpack.c.h.b16 %v106
    %v751 = vunpack.c.l.b16 %v107
    %v752 = vunpack.c.h.b16 %v107
    %v753 = vunpack.c.l.b16 %v108
    %v754 = vunpack.c.h.b16 %v108
    %v755 = vunpack.c.l.b16 %v109
    %v756 = vunpack.c.h.b16 %v109
    %v757 = vunpack.c.l.b16 %v110
    %v758 = vunpack.c.h.b16 %v110
    %v759 = vunpack.c.l.b16 %v111
    %v760 = vunpack.c.h.b16 %v111
    %v761 = vunpack.c.l.b16 %v112
    %v762 = vunpack.c.h.b16 %v112
    %v763 = vunpack.c.l.b16 %v113
    %v764 = vunpack.c.h.b16 %v113
    %v765 = vunpack.c.l.b16 %v114
    %v766 = vunpack.c.h.b16 %v114
    %v767 = vunpack.c.l.b16 %v115
    %v768 = vunpack.c.h.b16 %v115
    %v769 = vunpack.c.l.b16 %v116
    %v770 = vunpack.c.h.b16 %v116
    %v771 = vunpack.c.l.b16 %v117
    %v772 = vunpack.c.h.b16 %v117
    %v773 = vunpack.c.l.b16 %v118
    %v774 = vunpack.c.h.b16 %v118
    %v775 = vunpack.c.l.b16 %v119
    %v776 = vunpack.c.h.b16 %v119
    %v777 = vunpack.c.l.b16 %v120
    %v778 = vunpack.c.h.b16 %v120
    %v779 = vunpack.c.l.b16 %v121
    %v780 = vunpack.c.h.b16 %v121
    %v781 = vunpack.c.l.b16 %v122
    %v782 = vunpack.c.h.b16 %v122
    %v783 = vunpack.c.l.b16 %v123
    %v784 = vunpack.c.h.b16 %v123
    %v785 = vunpack.c.l.b16 %v124
    %v786 = vunpack.c.h.b16 %v124
    %v787 = vunpack.c.l.b16 %v125
    %v788 = vunpack.c.h.b16 %v125
    %v789 = vunpack.c.l.b16 %v126
    %v790 = vunpack.c.h.b16 %v126
    %v791 = vunpack.c.l.b16 %v127
    %v792 = vunpack.c.h.b16 %v127
    %v793 = vunpack.c.l.b16 %v128
    %v794 = vunpack.c.h.b16 %v128
    %v795 = vunpack.c.l.b16 %v129
    %v796 = vunpack.c.h.b16 %v129
    %v797 = vunpack.c.l.b16 %v130
    %v798 = vunpack.c.h.b16 %v130
    %v799 = vunpack.c.l.b16 %v131
    %v800 = vunpack.c.h.b16 %v131
    %v801 = vunpack.c.l.b16 %v132
    %v802 = vunpack.c.h.b16 %v132
    %v803 = vunpack.c.l.b16 %v133
    %v804 = vunpack.c.h.b16 %v133
    %v805 = vunpack.c.l.b16 %v134
    %v806 = vunpack.c.h.b16 %v134
    %v807 = vunpack.c.l.b16 %v135
    %v808 = vunpack.c.h.b16 %v135
    %v809 = vunpack.c.l.b16 %v136
    %v810 = vunpack.c.h.b16 %v136
    %v811 = vunpack.c.l.b16 %v137
    %v812 = vunpack.c.h.b16 %v137
    %v813 = vunpack.c.l.b16 %v138
    %v814 = vunpack.c.h.b16 %v138
    %v815 = vunpack.c.l.b16 %v139
    %v816 = vunpack.c.h.b16 %v139
    %v817 = vunpack.c.l.b16 %v140
    %v818 = vunpack.c.h.b16 %v140
    %v819 = vunpack.c.l.b16 %v141
    %v820 = vunpack.c.h.b16 %v141
    %v821 = vunpack.c.l.b16 %v142
    %v822 = vunpack.c.h.b16 %v142
    %v823 = vunpack.c.l.b16 %v143
    %v824 = vunpack.c.h.b16 %v143
    %v825 = vunpack.c.l.b16 %v144
    %v826 = vunpack.c.h.b16 %v144
    %v827 = vunpack.c.l.b16 %v145
    %v828 = vunpack.c.h.b16 %v145
    %v829 = vunpack.c.l.b16 %v146
    %v830 = vunpack.c.h.b16 %v146
    %v831 = vunpack.c.l.b16 %v147
    %v832 = vunpack.c.h.b16 %v147
    %v833 = vunpack.c.l.b16 %v148
    %v834 = vunpack.c.h.b16 %v148
    %v835 = vunpack.c.l.b16 %v149
    %v836 = vunpack.c.h.b16 %v149
    %v837 = vunpack.c.l.b16 %v150
    %v838 = vunpack.c.h.b16 %v150
    %v839 = vunpack.c.l.b16 %v151
    %v840 = vunpack.c.h.b16 %v151
    %v841 = vunpack.c.l.b16 %v152
    %v842 = vunpack.c.h.b16 %v152
    %v843 = vunpack.c.l.b16 %v153
    %v844 = vunpack.c.h.b16 %v153
    %v845 = vunpack.c.l.b16 %v154
    %v846 = vunpack.c.h.b16 %v154
    %v847 = vunpack.c.l.b16 %v155
    %v848 = vunpack.c.h.b16 %v155
    %v849 = vunpack.c.l.b16 %v156
    %v850 = vunpack.c.h.b16 %v156
    %v851 = vunpack.c.l.b16 %v157
    %v852 = vunpack.c.h.b16 %v157
    %v853 = vunpack.c.l.b16 %v158
    %v854 = vunpack.c.h.b16 %v158
    %v855 = vunpack.c.l.b16 %v159
    %v856 = vunpack.c.h.b16 %v159
    %v857 = vunpack.c.l.b16 %v160
    %v858 = vunpack.c.h.b16 %v160
    %v859 = vunpack.c.l.b16 %v161
    %v860 = vunpack.c.h.b16 %v161
    %v861 = vunpack.c.l.b16 %v162
    %v862 = vunpack.c.h.b16 %v162
    %v863 = vunpack.c.l.b16 %v163
    %v864 = vunpack.c.h.b16 %v163
    %v865 = vunpack.c.l.b16 %v164
    %v866 = vunpack.c.h.b16 %v164
    %v867 = vunpack.c.l.b16 %v165
    %v868 = vunpack.c.h.b16 %v165
    %v869 = vunpack.c.l.b16 %v166
    %v870 = vunpack.c.h.b16 %v166
    %v871 = vunpack.c.l.b16 %v167
    %v872 = vunpack.c.h.b16 %v167
    %v873 = vunpack.c.l.b16 %v168
    %v874 = vunpack.c.h.b16 %v168
    %v875 = vunpack.c.l.b16 %v169
    %v876 = vunpack.c.h.b16 %v169
    %v877 = vunpack.c.l.b16 %v170
    %v878 = vunpack.c.h.b16 %v170
    %v879 = vunpack.c.l.b16 %v171
    %v880 = vunpack.c.h.b16 %v171
    %v881 = vunpack.c.l.b16 %v172
    %v882 = vunpack.c.h.b16 %v172
    %v883 = vunpack.c.l.b16 %v173
    %v884 = vunpack.c.h.b16 %v173
    %v885 = vunpack.c.l.b16 %v174
    %v886 = vunpack.c.h.b16 %v174
    %v887 = vunpack.c.l.b16 %v175
    %v888 = vunpack.c.h.b16 %v175
    %v889 = vunpack.c.l.b16 %v176
    %v890 = vunpack.c.h.b16 %v176
    %v891 = vunpack.c.l.b16 %v177
    %v892 = vunpack.c.h.b16 %v177
    %v893 = vunpack.c.l.b16 %v178
    %v894 = vunpack.c.h.b16 %v178
    %v895 = vunpack.c.l.b16 %v179
    %v896 = vunpack.c.h.b16 %v179
    %v897 = vunpack.c.l.b16 %v180
    %v898 = vunpack.c.h.b16 %v180
    %v899 = vunpack.c.l.b16 %v181
    %v900 = vunpack.c.h.b16 %v181
    %v901 = vunpack.c.l.b16 %v182
    %v902 = vunpack.c.h.b16 %v182
    %v903 = vunpack.c.l.b16 %v183
    %v904 = vunpack.c.h.b16 %v183
    %v905 = vunpack.c.l.b16 %v184
    %v906 = vunpack.c.h.b16 %v184
    %v907 = vunpack.c.l.b16 %v185
    %v908 = vunpack.c.h.b16 %v185
    %v909 = vunpack.c.l.b16 %v186
    %v910 = vunpack.c.h.b16 %v186
    %v911 = vunpack.c.l.b16 %v187
    %v912 = vunpack.c.h.b16 %v187
    %v913 = vunpack.c.l.b16 %v188
    %v914 = vunpack.c.h.b16 %v188
    %v915 = vunpack.c.l.b16 %v189
    %v916 = vunpack.c.h.b16 %v189
    %v917 = vunpack.c.l.b16 %v190
    %v918 = vunpack.c.h.b16 %v190
    %v919 = vunpack.c.l.b16 %v191
    %v920 = vunpack.c.h.b16 %v191
    %v921 = vunpack.c.l.b16 %v192
    %v922 = vunpack.c.h.b16 %v192
    %v923 = vunpack.c.l.b16 %v193
    %v924 = vunpack.c.h.b16 %v193
    %v925 = vunpack.c.l.b16 %v194
    %v926 = vunpack.c.h.b16 %v194
    %v927 = vunpack.c.l.b16 %v195
    %v928 = vunpack.c.h.b16 %v195
    %v929 = vunpack.c.l.b16 %v196
    %v930 = vunpack.c.h.b16 %v196
    %v931 = vunpack.c.l.b16 %v197
    %v932 = vunpack.c.h.b16 %v197
    %v933 = vunpack.c.l.b16 %v198
    %v934 = vunpack.c.h.b16 %v198
    %v935 = vunpack.c.l.b16 %v199
    %v936 = vunpack.c.h.b16 %v199
    %v937 = vunpack.c.l.b16 %v200
    %v938 = vunpack.c.h.b16 %v200
    %v939 = vunpack.c.l.b16 %v201
    %v940 = vunpack.c.h.b16 %v201
    %v941 = vunpack.c.l.b16 %v202
    %v942 = vunpack.c.h.b16 %v202
    %v943 = vunpack.c.l.b16 %v203
    %v944 = vunpack.c.h.b16 %v203
    %v945 = vunpack.c.l.b16 %v204
    %v946 = vunpack.c.h.b16 %v204
    %v947 = vunpack.c.l.b16 %v205
    %v948 = vunpack.c.h.b16 %v205
    %v949 = vunpack.c.l.b16 %v206
    %v950 = vunpack.c.h.b16 %v206
    %v951 = vunpack.c.l.b16 %v207
    %v952 = vunpack.c.h.b16 %v207
    %v953 = vunpack.c.l.b16 %v208
    %v954 = vunpack.c.h.b16 %v208
    %v955 = vunpack.c.l.b16 %v209
    %v956 = vunpack.c.h.b16 %v209
    %v957 = vunpack.c.l.b16 %v210
    %v958 = vunpack.c.h.b16 %v210
    %v959 = vunpack.c.l.b16 %v211
    %v960 = vunpack.c.h.b16 %v211
    %v961 = vunpack.c.l.b16 %v212
    %v962 = vunpack.c.h.b16 %v212
    %v963 = vunpack.c.l.b16 %v213
    %v964 = vunpack.c.h.b16 %v213
    %v965 = vunpack.c.l.b16 %v214
    %v966 = vunpack.c.h.b16 %v214
    %v967 = vunpack.c.l.b16 %v215
    %v968 = vunpack.c.h.b16 %v215
    %v969 = vunpack.c.l.b16 %v216
    %v970 = vunpack.c.h.b16 %v216
    %v971 = vunpack.c.l.b16 %v217
    %v972 = vunpack.c.h.b16 %v217
    %v973 = vunpack.c.l.b16 %v218
    %v974 = vunpack.c.h.b16 %v218
    %v975 = vunpack.c.l.b16 %v219
    %v976 = vunpack.c.h.b16 %v219
    %v977 = vunpack.c.l.b16 %v220
    %v978 = vunpack.c.h.b16 %v220
    %v979 = vunpack.c.l.b16 %v221
    %v980 = vunpack.c.h.b16 %v221
    %v981 = vunpack.c.l.b16 %v222
    %v982 = vunpack.c.h.b16 %v222
    %v983 = vunpack.c.l.b16 %v223
    %v984 = vunpack.c.h.b16 %v223
    %v985 = vunpack.c.l.b16 %v224
    %v986 = vunpack.c.h.b16 %v224
    %v987 = vunpack.c.l.b16 %v225
    %v988 = vunpack.c.h.b16 %v225
    %v989 = vunpack.c.l.b16 %v226
    %v990 = vunpack.c.h.b16 %v226
    %v991 = vunpack.c.l.b16 %v227
    %v992 = vunpack.c.h.b16 %v227
    %v993 = vunpack.c.l.b16 %v228
    %v994 = vunpack.c.h.b16 %v228
    %v995 = vunpack.c.l.b16 %v229
    %v996 = vunpack.c.h.b16 %v229
    %v997 = vunpack.c.l.b16 %v230
    %v998 = vunpack.c.h.b16 %v230
    %v999 = vunpack.c.l.b16 %v231
    %v1000 = vunpack.c.h.b16 %v231
    %v1001 = vunpack.c.l.b16 %v232
    %v1002 = vunpack.c.h.b16 %v232
    %v1003 = vunpack.c.l.b16 %v233
    %v1004 = vunpack.c.h.b16 %v233
    %v1005 = vunpack.c.l.b16 %v234
    %v1006 = vunpack.c.h.b16 %v234
    %v1007 = vunpack.c.l.b16 %v235
    %v1008 = vunpack.c.h.b16 %v235
    %v1009 = vunpack.c.l.b16 %v236
    %v1010 = vunpack.c.h.b16 %v236
    %v1011 = vunpack.c.l.b16 %v237
    %v1012 = vunpack.c.h.b16 %v237
    %v1013 = vunpack.c.l.b16 %v238
    %v1014 = vunpack.c.h.b16 %v238
    %v1015 = vunpack.c.l.b16 %v239
    %v1016 = vunpack.c.h.b16 %v239
    %v1017 = vunpack.c.l.b16 %v240
    %v1018 = vunpack.c.h.b16 %v240
    %v1019 = vunpack.c.l.b16 %v241
    %v1020 = vunpack.c.h.b16 %v241
    %v1021 = vunpack.c.l.b16 %v242
    %v1022 = vunpack.c.h.b16 %v242
    %v1023 = vunpack.c.l.b16 %v243
    %v1024 = vunpack.c.h.b16 %v243
    %v1025 = vunpack.c.l.b16 %v244
    %v1026 = vunpack.c.h.b16 %v244
    %v1027 = vunpack.c.l.b16 %v245
    %v1028 = vunpack.c.h.b16 %v245
    %v1029 = vunpack.c.l.b16 %v246
    %v1030 = vunpack.c.h.b16 %v246
    %v1031 = vunpack.c.l.b16 %v247
    %v1032 = vunpack.c.h.b16 %v247
    %v1033 = vunpack.c.l.b16 %v248
    %v1034 = vunpack.c.h.b16 %v248
    %v1035 = vunpack.c.l.b16 %v249
    %v1036 = vunpack.c.h.b16 %v249
    %v1037 = vunpack.c.l.b16 %v250
    %v1038 = vunpack.c.h.b16 %v250
    %v1039 = vunpack.c.l.b16 %v251
    %v1040 = vunpack.c.h.b16 %v251
    %v1041 = vunpack.c.l.b16 %v252
    %v1042 = vunpack.c.h.b16 %v252
    %v1043 = vunpack.c.l.b16 %v253
    %v1044 = vunpack.c.h.b16 %v253
    %v1045 = vunpack.c.l.b16 %v254
    %v1046 = vunpack.c.h.b16 %v254
    %v1047 = vunpack.c.l.b16 %v255
    %v1048 = vunpack.c.h.b16 %v255
    %v1049 = vunpack.c.l.b16 %v256
    %v1050 = vunpack.c.h.b16 %v256
    %v1051 = vunpack.c.l.b16 %v257
    %v1052 = vunpack.c.h.b16 %v257
    %v1053 = vunpack.c.l.b16 %v258
    %v1054 = vunpack.c.h.b16 %v258
    %v1055 = vunpack.c.l.b16 %v259
    %v1056 = vunpack.c.h.b16 %v259
    %v1057 = vunpack.c.l.b16 %v260
    %v1058 = vunpack.c.h.b16 %v260
    %v1059 = vunpack.c.l.b16 %v261
    %v1060 = vunpack.c.h.b16 %v261
    %v1061 = vunpack.c.l.b16 %v262
    %v1062 = vunpack.c.h.b16 %v262
    %v1063 = vunpack.c.l.b16 %v263
    %v1064 = vunpack.c.h.b16 %v263
    %v1065 = vunpack.c.l.b16 %v264
    %v1066 = vunpack.c.h.b16 %v264
    %v1067 = vunpack.c.l.b16 %v265
    %v1068 = vunpack.c.h.b16 %v265
    %v1069 = vunpack.c.l.b16 %v266
    %v1070 = vunpack.c.h.b16 %v266
    %v1071 = vunpack.c.l.b16 %v267
    %v1072 = vunpack.c.h.b16 %v267
    %v1073 = vunpack.c.l.b16 %v268
    %v1074 = vunpack.c.h.b16 %v268
    %v1075 = vunpack.c.l.b16 %v269
    %v1076 = vunpack.c.h.b16 %v269
    %v1077 = vunpack.c.l.b16 %v270
    %v1078 = vunpack.c.h.b16 %v270
    %v1079 = vunpack.c.l.b16 %v271
    %v1080 = vunpack.c.h.b16 %v271
    %v1081 = vunpack.c.l.b16 %v272
    %v1082 = vunpack.c.h.b16 %v272
    %v1083 = vunpack.c.l.b16 %v273
    %v1084 = vunpack.c.h.b16 %v273
    %v1085 = vunpack.c.l.b16 %v274
    %v1086 = vunpack.c.h.b16 %v274
    %v1087 = vunpack.c.l.b16 %v275
    %v1088 = vunpack.c.h.b16 %v275
    %v1089 = vunpack.c.l.b16 %v276
    %v1090 = vunpack.c.h.b16 %v276
    %v1091 = vunpack.c.l.b16 %v277
    %v1092 = vunpack.c.h.b16 %v277
    %v1093 = vunpack.c.l.b16 %v278
    %v1094 = vunpack.c.h.b16 %v278
    %v1095 = vunpack.c.l.b16 %v279
    %v1096 = vunpack.c.h.b16 %v279
    %v1097 = vunpack.c.l.b16 %v280
    %v1098 = vunpack.c.h.b16 %v280
    %v1099 = vunpack.c.l.b16 %v281
    %v1100 = vunpack.c.h.b16 %v281
    %v1101 = vunpack.c.l.b16 %v282
    %v1102 = vunpack.c.h.b16 %v282
    %v1103 = vunpack.c.l.b16 %v283
    %v1104 = vunpack.c.h.b16 %v283
    %v1105 = vunpack.c.l.b16 %v284
    %v1106 = vunpack.c.h.b16 %v284
    %v1107 = vunpack.c.l.b16 %v285
    %v1108 = vunpack.c.h.b16 %v285
    %v1109 = vunpack.c.l.b16 %v286
    %v1110 = vunpack.c.h.b16 %v286
    %v1111 = vunpack.c.l.b16 %v287
    %v1112 = vunpack.c.h.b16 %v287
    %v1113 = vunpack.c.l.b16 %v288
    %v1114 = vunpack.c.h.b16 %v288
    %v1115 = vunpack.c.l.b16 %v289
    %v1116 = vunpack.c.h.b16 %v289
    %v1117 = vunpack.c.l.b16 %v290
    %v1118 = vunpack.c.h.b16 %v290
    %v1119 = vunpack.c.l.b16 %v291
    %v1120 = vunpack.c.h.b16 %v291
    %v1121 = vunpack.c.l.b16 %v292
    %v1122 = vunpack.c.h.b16 %v292
    %v1123 = vunpack.c.l.b16 %v293
    %v1124 = vunpack.c.h.b16 %v293
    %v1125 = vunpack.c.l.b16 %v294
    %v1126 = vunpack.c.h.b16 %v294
    %v1127 = vunpack.c.l.b16 %v295
    %v1128 = vunpack.c.h.b16 %v295
    %v1129 = vunpack.c.l.b16 %v296
    %v1130 = vunpack.c.h.b16 %v296
    %v1131 = vunpack.c.l.b16 %v297
    %v1132 = vunpack.c.h.b16 %v297
    %v1133 = vunpack.c.l.b16 %v298
    %v1134 = vunpack.c.h.b16 %v298
    %v1135 = vunpack.c.l.b16 %v299
    %v1136 = vunpack.c.h.b16 %v299
    %v1137 = vunpack.c.l.b16 %v300
    %v1138 = vunpack.c.h.b16 %v300
    %v1139 = vunpack.c.l.b16 %v301
    %v1140 = vunpack.c.h.b16 %v301
    %v1141 = vunpack.c.l.b16 %v302
    %v1142 = vunpack.c.h.b16 %v302
    %v1143 = vunpack.c.l.b16 %v303
    %v1144 = vunpack.c.h.b16 %v303
    %v1145 = vunpack.c.l.b16 %v304
    %v1146 = vunpack.c.h.b16 %v304
    %v1147 = vunpack.c.l.b16 %v305
    %v1148 = vunpack.c.h.b16 %v305
    %v1149 = vunpack.c.l.b16 %v306
    %v1150 = vunpack.c.h.b16 %v306
    %v1151 = vunpack.c.l.b16 %v307
    %v1152 = vunpack.c.h.b16 %v307
    %v1153 = vunpack.c.l.b16 %v308
    %v1154 = vunpack.c.h.b16 %v308
    %v1155 = vunpack.c.l.b16 %v309
    %v1156 = vunpack.c.h.b16 %v309
    %v1157 = vunpack.c.l.b16 %v310
    %v1158 = vunpack.c.h.b16 %v310
    %v1159 = vunpack.c.l.b16 %v311
    %v1160 = vunpack.c.h.b16 %v311
    %v1161 = vunpack.c.l.b16 %v312
    %v1162 = vunpack.c.h.b16 %v312
    %v1163 = vunpack.c.l.b16 %v313
    %v1164 = vunpack.c.h.b16 %v313
    %v1165 = vunpack.c.l.b16 %v314
    %v1166 = vunpack.c.h.b16 %v314
    %v1167 = vpack.c.b16 %v671, %v655
    %v1168 = vpack.c.b16 %v672, %v656
    %v1169 = vpack.c.b16 %v673, %v657
    %v1170 = vpack.c.b16 %v674, %v658
    %v1171 = vpack.c.b16 %v675, %v659
    %v1172 = vpack.c.b16 %v676, %v660
    %v1173 = vpack.c.b16 %v677, %v661
    %v1174 = vpack.c.b16 %v678, %v662
    %v1175 = vpack.c.b16 %v679, %v663
    %v1176 = vpack.c.b16 %v680, %v664
    %v1177 = vpack.c.b16 %v681, %v665
    %v1178 = vpack.c.b16 %v682, %v666
    %v1179 = vpack.c.b16 %v683, %v667
    %v1180 = vpack.c.b16 %v684, %v668
    %v1181 = vpack.c.b16 %v685, %v669
    %v1182 = vpack.c.b16 %v686, %v670
    %v1183 = vpack.c.b16 %v703, %v687
    %v1184 = vpack.c.b16 %v704, %v688
    %v1185 = vpack.c.b16 %v705, %v689
    %v1186 = vpack.c.b16 %v706, %v690
    %v1187 = vpack.c.b16 %v707, %v691
    %v1188 = vpack.c.b16 %v708, %v692
    %v1189 = vpack.c.b16 %v709, %v693
    %v1190 = vpack.c.b16 %v710, %v694
    %v1191 = vpack.c.b16 %v711, %v695
    %v1192 = vpack.c.b16 %v712, %v696
    %v1193 = vpack.c.b16 %v713, %v697
    %v1194 = vpack.c.b16 %v714, %v698
    %v1195 = vpack.c.b16 %v715, %v699
    %v1196 = vpack.c.b16 %v716, %v700
    %v1197 = vpack.c.b16 %v717, %v701
    %v1198 = vpack.c.b16 %v718, %v702
    %v1199 = vpack.c.b16 %v735, %v719
    %v1200 = vpack.c.b16 %v736, %v720
    %v1201 = vpack.c.b16 %v737, %v721
    %v1202 = vpack.c.b16 %v738, %v722
    %v1203 = vpack.c.b16 %v739, %v723
    %v1204 = vpack.c.b16 %v740, %v724
    %v1205 = vpack.c.b16 %v741, %v725
    %v1206 = vpack.c.b16 %v742, %v726
    %v1207 = vpack.c.b16 %v743, %v727
    %v1208 = vpack.c.b16 %v744, %v728
    %v1209 = vpack.c.b16 %v745, %v729
    %v1210 = vpack.c.b16 %v746, %v730
    %v1211 = vpack.c.b16 %v747, %v731
    %v1212 = vpack.c.b16 %v748, %v732
    %v1213 = vpack.c.b16 %v749, %v733
    %v1214 = vpack.c.b16 %v750, %v734
    %v1215 = vpack.c.b16 %v767, %v751
    %v1216 = vpack.c.b16 %v768, %v752
    %v1217 = vpack.c.b16 %v769, %v753
    %v1218 = vpack.c.b16 %v770, %v754
    %v1219 = vpack.c.b16 %v771, %v755
    %v1220 = vpack.c.b16 %v772, %v756
    %v1221 = vpack.c.b16 %v773, %v757
    %v1222 = vpack.c.b16 %v774, %v758
    %v1223 = vpack.c.b16 %v775, %v759
    %v1224 = vpack.c.b16 %v776, %v760
    %v1225 = vpack.c.b16 %v777, %v761
    %v1226 = vpack.c.b16 %v778, %v762
    %v1227 = vpack.c.b16 %v779, %v763
    %v1228 = vpack.c.b16 %v780, %v764
    %v1229 = vpack.c.b16 %v781, %v765
    %v1230 = vpack.c.b16 %v782, %v766
    %v1231 = vpack.c.b16 %v799, %v783
    %v1232 = vpack.c.b16 %v800, %v784
    %v1233 = vpack.c.b16 %v801, %v785
    %v1234 = vpack.c.b16 %v802, %v786
    %v1235 = vpack.c.b16 %v803, %v787
    %v1236 = vpack.c.b16 %v804, %v788
    %v1237 = vpack.c.b16 %v805, %v789
    %v1238 = vpack.c.b16 %v806, %v790
    %v1239 = vpack.c.b16 %v807, %v791
    %v1240 = vpack.c.b16 %v808, %v792
    %v1241 = vpack.c.b16 %v809, %v793
    %v1242 = vpack.c.b16 %v810, %v794
    %v1243 = vpack.c.b16 %v811, %v795
    %v1244 = vpack.c.b16 %v812, %v796
    %v1245 = vpack.c.b16 %v813, %v797
    %v1246 = vpack.c.b16 %v814, %v798
    %v1247 = vpack.c.b16 %v831, %v815
    %v1248 = vpack.c.b16 %v832, %v816
    %v1249 = vpack.c.b16 %v833, %v817
    %v1250 = vpack.c.b16 %v834, %v818
    %v1251 = vpack.c.b16 %v835, %v819
    %v1252 = vpack.c.b16 %v836, %v820
    %v1253 = vpack.c.b16 %v837, %v821
    %v1254 = vpack.c.b16 %v838, %v822
    %v1255 = vpack.c.b16 %v839, %v823
    %v1256 = vpack.c.b16 %v840, %v824
    %v1257 = vpack.c.b16 %v841, %v825
    %v1258 = vpack.c.b16 %v842, %v826
    %v1259 = vpack.c.b16 %v843, %v827
    %v1260 = vpack.c.b16 %v844, %v828
    %v1261 = vpack.c.b16 %v845, %v829
    %v1262 = vpack.c.b16 %v846, %v830
    %v1263 = vpack.c.b16 %v863, %v847
    %v1264 = vpack.c.b16 %v864, %v848
    %v1265 = vpack.c.b16 %v865, %v849
    %v1266 = vpack.c.b16 %v866, %v850
    %v1267 = vpack.c.b16 %v867, %v851
    %v1268 = vpack.c.b16 %v868, %v852
    %v1269 = vpack.c.b16 %v869, %v853
    %v1270 = vpack.c.b16 %v870, %v854
    %v1271 = vpack.c.b16 %v871, %v855
    %v1272 = vpack.c.b16 %v872, %v856
    %v1273 = vpack.c.b16 %v873, %v857
    %v1274 = vpack.c.b16 %v874, %v858
    %v1275 = vpack.c.b16 %v875, %v859
    %v1276 = vpack.c.b16 %v876, %v860
    %v1277 = vpack.c.b16 %v877, %v861
    %v1278 = vpack.c.b16 %v878, %v862
    %v1279 = vpack.c.b16 %v895, %v879
    %v1280 = vpack.c.b16 %v896, %v880
    %v1281 = vpack.c.b16 %v897, %v881
    %v1282 = vpack.c.b16 %v898, %v882
    %v1283 = vpack.c.b16 %v899, %v883
    %v1284 = vpack.c.b16 %v900, %v884
    %v1285 = vpack.c.b16 %v901, %v885
    %v1286 = vpack.c.b16 %v902, %v886
    %v1287 = vpack.c.b16 %v903, %v887
    %v1288 = vpack.c.b16 %v904, %v888
    %v1289 = vpack.c.b16 %v905, %v889
    %v1290 = vpack.c.b16 %v906, %v890
    %v1291 = vpack.c.b16 %v907, %v891
    %v1292 = vpack.c.b16 %v908, %v892
    %v1293 = vpack.c.b16 %v909, %v893
    %v1294 = vpack.c.b16 %v910, %v894
    %v1295 = vpack.c.b16 %v927, %v911
    %v1296 = vpack.c.b16 %v928, %v912
    %v1297 = vpack.c.b16 %v929, %v913
    %v1298 = vpack.c.b16 %v930, %v914
    %v1299 = vpack.c.b16 %v931, %v915
    %v1300 = vpack.c.b16 %v932, %v916
    %v1301 = vpack.c.b16 %v933, %v917
    %v1302 = vpack.c.b16 %v934, %v918
    %v1303 = vpack.c.b16 %v935, %v919
    %v1304 = vpack.c.b16 %v936, %v920
    %v1305 = vpack.c.b16 %v937, %v921
    %v1306 = vpack.c.b16 %v938, %v922
    %v1307 = vpack.c.b16 %v939, %v923
    %v1308 = vpack.c.b16 %v940, %v924
    %v1309 = vpack.c.b16 %v941, %v925
    %v1310 = vpack.c.b16 %v942, %v926
    %v1311 = vpack.c.b16 %v959, %v943
    %v1312 = vpack.c.b16 %v960, %v944
    %v1313 = vpack.c.b16 %v961, %v945
    %v1314 = vpack.c.b16 %v962, %v946
    %v1315 = vpack.c.b16 %v963, %v947
    %v1316 = vpack.c.b16 %v964, %v948
    %v1317 = vpack.c.b16 %v965, %v949
    %v1318 = vpack.c.b16 %v966, %v950
    %v1319 = vpack.c.b16 %v967, %v951
    %v1320 = vpack.c.b16 %v968, %v952
    %v1321 = vpack.c.b16 %v969, %v953
    %v1322 = vpack.c.b16 %v970, %v954
    %v1323 = vpack.c.b16 %v971, %v955
    %v1324 = vpack.c.b16 %v972, %v956
    %v1325 = vpack.c.b16 %v973, %v957
    %v1326 = vpack.c.b16 %v974, %v958
    %v1327 = vpack.c.b16 %v991, %v975
    %v1328 = vpack.c.b16 %v992, %v976
    %v1329 = vpack.c.b16 %v993, %v977
    %v1330 = vpack.c.b16 %v994, %v978
    %v1331 = vpack.c.b16 %v995, %v979
    %v1332 = vpack.c.b16 %v996, %v980
    %v1333 = vpack.c.b16 %v997, %v981
    %v1334 = vpack.c.b16 %v998, %v982
    %v1335 = vpack.c.b16 %v999, %v983
    %v1336 = vpack.c.b16 %v1000, %v984
    %v1337 = vpack.c.b16 %v1001, %v985
    %v1338 = vpack.c.b16 %v1002, %v986
    %v1339 = vpack.c.b16 %v1003, %v987
    %v1340 = vpack.c.b16 %v1004, %v988
    %v1341 = vpack.c.b16 %v1005, %v989
    %v1342 = vpack.c.b16 %v1006, %v990
    %v1343 = vpack.c.b16 %v1023, %v1007
    %v1344 = vpack.c.b16 %v1024, %v1008
    %v1345 = vpack.c.b16 %v1025, %v1009
    %v1346 = vpack.c.b16 %v1026, %v1010
    %v1347 = vpack.c.b16 %v1027, %v1011
    %v1348 = vpack.c.b16 %v1028, %v1012
    %v1349 = vpack.c.b16 %v1029, %v1013
    %v1350 = vpack.c.b16 %v1030, %v1014
    %v1351 = vpack.c.b16 %v1031, %v1015
    %v1352 = vpack.c.b16 %v1032, %v1016
    %v1353 = vpack.c.b16 %v1033, %v1017
    %v1354 = vpack.c.b16 %v1034, %v1018
    %v1355 = vpack.c.b16 %v1035, %v1019
    %v1356 = vpack.c.b16 %v1036, %v1020
    %v1357 = vpack.c.b16 %v1037, %v1021
    %v1358 = vpack.c.b16 %v1038, %v1022
    %v1359 = vpack.c.b16 %v1055, %v1039
    %v1360 = vpack.c.b16 %v1056, %v1040
    %v1361 = vpack.c.b16 %v1057, %v1041
    %v1362 = vpack.c.b16 %v1058, %v1042
    %v1363 = vpack.c.b16 %v1059, %v1043
    %v1364 = vpack.c.b16 %v1060, %v1044
    %v1365 = vpack.c.b16 %v1061, %v1045
    %v1366 = vpack.c.b16 %v1062, %v1046
    %v1367 = vpack.c.b16 %v1063, %v1047
    %v1368 = vpack.c.b16 %v1064, %v1048
    %v1369 = vpack.c.b16 %v1065, %v1049
    %v1370 = vpack.c.b16 %v1066, %v1050
    %v1371 = vpack.c.b16 %v1067, %v1051
    %v1372 = vpack.c.b16 %v1068, %v1052
    %v1373 = vpack.c.b16 %v1069, %v1053
    %v1374 = vpack.c.b16 %v1070, %v1054
    %v1375 = vpack.c.b16 %v1087, %v1071
    %v1376 = vpack.c.b16 %v1088, %v1072
    %v1377 = vpack.c.b16 %v1089, %v1073
    %v1378 = vpack.c.b16 %v1090, %v1074
    %v1379 = vpack.c.b16 %v1091, %v1075
    %v1380 = vpack.c.b16 %v1092, %v1076
    %v1381 = vpack.c.b16 %v1093, %v1077
    %v1382 = vpack.c.b16 %v1094, %v1078
    %v1383 = vpack.c.b16 %v1095, %v1079
    %v1384 = vpack.c.b16 %v1096, %v1080
    %v1385 = vpack.c.b16 %v1097, %v1081
    %v1386 = vpack.c.b16 %v1098, %v1082
    %v1387 = vpack.c.b16 %v1099, %v1083
    %v1388 = vpack.c.b16 %v1100, %v1084
    %v1389 = vpack.c.b16 %v1101, %v1085
    %v1390 = vpack.c.b16 %v1102, %v1086
    %v1391 = vpack.c.b16 %v1119, %v1103
    %v1392 = vpack.c.b16 %v1120, %v1104
    %v1393 = vpack.c.b16 %v1121, %v1105
    %v1394 = vpack.c.b16 %v1122, %v1106
    %v1395 = vpack.c.b16 %v1123, %v1107
    %v1396 = vpack.c.b16 %v1124, %v1108
    %v1397 = vpack.c.b16 %v1125, %v1109
    %v1398 = vpack.c.b16 %v1126, %v1110
    %v1399 = vpack.c.b16 %v1127, %v1111
    %v1400 = vpack.c.b16 %v1128, %v1112
    %v1401 = vpack.c.b16 %v1129, %v1113
    %v1402 = vpack.c.b16 %v1130, %v1114
    %v1403 = vpack.c.b16 %v1131, %v1115
    %v1404 = vpack.c.b16 %v1132, %v1116
    %v1405 = vpack.c.b16 %v1133, %v1117
    %v1406 = vpack.c.b16 %v1134, %v1118
    %v1407 = vpack.c.b16 %v1151, %v1135
    %v1408 = vpack.c.b16 %v1152, %v1136
    %v1409 = vpack.c.b16 %v1153, %v1137
    %v1410 = vpack.c.b16 %v1154, %v1138
    %v1411 = vpack.c.b16 %v1155, %v1139
    %v1412 = vpack.c.b16 %v1156, %v1140
    %v1413 = vpack.c.b16 %v1157, %v1141
    %v1414 = vpack.c.b16 %v1158, %v1142
    %v1415 = vpack.c.b16 %v1159, %v1143
    %v1416 = vpack.c.b16 %v1160, %v1144
    %v1417 = vpack.c.b16 %v1161, %v1145
    %v1418 = vpack.c.b16 %v1162, %v1146
    %v1419 = vpack.c.b16 %v1163, %v1147
    %v1420 = vpack.c.b16 %v1164, %v1148
    %v1421 = vpack.c.b16 %v1165, %v1149
    %v1422 = vpack.c.b16 %v1166, %v1150
    %1679 = vmatprep.subr.bf16.mxu0 %v1280
    %1680 = vmatpush1.bf16.msra.mxu0 %v1279
    %1681 = vmatprep.subr.bf16.mxu0 %v1264
    %1682 = vmatpush1.bf16.msra.mxu0 %v1263
    %1683 = vmatprep.subr.bf16.mxu0 %v1248
    %1684 = vmatpush1.bf16.msra.mxu0 %v1247
    %1685 = vmatprep.subr.bf16.mxu0 %v1232
    %1686 = vmatpush1.bf16.msra.mxu0 %v1231
    %1687 = vmatprep.subr.bf16.mxu0 %v1216
    %1688 = vmatpush1.bf16.msra.mxu0 %v1215
    %1689 = vmatprep.subr.bf16.mxu0 %v1200
    %1690 = vmatpush1.bf16.msra.mxu0 %v1199
    %1691 = vmatprep.subr.bf16.mxu0 %v1184
    %1692 = vmatpush1.bf16.msra.mxu0 %v1183
    %1693 = vmatprep.subr.bf16.mxu0 %v1168
    %1694 = vmatpush1.bf16.msra.mxu0 %v1167
    %1695 = vmatprep.subr.bf16.mxu0 %v1408
    %1696 = vmatpush2.bf16.msra.mxu0 %v1407
    %1697 = vmatprep.subr.bf16.mxu0 %v1392
    %1698 = vmatpush2.bf16.msra.mxu0 %v1391
    %1699 = vmatprep.subr.bf16.mxu0 %v1376
    %1700 = vmatpush2.bf16.msra.mxu0 %v1375
    %1701 = vmatprep.subr.bf16.mxu0 %v1360
    %1702 = vmatpush2.bf16.msra.mxu0 %v1359
    %1703 = vmatprep.subr.bf16.mxu0 %v1344
    %1704 = vmatpush2.bf16.msra.mxu0 %v1343
    %1705 = vmatprep.subr.bf16.mxu0 %v1328
    %1706 = vmatpush2.bf16.msra.mxu0 %v1327
    %1707 = vmatprep.subr.bf16.mxu0 %v1312
    %1708 = vmatpush2.bf16.msra.mxu0 %v1311
    %1709 = vmatprep.subr.bf16.mxu0 %v1296
    %1710 = vmatpush2.bf16.msra.mxu0 %v1295
    %1711 = vmatprep.mubr.bf16.mxu0 %v58
    %1712 = vmatmul.mubr.bf16.gmra.mxu0 %v57
    %v1713 = vpop.f32.mrf.mxu0
    %v1714 = vadd.f32 %v322, %v1713
    %v1715 = vpop.f32.mrf.mxu0
    %v1716 = vadd.f32 %v326, %v1715
    %v1717 = vpop.f32.mrf.mxu0
    %v1718 = vpop.f32.mrf.mxu0
    %1719 = vdwg.mxu0
    %1720 = vmatprep.subr.bf16.mxu0 %v1282
    %1721 = vmatpush1.bf16.msra.mxu0 %v1281
    %1722 = vmatprep.subr.bf16.mxu0 %v1266
    %1723 = vmatpush1.bf16.msra.mxu0 %v1265
    %1724 = vmatprep.subr.bf16.mxu0 %v1250
    %1725 = vmatpush1.bf16.msra.mxu0 %v1249
    %1726 = vmatprep.subr.bf16.mxu0 %v1234
    %1727 = vmatpush1.bf16.msra.mxu0 %v1233
    %1728 = vmatprep.subr.bf16.mxu0 %v1218
    %1729 = vmatpush1.bf16.msra.mxu0 %v1217
    %1730 = vmatprep.subr.bf16.mxu0 %v1202
    %1731 = vmatpush1.bf16.msra.mxu0 %v1201
    %1732 = vmatprep.subr.bf16.mxu0 %v1186
    %1733 = vmatpush1.bf16.msra.mxu0 %v1185
    %1734 = vmatprep.subr.bf16.mxu0 %v1170
    %1735 = vmatpush1.bf16.msra.mxu0 %v1169
    %1736 = vmatprep.subr.bf16.mxu0 %v1410
    %1737 = vmatpush2.bf16.msra.mxu0 %v1409
    %1738 = vmatprep.subr.bf16.mxu0 %v1394
    %1739 = vmatpush2.bf16.msra.mxu0 %v1393
    %1740 = vmatprep.subr.bf16.mxu0 %v1378
    %1741 = vmatpush2.bf16.msra.mxu0 %v1377
    %1742 = vmatprep.subr.bf16.mxu0 %v1362
    %1743 = vmatpush2.bf16.msra.mxu0 %v1361
    %1744 = vmatprep.subr.bf16.mxu0 %v1346
    %1745 = vmatpush2.bf16.msra.mxu0 %v1345
    %1746 = vmatprep.subr.bf16.mxu0 %v1330
    %1747 = vmatpush2.bf16.msra.mxu0 %v1329
    %1748 = vmatprep.subr.bf16.mxu0 %v1314
    %1749 = vmatpush2.bf16.msra.mxu0 %v1313
    %1750 = vmatprep.subr.bf16.mxu0 %v1298
    %1751 = vmatpush2.bf16.msra.mxu0 %v1297
    %1752 = vmatprep.mubr.bf16.mxu0 %v58
    %1753 = vmatmul.mubr.bf16.gmra.mxu0 %v57
    %v1754 = vpop.f32.mrf.mxu0
    %v1755 = vadd.f32 %v330, %v1754
    %v1756 = vpop.f32.mrf.mxu0
    %v1757 = vadd.f32 %v334, %v1756
    %v1758 = vpop.f32.mrf.mxu0
    %v1759 = vpop.f32.mrf.mxu0
    %1760 = vdwg.mxu0
    %1761 = vmatprep.subr.bf16.mxu0 %v1284
    %1762 = vmatpush1.bf16.msra.mxu0 %v1283
    %1763 = vmatprep.subr.bf16.mxu0 %v1268
    %1764 = vmatpush1.bf16.msra.mxu0 %v1267
    %1765 = vmatprep.subr.bf16.mxu0 %v1252
    %1766 = vmatpush1.bf16.msra.mxu0 %v1251
    %1767 = vmatprep.subr.bf16.mxu0 %v1236
    %1768 = vmatpush1.bf16.msra.mxu0 %v1235
    %1769 = vmatprep.subr.bf16.mxu0 %v1220
    %1770 = vmatpush1.bf16.msra.mxu0 %v1219
    %1771 = vmatprep.subr.bf16.mxu0 %v1204
    %1772 = vmatpush1.bf16.msra.mxu0 %v1203
    %1773 = vmatprep.subr.bf16.mxu0 %v1188
    %1774 = vmatpush1.bf16.msra.mxu0 %v1187
    %1775 = vmatprep.subr.bf16.mxu0 %v1172
    %1776 = vmatpush1.bf16.msra.mxu0 %v1171
    %1777 = vmatprep.subr.bf16.mxu0 %v1412
    %1778 = vmatpush2.bf16.msra.mxu0 %v1411
    %1779 = vmatprep.subr.bf16.mxu0 %v1396
    %1780 = vmatpush2.bf16.msra.mxu0 %v1395
    %1781 = vmatprep.subr.bf16.mxu0 %v1380
    %1782 = vmatpush2.bf16.msra.mxu0 %v1379
    %1783 = vmatprep.subr.bf16.mxu0 %v1364
    %1784 = vmatpush2.bf16.msra.mxu0 %v1363
    %1785 = vmatprep.subr.bf16.mxu0 %v1348
    %1786 = vmatpush2.bf16.msra.mxu0 %v1347
    %1787 = vmatprep.subr.bf16.mxu0 %v1332
    %1788 = vmatpush2.bf16.msra.mxu0 %v1331
    %1789 = vmatprep.subr.bf16.mxu0 %v1316
    %1790 = vmatpush2.bf16.msra.mxu0 %v1315
    %1791 = vmatprep.subr.bf16.mxu0 %v1300
    %1792 = vmatpush2.bf16.msra.mxu0 %v1299
    %1793 = vmatprep.mubr.bf16.mxu0 %v58
    %1794 = vmatmul.mubr.bf16.gmra.mxu0 %v57
    %v1795 = vpop.f32.mrf.mxu0
    %v1796 = vadd.f32 %v338, %v1795
    %v1797 = vpop.f32.mrf.mxu0
    %v1798 = vadd.f32 %v342, %v1797
    %v1799 = vpop.f32.mrf.mxu0
    %v1800 = vpop.f32.mrf.mxu0
    %1801 = vdwg.mxu0
    %1802 = vmatprep.subr.bf16.mxu0 %v1286
    %1803 = vmatpush1.bf16.msra.mxu0 %v1285
    %1804 = vmatprep.subr.bf16.mxu0 %v1270
    %1805 = vmatpush1.bf16.msra.mxu0 %v1269
    %1806 = vmatprep.subr.bf16.mxu0 %v1254
    %1807 = vmatpush1.bf16.msra.mxu0 %v1253
    %1808 = vmatprep.subr.bf16.mxu0 %v1238
    %1809 = vmatpush1.bf16.msra.mxu0 %v1237
    %1810 = vmatprep.subr.bf16.mxu0 %v1222
    %1811 = vmatpush1.bf16.msra.mxu0 %v1221
    %1812 = vmatprep.subr.bf16.mxu0 %v1206
    %1813 = vmatpush1.bf16.msra.mxu0 %v1205
    %1814 = vmatprep.subr.bf16.mxu0 %v1190
    %1815 = vmatpush1.bf16.msra.mxu0 %v1189
    %1816 = vmatprep.subr.bf16.mxu0 %v1174
    %1817 = vmatpush1.bf16.msra.mxu0 %v1173
    %1818 = vmatprep.subr.bf16.mxu0 %v1414
    %1819 = vmatpush2.bf16.msra.mxu0 %v1413
    %1820 = vmatprep.subr.bf16.mxu0 %v1398
    %1821 = vmatpush2.bf16.msra.mxu0 %v1397
    %1822 = vmatprep.subr.bf16.mxu0 %v1382
    %1823 = vmatpush2.bf16.msra.mxu0 %v1381
    %1824 = vmatprep.subr.bf16.mxu0 %v1366
    %1825 = vmatpush2.bf16.msra.mxu0 %v1365
    %1826 = vmatprep.subr.bf16.mxu0 %v1350
    %1827 = vmatpush2.bf16.msra.mxu0 %v1349
    %1828 = vmatprep.subr.bf16.mxu0 %v1334
    %1829 = vmatpush2.bf16.msra.mxu0 %v1333
    %1830 = vmatprep.subr.bf16.mxu0 %v1318
    %1831 = vmatpush2.bf16.msra.mxu0 %v1317
    %1832 = vmatprep.subr.bf16.mxu0 %v1302
    %1833 = vmatpush2.bf16.msra.mxu0 %v1301
    %1834 = vmatprep.mubr.bf16.mxu0 %v58
    %1835 = vmatmul.mubr.bf16.gmra.mxu0 %v57
    %v1836 = vpop.f32.mrf.mxu0
    %v1837 = vadd.f32 %v346, %v1836
    %v1838 = vpop.f32.mrf.mxu0
    %v1839 = vadd.f32 %v350, %v1838
    %v1840 = vpop.f32.mrf.mxu0
    %v1841 = vpop.f32.mrf.mxu0
    %1842 = vdwg.mxu0
    %1843 = vmatprep.subr.bf16.mxu0 %v1288
    %1844 = vmatpush1.bf16.msra.mxu0 %v1287
    %1845 = vmatprep.subr.bf16.mxu0 %v1272
    %1846 = vmatpush1.bf16.msra.mxu0 %v1271
    %1847 = vmatprep.subr.bf16.mxu0 %v1256
    %1848 = vmatpush1.bf16.msra.mxu0 %v1255
    %1849 = vmatprep.subr.bf16.mxu0 %v1240
    %1850 = vmatpush1.bf16.msra.mxu0 %v1239
    %1851 = vmatprep.subr.bf16.mxu0 %v1224
    %1852 = vmatpush1.bf16.msra.mxu0 %v1223
    %1853 = vmatprep.subr.bf16.mxu0 %v1208
    %1854 = vmatpush1.bf16.msra.mxu0 %v1207
    %1855 = vmatprep.subr.bf16.mxu0 %v1192
    %1856 = vmatpush1.bf16.msra.mxu0 %v1191
    %1857 = vmatprep.subr.bf16.mxu0 %v1176
    %1858 = vmatpush1.bf16.msra.mxu0 %v1175
    %1859 = vmatprep.subr.bf16.mxu0 %v1416
    %1860 = vmatpush2.bf16.msra.mxu0 %v1415
    %1861 = vmatprep.subr.bf16.mxu0 %v1400
    %1862 = vmatpush2.bf16.msra.mxu0 %v1399
    %1863 = vmatprep.subr.bf16.mxu0 %v1384
    %1864 = vmatpush2.bf16.msra.mxu0 %v1383
    %1865 = vmatprep.subr.bf16.mxu0 %v1368
    %1866 = vmatpush2.bf16.msra.mxu0 %v1367
    %1867 = vmatprep.subr.bf16.mxu0 %v1352
    %1868 = vmatpush2.bf16.msra.mxu0 %v1351
    %1869 = vmatprep.subr.bf16.mxu0 %v1336
    %1870 = vmatpush2.bf16.msra.mxu0 %v1335
    %1871 = vmatprep.subr.bf16.mxu0 %v1320
    %1872 = vmatpush2.bf16.msra.mxu0 %v1319
    %1873 = vmatprep.subr.bf16.mxu0 %v1304
    %1874 = vmatpush2.bf16.msra.mxu0 %v1303
    %1875 = vmatprep.mubr.bf16.mxu0 %v58
    %1876 = vmatmul.mubr.bf16.gmra.mxu0 %v57
    %v1877 = vpop.f32.mrf.mxu0
    %v1878 = vadd.f32 %v354, %v1877
    %v1879 = vpop.f32.mrf.mxu0
    %v1880 = vadd.f32 %v358, %v1879
    %v1881 = vpop.f32.mrf.mxu0
    %v1882 = vpop.f32.mrf.mxu0
    %1883 = vdwg.mxu0
    %1884 = vmatprep.subr.bf16.mxu0 %v1290
    %1885 = vmatpush1.bf16.msra.mxu0 %v1289
    %1886 = vmatprep.subr.bf16.mxu0 %v1274
    %1887 = vmatpush1.bf16.msra.mxu0 %v1273
    %1888 = vmatprep.subr.bf16.mxu0 %v1258
    %1889 = vmatpush1.bf16.msra.mxu0 %v1257
    %1890 = vmatprep.subr.bf16.mxu0 %v1242
    %1891 = vmatpush1.bf16.msra.mxu0 %v1241
    %1892 = vmatprep.subr.bf16.mxu0 %v1226
    %1893 = vmatpush1.bf16.msra.mxu0 %v1225
    %1894 = vmatprep.subr.bf16.mxu0 %v1210
    %1895 = vmatpush1.bf16.msra.mxu0 %v1209
    %1896 = vmatprep.subr.bf16.mxu0 %v1194
    %1897 = vmatpush1.bf16.msra.mxu0 %v1193
    %1898 = vmatprep.subr.bf16.mxu0 %v1178
    %1899 = vmatpush1.bf16.msra.mxu0 %v1177
    %1900 = vmatprep.subr.bf16.mxu0 %v1418
    %1901 = vmatpush2.bf16.msra.mxu0 %v1417
    %1902 = vmatprep.subr.bf16.mxu0 %v1402
    %1903 = vmatpush2.bf16.msra.mxu0 %v1401
    %1904 = vmatprep.subr.bf16.mxu0 %v1386
    %1905 = vmatpush2.bf16.msra.mxu0 %v1385
    %1906 = vmatprep.subr.bf16.mxu0 %v1370
    %1907 = vmatpush2.bf16.msra.mxu0 %v1369
    %1908 = vmatprep.subr.bf16.mxu0 %v1354
    %1909 = vmatpush2.bf16.msra.mxu0 %v1353
    %1910 = vmatprep.subr.bf16.mxu0 %v1338
    %1911 = vmatpush2.bf16.msra.mxu0 %v1337
    %1912 = vmatprep.subr.bf16.mxu0 %v1322
    %1913 = vmatpush2.bf16.msra.mxu0 %v1321
    %1914 = vmatprep.subr.bf16.mxu0 %v1306
    %1915 = vmatpush2.bf16.msra.mxu0 %v1305
    %1916 = vmatprep.mubr.bf16.mxu0 %v58
    %1917 = vmatmul.mubr.bf16.gmra.mxu0 %v57
    %v1918 = vpop.f32.mrf.mxu0
    %v1919 = vadd.f32 %v362, %v1918
    %v1920 = vpop.f32.mrf.mxu0
    %v1921 = vadd.f32 %v366, %v1920
    %v1922 = vpop.f32.mrf.mxu0
    %v1923 = vpop.f32.mrf.mxu0
    %1924 = vdwg.mxu0
    %1925 = vmatprep.subr.bf16.mxu0 %v1292
    %1926 = vmatpush1.bf16.msra.mxu0 %v1291
    %1927 = vmatprep.subr.bf16.mxu0 %v1276
    %1928 = vmatpush1.bf16.msra.mxu0 %v1275
    %1929 = vmatprep.subr.bf16.mxu0 %v1260
    %1930 = vmatpush1.bf16.msra.mxu0 %v1259
    %1931 = vmatprep.subr.bf16.mxu0 %v1244
    %1932 = vmatpush1.bf16.msra.mxu0 %v1243
    %1933 = vmatprep.subr.bf16.mxu0 %v1228
    %1934 = vmatpush1.bf16.msra.mxu0 %v1227
    %1935 = vmatprep.subr.bf16.mxu0 %v1212
    %1936 = vmatpush1.bf16.msra.mxu0 %v1211
    %1937 = vmatprep.subr.bf16.mxu0 %v1196
    %1938 = vmatpush1.bf16.msra.mxu0 %v1195
    %1939 = vmatprep.subr.bf16.mxu0 %v1180
    %1940 = vmatpush1.bf16.msra.mxu0 %v1179
    %1941 = vmatprep.subr.bf16.mxu0 %v1420
    %1942 = vmatpush2.bf16.msra.mxu0 %v1419
    %1943 = vmatprep.subr.bf16.mxu0 %v1404
    %1944 = vmatpush2.bf16.msra.mxu0 %v1403
    %1945 = vmatprep.subr.bf16.mxu0 %v1388
    %1946 = vmatpush2.bf16.msra.mxu0 %v1387
    %1947 = vmatprep.subr.bf16.mxu0 %v1372
    %1948 = vmatpush2.bf16.msra.mxu0 %v1371
    %1949 = vmatprep.subr.bf16.mxu0 %v1356
    %1950 = vmatpush2.bf16.msra.mxu0 %v1355
    %1951 = vmatprep.subr.bf16.mxu0 %v1340
    %1952 = vmatpush2.bf16.msra.mxu0 %v1339
    %1953 = vmatprep.subr.bf16.mxu0 %v1324
    %1954 = vmatpush2.bf16.msra.mxu0 %v1323
    %1955 = vmatprep.subr.bf16.mxu0 %v1308
    %1956 = vmatpush2.bf16.msra.mxu0 %v1307
    %1957 = vmatprep.mubr.bf16.mxu0 %v58
    %1958 = vmatmul.mubr.bf16.gmra.mxu0 %v57
    %v1959 = vpop.f32.mrf.mxu0
    %v1960 = vadd.f32 %v370, %v1959
    %v1961 = vpop.f32.mrf.mxu0
    %v1962 = vadd.f32 %v374, %v1961
    %v1963 = vpop.f32.mrf.mxu0
    %v1964 = vpop.f32.mrf.mxu0
    %1965 = vdwg.mxu0
    %1966 = vmatprep.subr.bf16.mxu0 %v1294
    %1967 = vmatpush1.bf16.msra.mxu0 %v1293
    %1968 = vmatprep.subr.bf16.mxu0 %v1278
    %1969 = vmatpush1.bf16.msra.mxu0 %v1277
    %1970 = vmatprep.subr.bf16.mxu0 %v1262
    %1971 = vmatpush1.bf16.msra.mxu0 %v1261
    %1972 = vmatprep.subr.bf16.mxu0 %v1246
    %1973 = vmatpush1.bf16.msra.mxu0 %v1245
    %1974 = vmatprep.subr.bf16.mxu0 %v1230
    %1975 = vmatpush1.bf16.msra.mxu0 %v1229
    %1976 = vmatprep.subr.bf16.mxu0 %v1214
    %1977 = vmatpush1.bf16.msra.mxu0 %v1213
    %1978 = vmatprep.subr.bf16.mxu0 %v1198
    %1979 = vmatpush1.bf16.msra.mxu0 %v1197
    %1980 = vmatprep.subr.bf16.mxu0 %v1182
    %1981 = vmatpush1.bf16.msra.mxu0 %v1181
    %1982 = vmatprep.subr.bf16.mxu0 %v1422
    %1983 = vmatpush2.bf16.msra.mxu0 %v1421
    %1984 = vmatprep.subr.bf16.mxu0 %v1406
    %1985 = vmatpush2.bf16.msra.mxu0 %v1405
    %1986 = vmatprep.subr.bf16.mxu0 %v1390
    %1987 = vmatpush2.bf16.msra.mxu0 %v1389
    %1988 = vmatprep.subr.bf16.mxu0 %v1374
    %1989 = vmatpush2.bf16.msra.mxu0 %v1373
    %1990 = vmatprep.subr.bf16.mxu0 %v1358
    %1991 = vmatpush2.bf16.msra.mxu0 %v1357
    %1992 = vmatprep.subr.bf16.mxu0 %v1342
    %1993 = vmatpush2.bf16.msra.mxu0 %v1341
    %1994 = vmatprep.subr.bf16.mxu0 %v1326
    %1995 = vmatpush2.bf16.msra.mxu0 %v1325
    %1996 = vmatprep.subr.bf16.mxu0 %v1310
    %1997 = vmatpush2.bf16.msra.mxu0 %v1309
    %1998 = vmatprep.mubr.bf16.mxu0 %v58
    %1999 = vmatmul.mubr.bf16.gmra.mxu0 %v57
    %v2000 = vpop.f32.mrf.mxu0
    %v2001 = vadd.f32 %v378, %v2000
    %v2002 = vpop.f32.mrf.mxu0
    %v2003 = vadd.f32 %v382, %v2002
    %v2004 = vpop.f32.mrf.mxu0
    %v2005 = vpop.f32.mrf.mxu0
    %2006 = vdwg.mxu0
    %v2007 = vmax.f32 %v1714, 0.0
    %v2008 = vmax.f32 %v1716, 0.0
    %v2009 = vmax.f32 %v1755, 0.0
    %v2010 = vmax.f32 %v1757, 0.0
    %v2011 = vmax.f32 %v1796, 0.0
    %v2012 = vmax.f32 %v1798, 0.0
    %v2013 = vmax.f32 %v1837, 0.0
    %v2014 = vmax.f32 %v1839, 0.0
    %v2015 = vmax.f32 %v1878, 0.0
    %v2016 = vmax.f32 %v1880, 0.0
    %v2017 = vmax.f32 %v1919, 0.0
    %v2018 = vmax.f32 %v1921, 0.0
    %v2019 = vmax.f32 %v1960, 0.0
    %v2020 = vmax.f32 %v1962, 0.0
    %v2021 = vmax.f32 %v2001, 0.0
    %v2022 = vmax.f32 %v2003, 0.0
    %v2023 = vpack.c.bf16 %v2007, %v2007
    %v2024 = vpack.c.bf16 %v2008, %v2008
    %v2025 = vpack.c.bf16 %v2009, %v2009
    %v2026 = vpack.c.bf16 %v2010, %v2010
    %v2027 = vpack.c.bf16 %v2011, %v2011
    %v2028 = vpack.c.bf16 %v2012, %v2012
    %v2029 = vpack.c.bf16 %v2013, %v2013
    %v2030 = vpack.c.bf16 %v2014, %v2014
    %v2031 = vpack.c.bf16 %v2015, %v2015
    %v2032 = vpack.c.bf16 %v2016, %v2016
    %v2033 = vpack.c.bf16 %v2017, %v2017
    %v2034 = vpack.c.bf16 %v2018, %v2018
    %v2035 = vpack.c.bf16 %v2019, %v2019
    %v2036 = vpack.c.bf16 %v2020, %v2020
    %v2037 = vpack.c.bf16 %v2021, %v2021
    %v2038 = vpack.c.bf16 %v2022, %v2022
    %s2039 = scalar_lea.vmem [#allocation4], 256
    %v2040 = vld [vmem:[%s2039] sm:$0xff]
    %v2041 = vld [vmem:[%s2039 + $0x8] sm:$0xff]
    %v2042 = vld [vmem:[%s2039 + $0x10] sm:$0xff]
    %v2043 = vld [vmem:[%s2039 + $0x18] sm:$0xff]
    %v2044 = vld [vmem:[%s2039 + $0x20] sm:$0xff]
    %v2045 = vld [vmem:[%s2039 + $0x28] sm:$0xff]
    %v2046 = vld [vmem:[%s2039 + $0x30] sm:$0xff]
    %v2047 = vld [vmem:[%s2039 + $0x38] sm:$0xff]
    %v2048 = vld [vmem:[%s2039 + $0x40] sm:$0xff]
    %v2049 = vld [vmem:[%s2039 + $0x48] sm:$0xff]
    %v2050 = vld [vmem:[%s2039 + $0x50] sm:$0xff]
    %v2051 = vld [vmem:[%s2039 + $0x58] sm:$0xff]
    %v2052 = vld [vmem:[%s2039 + $0x60] sm:$0xff]
    %v2053 = vld [vmem:[%s2039 + $0x68] sm:$0xff]
    %v2054 = vld [vmem:[%s2039 + $0x70] sm:$0xff]
    %v2055 = vld [vmem:[%s2039 + $0x78] sm:$0xff]
    %v2056 = vld [vmem:[%s2039 + $0x80] sm:$0xff]
    %v2057 = vld [vmem:[%s2039 + $0x88] sm:$0xff]
    %v2058 = vld [vmem:[%s2039 + $0x90] sm:$0xff]
    %v2059 = vld [vmem:[%s2039 + $0x98] sm:$0xff]
    %v2060 = vld [vmem:[%s2039 + $0xa0] sm:$0xff]
    %v2061 = vld [vmem:[%s2039 + $0xa8] sm:$0xff]
    %v2062 = vld [vmem:[%s2039 + $0xb0] sm:$0xff]
    %v2063 = vld [vmem:[%s2039 + $0xb8] sm:$0xff]
    %v2064 = vld [vmem:[%s2039 + $0xc0] sm:$0xff]
    %v2065 = vld [vmem:[%s2039 + $0xc8] sm:$0xff]
    %v2066 = vld [vmem:[%s2039 + $0xd0] sm:$0xff]
    %v2067 = vld [vmem:[%s2039 + $0xd8] sm:$0xff]
    %v2068 = vld [vmem:[%s2039 + $0xe0] sm:$0xff]
    %v2069 = vld [vmem:[%s2039 + $0xe8] sm:$0xff]
    %v2070 = vld [vmem:[%s2039 + $0xf0] sm:$0xff]
    %v2071 = vld [vmem:[%s2039 + $0xf8] sm:$0xff]
    %s2072 = scalar_lea.vmem [#allocation4], 512
    %v2073 = vld [vmem:[%s2072] sm:$0xff]
    %v2074 = vld [vmem:[%s2072 + $0x8] sm:$0xff]
    %v2075 = vld [vmem:[%s2072 + $0x10] sm:$0xff]
    %v2076 = vld [vmem:[%s2072 + $0x18] sm:$0xff]
    %v2077 = vld [vmem:[%s2072 + $0x20] sm:$0xff]
    %v2078 = vld [vmem:[%s2072 + $0x28] sm:$0xff]
    %v2079 = vld [vmem:[%s2072 + $0x30] sm:$0xff]
    %v2080 = vld [vmem:[%s2072 + $0x38] sm:$0xff]
    %v2081 = vld [vmem:[%s2072 + $0x40] sm:$0xff]
    %v2082 = vld [vmem:[%s2072 + $0x48] sm:$0xff]
    %v2083 = vld [vmem:[%s2072 + $0x50] sm:$0xff]
    %v2084 = vld [vmem:[%s2072 + $0x58] sm:$0xff]
    %v2085 = vld [vmem:[%s2072 + $0x60] sm:$0xff]
    %v2086 = vld [vmem:[%s2072 + $0x68] sm:$0xff]
    %v2087 = vld [vmem:[%s2072 + $0x70] sm:$0xff]
    %v2088 = vld [vmem:[%s2072 + $0x78] sm:$0xff]
    %v2089 = vld [vmem:[%s2072 + $0x80] sm:$0xff]
    %v2090 = vld [vmem:[%s2072 + $0x88] sm:$0xff]
    %v2091 = vld [vmem:[%s2072 + $0x90] sm:$0xff]
    %v2092 = vld [vmem:[%s2072 + $0x98] sm:$0xff]
    %v2093 = vld [vmem:[%s2072 + $0xa0] sm:$0xff]
    %v2094 = vld [vmem:[%s2072 + $0xa8] sm:$0xff]
    %v2095 = vld [vmem:[%s2072 + $0xb0] sm:$0xff]
    %v2096 = vld [vmem:[%s2072 + $0xb8] sm:$0xff]
    %v2097 = vld [vmem:[%s2072 + $0xc0] sm:$0xff]
    %v2098 = vld [vmem:[%s2072 + $0xc8] sm:$0xff]
    %v2099 = vld [vmem:[%s2072 + $0xd0] sm:$0xff]
    %v2100 = vld [vmem:[%s2072 + $0xd8] sm:$0xff]
    %v2101 = vld [vmem:[%s2072 + $0xe0] sm:$0xff]
    %v2102 = vld [vmem:[%s2072 + $0xe8] sm:$0xff]
    %v2103 = vld [vmem:[%s2072 + $0xf0] sm:$0xff]
    %v2104 = vld [vmem:[%s2072 + $0xf8] sm:$0xff]
    %v2137 = vunpack.c.l.b16 %v2073
    %v2138 = vunpack.c.h.b16 %v2073
    %v2139 = vunpack.c.l.b16 %v2074
    %v2140 = vunpack.c.h.b16 %v2074
    %v2141 = vunpack.c.l.b16 %v2075
    %v2142 = vunpack.c.h.b16 %v2075
    %v2143 = vunpack.c.l.b16 %v2076
    %v2144 = vunpack.c.h.b16 %v2076
    %v2145 = vunpack.c.l.b16 %v2077
    %v2146 = vunpack.c.h.b16 %v2077
    %v2147 = vunpack.c.l.b16 %v2078
    %v2148 = vunpack.c.h.b16 %v2078
    %v2149 = vunpack.c.l.b16 %v2079
    %v2150 = vunpack.c.h.b16 %v2079
    %v2151 = vunpack.c.l.b16 %v2080
    %v2152 = vunpack.c.h.b16 %v2080
    %v2153 = vunpack.c.l.b16 %v2081
    %v2154 = vunpack.c.h.b16 %v2081
    %v2155 = vunpack.c.l.b16 %v2082
    %v2156 = vunpack.c.h.b16 %v2082
    %v2157 = vunpack.c.l.b16 %v2083
    %v2158 = vunpack.c.h.b16 %v2083
    %v2159 = vunpack.c.l.b16 %v2084
    %v2160 = vunpack.c.h.b16 %v2084
    %v2161 = vunpack.c.l.b16 %v2085
    %v2162 = vunpack.c.h.b16 %v2085
    %v2163 = vunpack.c.l.b16 %v2086
    %v2164 = vunpack.c.h.b16 %v2086
    %v2165 = vunpack.c.l.b16 %v2087
    %v2166 = vunpack.c.h.b16 %v2087
    %v2167 = vunpack.c.l.b16 %v2088
    %v2168 = vunpack.c.h.b16 %v2088
    %v2169 = vunpack.c.l.b16 %v2089
    %v2170 = vunpack.c.h.b16 %v2089
    %v2171 = vunpack.c.l.b16 %v2090
    %v2172 = vunpack.c.h.b16 %v2090
    %v2173 = vunpack.c.l.b16 %v2091
    %v2174 = vunpack.c.h.b16 %v2091
    %v2175 = vunpack.c.l.b16 %v2092
    %v2176 = vunpack.c.h.b16 %v2092
    %v2177 = vunpack.c.l.b16 %v2093
    %v2178 = vunpack.c.h.b16 %v2093
    %v2179 = vunpack.c.l.b16 %v2094
    %v2180 = vunpack.c.h.b16 %v2094
    %v2181 = vunpack.c.l.b16 %v2095
    %v2182 = vunpack.c.h.b16 %v2095
    %v2183 = vunpack.c.l.b16 %v2096
    %v2184 = vunpack.c.h.b16 %v2096
    %v2185 = vunpack.c.l.b16 %v2097
    %v2186 = vunpack.c.h.b16 %v2097
    %v2187 = vunpack.c.l.b16 %v2098
    %v2188 = vunpack.c.h.b16 %v2098
    %v2189 = vunpack.c.l.b16 %v2099
    %v2190 = vunpack.c.h.b16 %v2099
    %v2191 = vunpack.c.l.b16 %v2100
    %v2192 = vunpack.c.h.b16 %v2100
    %v2193 = vunpack.c.l.b16 %v2101
    %v2194 = vunpack.c.h.b16 %v2101
    %v2195 = vunpack.c.l.b16 %v2102
    %v2196 = vunpack.c.h.b16 %v2102
    %v2197 = vunpack.c.l.b16 %v2103
    %v2198 = vunpack.c.h.b16 %v2103
    %v2199 = vunpack.c.l.b16 %v2104
    %v2200 = vunpack.c.h.b16 %v2104
    %v2201 = vpack.c.b16 %v2139, %v2137
    %v2202 = vpack.c.b16 %v2140, %v2138
    %v2203 = vpack.c.b16 %v2143, %v2141
    %v2204 = vpack.c.b16 %v2144, %v2142
    %v2205 = vpack.c.b16 %v2147, %v2145
    %v2206 = vpack.c.b16 %v2148, %v2146
    %v2207 = vpack.c.b16 %v2151, %v2149
    %v2208 = vpack.c.b16 %v2152, %v2150
    %v2209 = vpack.c.b16 %v2155, %v2153
    %v2210 = vpack.c.b16 %v2156, %v2154
    %v2211 = vpack.c.b16 %v2159, %v2157
    %v2212 = vpack.c.b16 %v2160, %v2158
    %v2213 = vpack.c.b16 %v2163, %v2161
    %v2214 = vpack.c.b16 %v2164, %v2162
    %v2215 = vpack.c.b16 %v2167, %v2165
    %v2216 = vpack.c.b16 %v2168, %v2166
    %v2217 = vpack.c.b16 %v2171, %v2169
    %v2218 = vpack.c.b16 %v2172, %v2170
    %v2219 = vpack.c.b16 %v2175, %v2173
    %v2220 = vpack.c.b16 %v2176, %v2174
    %v2221 = vpack.c.b16 %v2179, %v2177
    %v2222 = vpack.c.b16 %v2180, %v2178
    %v2223 = vpack.c.b16 %v2183, %v2181
    %v2224 = vpack.c.b16 %v2184, %v2182
    %v2225 = vpack.c.b16 %v2187, %v2185
    %v2226 = vpack.c.b16 %v2188, %v2186
    %v2227 = vpack.c.b16 %v2191, %v2189
    %v2228 = vpack.c.b16 %v2192, %v2190
    %v2229 = vpack.c.b16 %v2195, %v2193
    %v2230 = vpack.c.b16 %v2196, %v2194
    %v2231 = vpack.c.b16 %v2199, %v2197
    %v2232 = vpack.c.b16 %v2200, %v2198
    %2265 = vmatprep.subr.bf16.mxu0 %v2216
    %2266 = vmatpush1.bf16.msra.mxu0 %v2215
    %2267 = vmatprep.subr.bf16.mxu0 %v2214
    %2268 = vmatpush1.bf16.msra.mxu0 %v2213
    %2269 = vmatprep.subr.bf16.mxu0 %v2212
    %2270 = vmatpush1.bf16.msra.mxu0 %v2211
    %2271 = vmatprep.subr.bf16.mxu0 %v2210
    %2272 = vmatpush1.bf16.msra.mxu0 %v2209
    %2273 = vmatprep.subr.bf16.mxu0 %v2208
    %2274 = vmatpush1.bf16.msra.mxu0 %v2207
    %2275 = vmatprep.subr.bf16.mxu0 %v2206
    %2276 = vmatpush1.bf16.msra.mxu0 %v2205
    %2277 = vmatprep.subr.bf16.mxu0 %v2204
    %2278 = vmatpush1.bf16.msra.mxu0 %v2203
    %2279 = vmatprep.subr.bf16.mxu0 %v2202
    %2280 = vmatpush1.bf16.msra.mxu0 %v2201
    %2281 = vmatprep.subr.bf16.mxu0 %v2232
    %2282 = vmatpush2.bf16.msra.mxu0 %v2231
    %2283 = vmatprep.subr.bf16.mxu0 %v2230
    %2284 = vmatpush2.bf16.msra.mxu0 %v2229
    %2285 = vmatprep.subr.bf16.mxu0 %v2228
    %2286 = vmatpush2.bf16.msra.mxu0 %v2227
    %2287 = vmatprep.subr.bf16.mxu0 %v2226
    %2288 = vmatpush2.bf16.msra.mxu0 %v2225
    %2289 = vmatprep.subr.bf16.mxu0 %v2224
    %2290 = vmatpush2.bf16.msra.mxu0 %v2223
    %2291 = vmatprep.subr.bf16.mxu0 %v2222
    %2292 = vmatpush2.bf16.msra.mxu0 %v2221
    %2293 = vmatprep.subr.bf16.mxu0 %v2220
    %2294 = vmatpush2.bf16.msra.mxu0 %v2219
    %2295 = vmatprep.subr.bf16.mxu0 %v2218
    %2296 = vmatpush2.bf16.msra.mxu0 %v2217
    %2297 = vmatprep.mubr.bf16.mxu0 %v2026
    %2298 = vmatmul.mubr.bf16.gmra.mxu0 %v2025
    %v2299 = vpop.f32.mrf.mxu0
    %v2300 = vadd.f32 0.0, %v2299
    %v2301 = vpop.f32.mrf.mxu0
    %v2302 = vadd.f32 0.0, %v2301
    %v2303 = vpop.f32.mrf.mxu0
    %v2304 = vpop.f32.mrf.mxu0
    %2305 = vdwg.mxu0
    %v2338 = vunpack.c.l.b16 %v2040
    %v2339 = vunpack.c.h.b16 %v2040
    %v2340 = vunpack.c.l.b16 %v2041
    %v2341 = vunpack.c.h.b16 %v2041
    %v2342 = vunpack.c.l.b16 %v2042
    %v2343 = vunpack.c.h.b16 %v2042
    %v2344 = vunpack.c.l.b16 %v2043
    %v2345 = vunpack.c.h.b16 %v2043
    %v2346 = vunpack.c.l.b16 %v2044
    %v2347 = vunpack.c.h.b16 %v2044
    %v2348 = vunpack.c.l.b16 %v2045
    %v2349 = vunpack.c.h.b16 %v2045
    %v2350 = vunpack.c.l.b16 %v2046
    %v2351 = vunpack.c.h.b16 %v2046
    %v2352 = vunpack.c.l.b16 %v2047
    %v2353 = vunpack.c.h.b16 %v2047
    %v2354 = vunpack.c.l.b16 %v2048
    %v2355 = vunpack.c.h.b16 %v2048
    %v2356 = vunpack.c.l.b16 %v2049
    %v2357 = vunpack.c.h.b16 %v2049
    %v2358 = vunpack.c.l.b16 %v2050
    %v2359 = vunpack.c.h.b16 %v2050
    %v2360 = vunpack.c.l.b16 %v2051
    %v2361 = vunpack.c.h.b16 %v2051
    %v2362 = vunpack.c.l.b16 %v2052
    %v2363 = vunpack.c.h.b16 %v2052
    %v2364 = vunpack.c.l.b16 %v2053
    %v2365 = vunpack.c.h.b16 %v2053
    %v2366 = vunpack.c.l.b16 %v2054
    %v2367 = vunpack.c.h.b16 %v2054
    %v2368 = vunpack.c.l.b16 %v2055
    %v2369 = vunpack.c.h.b16 %v2055
    %v2370 = vunpack.c.l.b16 %v2056
    %v2371 = vunpack.c.h.b16 %v2056
    %v2372 = vunpack.c.l.b16 %v2057
    %v2373 = vunpack.c.h.b16 %v2057
    %v2374 = vunpack.c.l.b16 %v2058
    %v2375 = vunpack.c.h.b16 %v2058
    %v2376 = vunpack.c.l.b16 %v2059
    %v2377 = vunpack.c.h.b16 %v2059
    %v2378 = vunpack.c.l.b16 %v2060
    %v2379 = vunpack.c.h.b16 %v2060
    %v2380 = vunpack.c.l.b16 %v2061
    %v2381 = vunpack.c.h.b16 %v2061
    %v2382 = vunpack.c.l.b16 %v2062
    %v2383 = vunpack.c.h.b16 %v2062
    %v2384 = vunpack.c.l.b16 %v2063
    %v2385 = vunpack.c.h.b16 %v2063
    %v2386 = vunpack.c.l.b16 %v2064
    %v2387 = vunpack.c.h.b16 %v2064
    %v2388 = vunpack.c.l.b16 %v2065
    %v2389 = vunpack.c.h.b16 %v2065
    %v2390 = vunpack.c.l.b16 %v2066
    %v2391 = vunpack.c.h.b16 %v2066
    %v2392 = vunpack.c.l.b16 %v2067
    %v2393 = vunpack.c.h.b16 %v2067
    %v2394 = vunpack.c.l.b16 %v2068
    %v2395 = vunpack.c.h.b16 %v2068
    %v2396 = vunpack.c.l.b16 %v2069
    %v2397 = vunpack.c.h.b16 %v2069
    %v2398 = vunpack.c.l.b16 %v2070
    %v2399 = vunpack.c.h.b16 %v2070
    %v2400 = vunpack.c.l.b16 %v2071
    %v2401 = vunpack.c.h.b16 %v2071
    %v2402 = vpack.c.b16 %v2340, %v2338
    %v2403 = vpack.c.b16 %v2341, %v2339
    %v2404 = vpack.c.b16 %v2344, %v2342
    %v2405 = vpack.c.b16 %v2345, %v2343
    %v2406 = vpack.c.b16 %v2348, %v2346
    %v2407 = vpack.c.b16 %v2349, %v2347
    %v2408 = vpack.c.b16 %v2352, %v2350
    %v2409 = vpack.c.b16 %v2353, %v2351
    %v2410 = vpack.c.b16 %v2356, %v2354
    %v2411 = vpack.c.b16 %v2357, %v2355
    %v2412 = vpack.c.b16 %v2360, %v2358
    %v2413 = vpack.c.b16 %v2361, %v2359
    %v2414 = vpack.c.b16 %v2364, %v2362
    %v2415 = vpack.c.b16 %v2365, %v2363
    %v2416 = vpack.c.b16 %v2368, %v2366
    %v2417 = vpack.c.b16 %v2369, %v2367
    %v2418 = vpack.c.b16 %v2372, %v2370
    %v2419 = vpack.c.b16 %v2373, %v2371
    %v2420 = vpack.c.b16 %v2376, %v2374
    %v2421 = vpack.c.b16 %v2377, %v2375
    %v2422 = vpack.c.b16 %v2380, %v2378
    %v2423 = vpack.c.b16 %v2381, %v2379
    %v2424 = vpack.c.b16 %v2384, %v2382
    %v2425 = vpack.c.b16 %v2385, %v2383
    %v2426 = vpack.c.b16 %v2388, %v2386
    %v2427 = vpack.c.b16 %v2389, %v2387
    %v2428 = vpack.c.b16 %v2392, %v2390
    %v2429 = vpack.c.b16 %v2393, %v2391
    %v2430 = vpack.c.b16 %v2396, %v2394
    %v2431 = vpack.c.b16 %v2397, %v2395
    %v2432 = vpack.c.b16 %v2400, %v2398
    %v2433 = vpack.c.b16 %v2401, %v2399
    %2466 = vmatprep.subr.bf16.mxu0 %v2417
    %2467 = vmatpush1.bf16.msra.mxu0 %v2416
    %2468 = vmatprep.subr.bf16.mxu0 %v2415
    %2469 = vmatpush1.bf16.msra.mxu0 %v2414
    %2470 = vmatprep.subr.bf16.mxu0 %v2413
    %2471 = vmatpush1.bf16.msra.mxu0 %v2412
    %2472 = vmatprep.subr.bf16.mxu0 %v2411
    %2473 = vmatpush1.bf16.msra.mxu0 %v2410
    %2474 = vmatprep.subr.bf16.mxu0 %v2409
    %2475 = vmatpush1.bf16.msra.mxu0 %v2408
    %2476 = vmatprep.subr.bf16.mxu0 %v2407
    %2477 = vmatpush1.bf16.msra.mxu0 %v2406
    %2478 = vmatprep.subr.bf16.mxu0 %v2405
    %2479 = vmatpush1.bf16.msra.mxu0 %v2404
    %2480 = vmatprep.subr.bf16.mxu0 %v2403
    %2481 = vmatpush1.bf16.msra.mxu0 %v2402
    %2482 = vmatprep.subr.bf16.mxu0 %v2433
    %2483 = vmatpush2.bf16.msra.mxu0 %v2432
    %2484 = vmatprep.subr.bf16.mxu0 %v2431
    %2485 = vmatpush2.bf16.msra.mxu0 %v2430
    %2486 = vmatprep.subr.bf16.mxu0 %v2429
    %2487 = vmatpush2.bf16.msra.mxu0 %v2428
    %2488 = vmatprep.subr.bf16.mxu0 %v2427
    %2489 = vmatpush2.bf16.msra.mxu0 %v2426
    %2490 = vmatprep.subr.bf16.mxu0 %v2425
    %2491 = vmatpush2.bf16.msra.mxu0 %v2424
    %2492 = vmatprep.subr.bf16.mxu0 %v2423
    %2493 = vmatpush2.bf16.msra.mxu0 %v2422
    %2494 = vmatprep.subr.bf16.mxu0 %v2421
    %2495 = vmatpush2.bf16.msra.mxu0 %v2420
    %2496 = vmatprep.subr.bf16.mxu0 %v2419
    %2497 = vmatpush2.bf16.msra.mxu0 %v2418
    %2498 = vmatprep.mubr.bf16.mxu0 %v2024
    %2499 = vmatmul.mubr.bf16.gmra.mxu0 %v2023
    %v2500 = vpop.f32.mrf.mxu0
    %v2501 = vadd.f32 %v2300, %v2500
    %v2502 = vpop.f32.mrf.mxu0
    %v2503 = vadd.f32 %v2302, %v2502
    %v2504 = vpop.f32.mrf.mxu0
    %v2505 = vpop.f32.mrf.mxu0
    %2506 = vdwg.mxu0
    %v2507 = vld [vmem:[%s4] sm:$0x3]
    %v2509 = vlaneseq
    %v2510 = vshrl.u32 %v2509, 7
    %v2511 = vsub.s32 0, %v2510
    %v2512 = vrot.slane %v2507, %v2511
    %v2513 = vlaneseq
    %v2514 = vshrl.u32 %v2513, 7
    %v2515 = vsub.s32 1, %v2514
    %v2516 = vrot.slane %v2507, %v2515
    %v2519 = vadd.f32 %v2501, %v2512
    %v2520 = vadd.f32 %v2503, %v2516
    %v2521 = vmax.f32 %v2519, 0.0
    %v2522 = vmax.f32 %v2520, 0.0
    %v2523 = vpack.c.bf16 %v2521, %v2521
    %v2524 = vpack.c.bf16 %v2522, %v2522
    %v2525 = vld [vmem:[%s5] sm:$0xf]
    %v2526 = vld [vmem:[%s5 + $0x4] sm:$0xf]
    %v2527 = vld [vmem:[%s5 + $0x8] sm:$0xf]
    %v2528 = vld [vmem:[%s5 + $0xc] sm:$0xf]
    %v2529 = vld [vmem:[%s5 + $0x10] sm:$0xf]
    %v2530 = vld [vmem:[%s5 + $0x14] sm:$0xf]
    %v2531 = vld [vmem:[%s5 + $0x18] sm:$0xf]
    %v2532 = vld [vmem:[%s5 + $0x1c] sm:$0xf]
    %v2533 = vld [vmem:[%s5 + $0x20] sm:$0xf]
    %v2534 = vld [vmem:[%s5 + $0x24] sm:$0xf]
    %v2535 = vld [vmem:[%s5 + $0x28] sm:$0xf]
    %v2536 = vld [vmem:[%s5 + $0x2c] sm:$0xf]
    %v2537 = vld [vmem:[%s5 + $0x30] sm:$0xf]
    %v2538 = vld [vmem:[%s5 + $0x34] sm:$0xf]
    %v2539 = vld [vmem:[%s5 + $0x38] sm:$0xf]
    %v2540 = vld [vmem:[%s5 + $0x3c] sm:$0xf]
    %v2541 = vld [vmem:[%s5 + $0x40] sm:$0xf]
    %v2542 = vld [vmem:[%s5 + $0x44] sm:$0xf]
    %v2543 = vld [vmem:[%s5 + $0x48] sm:$0xf]
    %v2544 = vld [vmem:[%s5 + $0x4c] sm:$0xf]
    %v2545 = vld [vmem:[%s5 + $0x50] sm:$0xf]
    %v2546 = vld [vmem:[%s5 + $0x54] sm:$0xf]
    %v2547 = vld [vmem:[%s5 + $0x58] sm:$0xf]
    %v2548 = vld [vmem:[%s5 + $0x5c] sm:$0xf]
    %v2549 = vld [vmem:[%s5 + $0x60] sm:$0xf]
    %v2550 = vld [vmem:[%s5 + $0x64] sm:$0xf]
    %v2551 = vld [vmem:[%s5 + $0x68] sm:$0xf]
    %v2552 = vld [vmem:[%s5 + $0x6c] sm:$0xf]
    %v2553 = vld [vmem:[%s5 + $0x70] sm:$0xf]
    %v2554 = vld [vmem:[%s5 + $0x74] sm:$0xf]
    %v2555 = vld [vmem:[%s5 + $0x78] sm:$0xf]
    %v2556 = vld [vmem:[%s5 + $0x7c] sm:$0xf]
    %v2557 = vld [vmem:[#allocation4] sm:$0xff]
    %v2558 = vld [vmem:[#allocation4 + $0x8] sm:$0xff]
    %v2559 = vld [vmem:[#allocation4 + $0x10] sm:$0xff]
    %v2560 = vld [vmem:[#allocation4 + $0x18] sm:$0xff]
    %v2561 = vld [vmem:[#allocation4 + $0x20] sm:$0xff]
    %v2562 = vld [vmem:[#allocation4 + $0x28] sm:$0xff]
    %v2563 = vld [vmem:[#allocation4 + $0x30] sm:$0xff]
    %v2564 = vld [vmem:[#allocation4 + $0x38] sm:$0xff]
    %v2565 = vld [vmem:[#allocation4 + $0x40] sm:$0xff]
    %v2566 = vld [vmem:[#allocation4 + $0x48] sm:$0xff]
    %v2567 = vld [vmem:[#allocation4 + $0x50] sm:$0xff]
    %v2568 = vld [vmem:[#allocation4 + $0x58] sm:$0xff]
    %v2569 = vld [vmem:[#allocation4 + $0x60] sm:$0xff]
    %v2570 = vld [vmem:[#allocation4 + $0x68] sm:$0xff]
    %v2571 = vld [vmem:[#allocation4 + $0x70] sm:$0xff]
    %v2572 = vld [vmem:[#allocation4 + $0x78] sm:$0xff]
    %v2573 = vld [vmem:[#allocation4 + $0x80] sm:$0xff]
    %v2574 = vld [vmem:[#allocation4 + $0x88] sm:$0xff]
    %v2575 = vld [vmem:[#allocation4 + $0x90] sm:$0xff]
    %v2576 = vld [vmem:[#allocation4 + $0x98] sm:$0xff]
    %v2577 = vld [vmem:[#allocation4 + $0xa0] sm:$0xff]
    %v2578 = vld [vmem:[#allocation4 + $0xa8] sm:$0xff]
    %v2579 = vld [vmem:[#allocation4 + $0xb0] sm:$0xff]
    %v2580 = vld [vmem:[#allocation4 + $0xb8] sm:$0xff]
    %v2581 = vld [vmem:[#allocation4 + $0xc0] sm:$0xff]
    %v2582 = vld [vmem:[#allocation4 + $0xc8] sm:$0xff]
    %v2583 = vld [vmem:[#allocation4 + $0xd0] sm:$0xff]
    %v2584 = vld [vmem:[#allocation4 + $0xd8] sm:$0xff]
    %v2585 = vld [vmem:[#allocation4 + $0xe0] sm:$0xff]
    %v2586 = vld [vmem:[#allocation4 + $0xe8] sm:$0xff]
    %v2587 = vld [vmem:[#allocation4 + $0xf0] sm:$0xff]
    %v2588 = vld [vmem:[#allocation4 + $0xf8] sm:$0xff]
    %2589 = vmatprep.subr.bf16.mxu0 %v2417
    %2590 = vmatpush1.bf16.msra.mxu0 %v2416
    %2591 = vmatprep.subr.bf16.mxu0 %v2415
    %2592 = vmatpush1.bf16.msra.mxu0 %v2414
    %2593 = vmatprep.subr.bf16.mxu0 %v2413
    %2594 = vmatpush1.bf16.msra.mxu0 %v2412
    %2595 = vmatprep.subr.bf16.mxu0 %v2411
    %2596 = vmatpush1.bf16.msra.mxu0 %v2410
    %2597 = vmatprep.subr.bf16.mxu0 %v2409
    %2598 = vmatpush1.bf16.msra.mxu0 %v2408
    %2599 = vmatprep.subr.bf16.mxu0 %v2407
    %2600 = vmatpush1.bf16.msra.mxu0 %v2406
    %2601 = vmatprep.subr.bf16.mxu0 %v2405
    %2602 = vmatpush1.bf16.msra.mxu0 %v2404
    %2603 = vmatprep.subr.bf16.mxu0 %v2403
    %2604 = vmatpush1.bf16.msra.mxu0 %v2402
    %2605 = vmatprep.subr.bf16.mxu0 %v2433
    %2606 = vmatpush2.bf16.msra.mxu0 %v2432
    %2607 = vmatprep.subr.bf16.mxu0 %v2431
    %2608 = vmatpush2.bf16.msra.mxu0 %v2430
    %2609 = vmatprep.subr.bf16.mxu0 %v2429
    %2610 = vmatpush2.bf16.msra.mxu0 %v2428
    %2611 = vmatprep.subr.bf16.mxu0 %v2427
    %2612 = vmatpush2.bf16.msra.mxu0 %v2426
    %2613 = vmatprep.subr.bf16.mxu0 %v2425
    %2614 = vmatpush2.bf16.msra.mxu0 %v2424
    %2615 = vmatprep.subr.bf16.mxu0 %v2423
    %2616 = vmatpush2.bf16.msra.mxu0 %v2422
    %2617 = vmatprep.subr.bf16.mxu0 %v2421
    %2618 = vmatpush2.bf16.msra.mxu0 %v2420
    %2619 = vmatprep.subr.bf16.mxu0 %v2419
    %2620 = vmatpush2.bf16.msra.mxu0 %v2418
    %2621 = vmatprep.mubr.bf16.mxu0 %v2028
    %2622 = vmatmul.mubr.bf16.gmra.mxu0 %v2027
    %v2623 = vpop.f32.mrf.mxu0
    %v2624 = vadd.f32 0.0, %v2623
    %v2625 = vpop.f32.mrf.mxu0
    %v2626 = vadd.f32 0.0, %v2625
    %v2627 = vpop.f32.mrf.mxu0
    %v2628 = vpop.f32.mrf.mxu0
    %2629 = vdwg.mxu0
    %v2662 = vunpack.c.l.b16 %v2557
    %v2663 = vunpack.c.h.b16 %v2557
    %v2664 = vunpack.c.l.b16 %v2558
    %v2665 = vunpack.c.h.b16 %v2558
    %v2666 = vunpack.c.l.b16 %v2559
    %v2667 = vunpack.c.h.b16 %v2559
    %v2668 = vunpack.c.l.b16 %v2560
    %v2669 = vunpack.c.h.b16 %v2560
    %v2670 = vunpack.c.l.b16 %v2561
    %v2671 = vunpack.c.h.b16 %v2561
    %v2672 = vunpack.c.l.b16 %v2562
    %v2673 = vunpack.c.h.b16 %v2562
    %v2674 = vunpack.c.l.b16 %v2563
    %v2675 = vunpack.c.h.b16 %v2563
    %v2676 = vunpack.c.l.b16 %v2564
    %v2677 = vunpack.c.h.b16 %v2564
    %v2678 = vunpack.c.l.b16 %v2565
    %v2679 = vunpack.c.h.b16 %v2565
    %v2680 = vunpack.c.l.b16 %v2566
    %v2681 = vunpack.c.h.b16 %v2566
    %v2682 = vunpack.c.l.b16 %v2567
    %v2683 = vunpack.c.h.b16 %v2567
    %v2684 = vunpack.c.l.b16 %v2568
    %v2685 = vunpack.c.h.b16 %v2568
    %v2686 = vunpack.c.l.b16 %v2569
    %v2687 = vunpack.c.h.b16 %v2569
    %v2688 = vunpack.c.l.b16 %v2570
    %v2689 = vunpack.c.h.b16 %v2570
    %v2690 = vunpack.c.l.b16 %v2571
    %v2691 = vunpack.c.h.b16 %v2571
    %v2692 = vunpack.c.l.b16 %v2572
    %v2693 = vunpack.c.h.b16 %v2572
    %v2694 = vunpack.c.l.b16 %v2573
    %v2695 = vunpack.c.h.b16 %v2573
    %v2696 = vunpack.c.l.b16 %v2574
    %v2697 = vunpack.c.h.b16 %v2574
    %v2698 = vunpack.c.l.b16 %v2575
    %v2699 = vunpack.c.h.b16 %v2575
    %v2700 = vunpack.c.l.b16 %v2576
    %v2701 = vunpack.c.h.b16 %v2576
    %v2702 = vunpack.c.l.b16 %v2577
    %v2703 = vunpack.c.h.b16 %v2577
    %v2704 = vunpack.c.l.b16 %v2578
    %v2705 = vunpack.c.h.b16 %v2578
    %v2706 = vunpack.c.l.b16 %v2579
    %v2707 = vunpack.c.h.b16 %v2579
    %v2708 = vunpack.c.l.b16 %v2580
    %v2709 = vunpack.c.h.b16 %v2580
    %v2710 = vunpack.c.l.b16 %v2581
    %v2711 = vunpack.c.h.b16 %v2581
    %v2712 = vunpack.c.l.b16 %v2582
    %v2713 = vunpack.c.h.b16 %v2582
    %v2714 = vunpack.c.l.b16 %v2583
    %v2715 = vunpack.c.h.b16 %v2583
    %v2716 = vunpack.c.l.b16 %v2584
    %v2717 = vunpack.c.h.b16 %v2584
    %v2718 = vunpack.c.l.b16 %v2585
    %v2719 = vunpack.c.h.b16 %v2585
    %v2720 = vunpack.c.l.b16 %v2586
    %v2721 = vunpack.c.h.b16 %v2586
    %v2722 = vunpack.c.l.b16 %v2587
    %v2723 = vunpack.c.h.b16 %v2587
    %v2724 = vunpack.c.l.b16 %v2588
    %v2725 = vunpack.c.h.b16 %v2588
    %v2726 = vpack.c.b16 %v2664, %v2662
    %v2727 = vpack.c.b16 %v2665, %v2663
    %v2728 = vpack.c.b16 %v2668, %v2666
    %v2729 = vpack.c.b16 %v2669, %v2667
    %v2730 = vpack.c.b16 %v2672, %v2670
    %v2731 = vpack.c.b16 %v2673, %v2671
    %v2732 = vpack.c.b16 %v2676, %v2674
    %v2733 = vpack.c.b16 %v2677, %v2675
    %v2734 = vpack.c.b16 %v2680, %v2678
    %v2735 = vpack.c.b16 %v2681, %v2679
    %v2736 = vpack.c.b16 %v2684, %v2682
    %v2737 = vpack.c.b16 %v2685, %v2683
    %v2738 = vpack.c.b16 %v2688, %v2686
    %v2739 = vpack.c.b16 %v2689, %v2687
    %v2740 = vpack.c.b16 %v2692, %v2690
    %v2741 = vpack.c.b16 %v2693, %v2691
    %v2742 = vpack.c.b16 %v2696, %v2694
    %v2743 = vpack.c.b16 %v2697, %v2695
    %v2744 = vpack.c.b16 %v2700, %v2698
    %v2745 = vpack.c.b16 %v2701, %v2699
    %v2746 = vpack.c.b16 %v2704, %v2702
    %v2747 = vpack.c.b16 %v2705, %v2703
    %v2748 = vpack.c.b16 %v2708, %v2706
    %v2749 = vpack.c.b16 %v2709, %v2707
    %v2750 = vpack.c.b16 %v2712, %v2710
    %v2751 = vpack.c.b16 %v2713, %v2711
    %v2752 = vpack.c.b16 %v2716, %v2714
    %v2753 = vpack.c.b16 %v2717, %v2715
    %v2754 = vpack.c.b16 %v2720, %v2718
    %v2755 = vpack.c.b16 %v2721, %v2719
    %v2756 = vpack.c.b16 %v2724, %v2722
    %v2757 = vpack.c.b16 %v2725, %v2723
    %2790 = vmatprep.subr.bf16.mxu0 %v2741
    %2791 = vmatpush1.bf16.msra.mxu0 %v2740
    %2792 = vmatprep.subr.bf16.mxu0 %v2739
    %2793 = vmatpush1.bf16.msra.mxu0 %v2738
    %2794 = vmatprep.subr.bf16.mxu0 %v2737
    %2795 = vmatpush1.bf16.msra.mxu0 %v2736
    %2796 = vmatprep.subr.bf16.mxu0 %v2735
    %2797 = vmatpush1.bf16.msra.mxu0 %v2734
    %2798 = vmatprep.subr.bf16.mxu0 %v2733
    %2799 = vmatpush1.bf16.msra.mxu0 %v2732
    %2800 = vmatprep.subr.bf16.mxu0 %v2731
    %2801 = vmatpush1.bf16.msra.mxu0 %v2730
    %2802 = vmatprep.subr.bf16.mxu0 %v2729
    %2803 = vmatpush1.bf16.msra.mxu0 %v2728
    %2804 = vmatprep.subr.bf16.mxu0 %v2727
    %2805 = vmatpush1.bf16.msra.mxu0 %v2726
    %2806 = vmatprep.subr.bf16.mxu0 %v2757
    %2807 = vmatpush2.bf16.msra.mxu0 %v2756
    %2808 = vmatprep.subr.bf16.mxu0 %v2755
    %2809 = vmatpush2.bf16.msra.mxu0 %v2754
    %2810 = vmatprep.subr.bf16.mxu0 %v2753
    %2811 = vmatpush2.bf16.msra.mxu0 %v2752
    %2812 = vmatprep.subr.bf16.mxu0 %v2751
    %2813 = vmatpush2.bf16.msra.mxu0 %v2750
    %2814 = vmatprep.subr.bf16.mxu0 %v2749
    %2815 = vmatpush2.bf16.msra.mxu0 %v2748
    %2816 = vmatprep.subr.bf16.mxu0 %v2747
    %2817 = vmatpush2.bf16.msra.mxu0 %v2746
    %2818 = vmatprep.subr.bf16.mxu0 %v2745
    %2819 = vmatpush2.bf16.msra.mxu0 %v2744
    %2820 = vmatprep.subr.bf16.mxu0 %v2743
    %2821 = vmatpush2.bf16.msra.mxu0 %v2742
    %2822 = vmatprep.mubr.bf16.mxu0 %v2026
    %2823 = vmatmul.mubr.bf16.gmra.mxu0 %v2025
    %v2824 = vpop.f32.mrf.mxu0
    %v2825 = vadd.f32 %v2624, %v2824
    %v2826 = vpop.f32.mrf.mxu0
    %v2827 = vadd.f32 %v2626, %v2826
    %v2828 = vpop.f32.mrf.mxu0
    %v2829 = vpop.f32.mrf.mxu0
    %2830 = vdwg.mxu0
    %2831 = vmatprep.subr.bf16.mxu0 %v2216
    %2832 = vmatpush1.bf16.msra.mxu0 %v2215
    %2833 = vmatprep.subr.bf16.mxu0 %v2214
    %2834 = vmatpush1.bf16.msra.mxu0 %v2213
    %2835 = vmatprep.subr.bf16.mxu0 %v2212
    %2836 = vmatpush1.bf16.msra.mxu0 %v2211
    %2837 = vmatprep.subr.bf16.mxu0 %v2210
    %2838 = vmatpush1.bf16.msra.mxu0 %v2209
    %2839 = vmatprep.subr.bf16.mxu0 %v2208
    %2840 = vmatpush1.bf16.msra.mxu0 %v2207
    %2841 = vmatprep.subr.bf16.mxu0 %v2206
    %2842 = vmatpush1.bf16.msra.mxu0 %v2205
    %2843 = vmatprep.subr.bf16.mxu0 %v2204
    %2844 = vmatpush1.bf16.msra.mxu0 %v2203
    %2845 = vmatprep.subr.bf16.mxu0 %v2202
    %2846 = vmatpush1.bf16.msra.mxu0 %v2201
    %2847 = vmatprep.subr.bf16.mxu0 %v2232
    %2848 = vmatpush2.bf16.msra.mxu0 %v2231
    %2849 = vmatprep.subr.bf16.mxu0 %v2230
    %2850 = vmatpush2.bf16.msra.mxu0 %v2229
    %2851 = vmatprep.subr.bf16.mxu0 %v2228
    %2852 = vmatpush2.bf16.msra.mxu0 %v2227
    %2853 = vmatprep.subr.bf16.mxu0 %v2226
    %2854 = vmatpush2.bf16.msra.mxu0 %v2225
    %2855 = vmatprep.subr.bf16.mxu0 %v2224
    %2856 = vmatpush2.bf16.msra.mxu0 %v2223
    %2857 = vmatprep.subr.bf16.mxu0 %v2222
    %2858 = vmatpush2.bf16.msra.mxu0 %v2221
    %2859 = vmatprep.subr.bf16.mxu0 %v2220
    %2860 = vmatpush2.bf16.msra.mxu0 %v2219
    %2861 = vmatprep.subr.bf16.mxu0 %v2218
    %2862 = vmatpush2.bf16.msra.mxu0 %v2217
    %2863 = vmatprep.mubr.bf16.mxu0 %v2030
    %2864 = vmatmul.mubr.bf16.gmra.mxu0 %v2029
    %v2865 = vpop.f32.mrf.mxu0
    %v2866 = vadd.f32 0.0, %v2865
    %v2867 = vpop.f32.mrf.mxu0
    %v2868 = vadd.f32 0.0, %v2867
    %v2869 = vpop.f32.mrf.mxu0
    %v2870 = vpop.f32.mrf.mxu0
    %2871 = vdwg.mxu0
    %v2872 = vadd.f32 %v2825, %v2866
    %v2873 = vadd.f32 %v2827, %v2868
    %v2874 = vadd.f32 %v2872, %v2512
    %v2875 = vadd.f32 %v2873, %v2516
    %v2876 = vmax.f32 %v2874, 0.0
    %v2877 = vmax.f32 %v2875, 0.0
    %v2878 = vpack.c.bf16 %v2876, %v2876
    %v2879 = vpack.c.bf16 %v2877, %v2877
    %s2880 = scalar_lea.vmem %s5, 128
    %v2881 = vld [vmem:[%s2880] sm:$0xf]
    %v2882 = vld [vmem:[%s2880 + $0x4] sm:$0xf]
    %v2883 = vld [vmem:[%s2880 + $0x8] sm:$0xf]
    %v2884 = vld [vmem:[%s2880 + $0xc] sm:$0xf]
    %v2885 = vld [vmem:[%s2880 + $0x10] sm:$0xf]
    %v2886 = vld [vmem:[%s2880 + $0x14] sm:$0xf]
    %v2887 = vld [vmem:[%s2880 + $0x18] sm:$0xf]
    %v2888 = vld [vmem:[%s2880 + $0x1c] sm:$0xf]
    %v2889 = vld [vmem:[%s2880 + $0x20] sm:$0xf]
    %v2890 = vld [vmem:[%s2880 + $0x24] sm:$0xf]
    %v2891 = vld [vmem:[%s2880 + $0x28] sm:$0xf]
    %v2892 = vld [vmem:[%s2880 + $0x2c] sm:$0xf]
    %v2893 = vld [vmem:[%s2880 + $0x30] sm:$0xf]
    %v2894 = vld [vmem:[%s2880 + $0x34] sm:$0xf]
    %v2895 = vld [vmem:[%s2880 + $0x38] sm:$0xf]
    %v2896 = vld [vmem:[%s2880 + $0x3c] sm:$0xf]
    %v2897 = vld [vmem:[%s2880 + $0x40] sm:$0xf]
    %v2898 = vld [vmem:[%s2880 + $0x44] sm:$0xf]
    %v2899 = vld [vmem:[%s2880 + $0x48] sm:$0xf]
    %v2900 = vld [vmem:[%s2880 + $0x4c] sm:$0xf]
    %v2901 = vld [vmem:[%s2880 + $0x50] sm:$0xf]
    %v2902 = vld [vmem:[%s2880 + $0x54] sm:$0xf]
    %v2903 = vld [vmem:[%s2880 + $0x58] sm:$0xf]
    %v2904 = vld [vmem:[%s2880 + $0x5c] sm:$0xf]
    %v2905 = vld [vmem:[%s2880 + $0x60] sm:$0xf]
    %v2906 = vld [vmem:[%s2880 + $0x64] sm:$0xf]
    %v2907 = vld [vmem:[%s2880 + $0x68] sm:$0xf]
    %v2908 = vld [vmem:[%s2880 + $0x6c] sm:$0xf]
    %v2909 = vld [vmem:[%s2880 + $0x70] sm:$0xf]
    %v2910 = vld [vmem:[%s2880 + $0x74] sm:$0xf]
    %v2911 = vld [vmem:[%s2880 + $0x78] sm:$0xf]
    %v2912 = vld [vmem:[%s2880 + $0x7c] sm:$0xf]
    %v2945 = vunpack.c.l.b16 %v2881
    %v2946 = vunpack.c.l.b16 %v2882
    %v2947 = vunpack.c.l.b16 %v2883
    %v2948 = vunpack.c.l.b16 %v2884
    %v2949 = vunpack.c.l.b16 %v2885
    %v2950 = vunpack.c.l.b16 %v2886
    %v2951 = vunpack.c.l.b16 %v2887
    %v2952 = vunpack.c.l.b16 %v2888
    %v2953 = vunpack.c.l.b16 %v2889
    %v2954 = vunpack.c.l.b16 %v2890
    %v2955 = vunpack.c.l.b16 %v2891
    %v2956 = vunpack.c.l.b16 %v2892
    %v2957 = vunpack.c.l.b16 %v2893
    %v2958 = vunpack.c.l.b16 %v2894
    %v2959 = vunpack.c.l.b16 %v2895
    %v2960 = vunpack.c.l.b16 %v2896
    %v2961 = vunpack.c.l.b16 %v2897
    %v2962 = vunpack.c.l.b16 %v2898
    %v2963 = vunpack.c.l.b16 %v2899
    %v2964 = vunpack.c.l.b16 %v2900
    %v2965 = vunpack.c.l.b16 %v2901
    %v2966 = vunpack.c.l.b16 %v2902
    %v2967 = vunpack.c.l.b16 %v2903
    %v2968 = vunpack.c.l.b16 %v2904
    %v2969 = vunpack.c.l.b16 %v2905
    %v2970 = vunpack.c.l.b16 %v2906
    %v2971 = vunpack.c.l.b16 %v2907
    %v2972 = vunpack.c.l.b16 %v2908
    %v2973 = vunpack.c.l.b16 %v2909
    %v2974 = vunpack.c.l.b16 %v2910
    %v2975 = vunpack.c.l.b16 %v2911
    %v2976 = vunpack.c.l.b16 %v2912
    %v2977 = vpack.c.b16 %v2946, %v2945
    %v2978 = vpack.c.b16 %v2948, %v2947
    %v2979 = vpack.c.b16 %v2950, %v2949
    %v2980 = vpack.c.b16 %v2952, %v2951
    %v2981 = vpack.c.b16 %v2954, %v2953
    %v2982 = vpack.c.b16 %v2956, %v2955
    %v2983 = vpack.c.b16 %v2958, %v2957
    %v2984 = vpack.c.b16 %v2960, %v2959
    %v2985 = vpack.c.b16 %v2962, %v2961
    %v2986 = vpack.c.b16 %v2964, %v2963
    %v2987 = vpack.c.b16 %v2966, %v2965
    %v2988 = vpack.c.b16 %v2968, %v2967
    %v2989 = vpack.c.b16 %v2970, %v2969
    %v2990 = vpack.c.b16 %v2972, %v2971
    %v2991 = vpack.c.b16 %v2974, %v2973
    %v2992 = vpack.c.b16 %v2976, %v2975
    %3009 = vmatprep.subr.bf16.mxu0 0
    %3010 = vmatpush1.bf16.msra.mxu0 %v2984
    %3011 = vmatprep.subr.bf16.mxu0 0
    %3012 = vmatpush1.bf16.msra.mxu0 %v2983
    %3013 = vmatprep.subr.bf16.mxu0 0
    %3014 = vmatpush1.bf16.msra.mxu0 %v2982
    %3015 = vmatprep.subr.bf16.mxu0 0
    %3016 = vmatpush1.bf16.msra.mxu0 %v2981
    %3017 = vmatprep.subr.bf16.mxu0 0
    %3018 = vmatpush1.bf16.msra.mxu0 %v2980
    %3019 = vmatprep.subr.bf16.mxu0 0
    %3020 = vmatpush1.bf16.msra.mxu0 %v2979
    %3021 = vmatprep.subr.bf16.mxu0 0
    %3022 = vmatpush1.bf16.msra.mxu0 %v2978
    %3023 = vmatprep.subr.bf16.mxu0 0
    %3024 = vmatpush1.bf16.msra.mxu0 %v2977
    %3025 = vmatprep.subr.bf16.mxu0 0
    %3026 = vmatpush2.bf16.msra.mxu0 %v2992
    %3027 = vmatprep.subr.bf16.mxu0 0
    %3028 = vmatpush2.bf16.msra.mxu0 %v2991
    %3029 = vmatprep.subr.bf16.mxu0 0
    %3030 = vmatpush2.bf16.msra.mxu0 %v2990
    %3031 = vmatprep.subr.bf16.mxu0 0
    %3032 = vmatpush2.bf16.msra.mxu0 %v2989
    %3033 = vmatprep.subr.bf16.mxu0 0
    %3034 = vmatpush2.bf16.msra.mxu0 %v2988
    %3035 = vmatprep.subr.bf16.mxu0 0
    %3036 = vmatpush2.bf16.msra.mxu0 %v2987
    %3037 = vmatprep.subr.bf16.mxu0 0
    %3038 = vmatpush2.bf16.msra.mxu0 %v2986
    %3039 = vmatprep.subr.bf16.mxu0 0
    %3040 = vmatpush2.bf16.msra.mxu0 %v2985
    %3041 = vmatprep.mubr.bf16.mxu0 %v2879
    %3042 = vmatmul.mubr.bf16.gmra.mxu0 %v2878
    %v3043 = vpop.f32.mrf.mxu0
    %v3044 = vadd.f32 0.0, %v3043
    %v3045 = vpop.f32.mrf.mxu0
    %v3046 = vpop.f32.mrf.mxu0
    %v3047 = vpop.f32.mrf.mxu0
    %3048 = vdwg.mxu0
    %v3081 = vunpack.c.l.b16 %v2525
    %v3082 = vunpack.c.l.b16 %v2526
    %v3083 = vunpack.c.l.b16 %v2527
    %v3084 = vunpack.c.l.b16 %v2528
    %v3085 = vunpack.c.l.b16 %v2529
    %v3086 = vunpack.c.l.b16 %v2530
    %v3087 = vunpack.c.l.b16 %v2531
    %v3088 = vunpack.c.l.b16 %v2532
    %v3089 = vunpack.c.l.b16 %v2533
    %v3090 = vunpack.c.l.b16 %v2534
    %v3091 = vunpack.c.l.b16 %v2535
    %v3092 = vunpack.c.l.b16 %v2536
    %v3093 = vunpack.c.l.b16 %v2537
    %v3094 = vunpack.c.l.b16 %v2538
    %v3095 = vunpack.c.l.b16 %v2539
    %v3096 = vunpack.c.l.b16 %v2540
    %v3097 = vunpack.c.l.b16 %v2541
    %v3098 = vunpack.c.l.b16 %v2542
    %v3099 = vunpack.c.l.b16 %v2543
    %v3100 = vunpack.c.l.b16 %v2544
    %v3101 = vunpack.c.l.b16 %v2545
    %v3102 = vunpack.c.l.b16 %v2546
    %v3103 = vunpack.c.l.b16 %v2547
    %v3104 = vunpack.c.l.b16 %v2548
    %v3105 = vunpack.c.l.b16 %v2549
    %v3106 = vunpack.c.l.b16 %v2550
    %v3107 = vunpack.c.l.b16 %v2551
    %v3108 = vunpack.c.l.b16 %v2552
    %v3109 = vunpack.c.l.b16 %v2553
    %v3110 = vunpack.c.l.b16 %v2554
    %v3111 = vunpack.c.l.b16 %v2555
    %v3112 = vunpack.c.l.b16 %v2556
    %v3113 = vpack.c.b16 %v3082, %v3081
    %v3114 = vpack.c.b16 %v3084, %v3083
    %v3115 = vpack.c.b16 %v3086, %v3085
    %v3116 = vpack.c.b16 %v3088, %v3087
    %v3117 = vpack.c.b16 %v3090, %v3089
    %v3118 = vpack.c.b16 %v3092, %v3091
    %v3119 = vpack.c.b16 %v3094, %v3093
    %v3120 = vpack.c.b16 %v3096, %v3095
    %v3121 = vpack.c.b16 %v3098, %v3097
    %v3122 = vpack.c.b16 %v3100, %v3099
    %v3123 = vpack.c.b16 %v3102, %v3101
    %v3124 = vpack.c.b16 %v3104, %v3103
    %v3125 = vpack.c.b16 %v3106, %v3105
    %v3126 = vpack.c.b16 %v3108, %v3107
    %v3127 = vpack.c.b16 %v3110, %v3109
    %v3128 = vpack.c.b16 %v3112, %v3111
    %3145 = vmatprep.subr.bf16.mxu0 0
    %3146 = vmatpush1.bf16.msra.mxu0 %v3120
    %3147 = vmatprep.subr.bf16.mxu0 0
    %3148 = vmatpush1.bf16.msra.mxu0 %v3119
    %3149 = vmatprep.subr.bf16.mxu0 0
    %3150 = vmatpush1.bf16.msra.mxu0 %v3118
    %3151 = vmatprep.subr.bf16.mxu0 0
    %3152 = vmatpush1.bf16.msra.mxu0 %v3117
    %3153 = vmatprep.subr.bf16.mxu0 0
    %3154 = vmatpush1.bf16.msra.mxu0 %v3116
    %3155 = vmatprep.subr.bf16.mxu0 0
    %3156 = vmatpush1.bf16.msra.mxu0 %v3115
    %3157 = vmatprep.subr.bf16.mxu0 0
    %3158 = vmatpush1.bf16.msra.mxu0 %v3114
    %3159 = vmatprep.subr.bf16.mxu0 0
    %3160 = vmatpush1.bf16.msra.mxu0 %v3113
    %3161 = vmatprep.subr.bf16.mxu0 0
    %3162 = vmatpush2.bf16.msra.mxu0 %v3128
    %3163 = vmatprep.subr.bf16.mxu0 0
    %3164 = vmatpush2.bf16.msra.mxu0 %v3127
    %3165 = vmatprep.subr.bf16.mxu0 0
    %3166 = vmatpush2.bf16.msra.mxu0 %v3126
    %3167 = vmatprep.subr.bf16.mxu0 0
    %3168 = vmatpush2.bf16.msra.mxu0 %v3125
    %3169 = vmatprep.subr.bf16.mxu0 0
    %3170 = vmatpush2.bf16.msra.mxu0 %v3124
    %3171 = vmatprep.subr.bf16.mxu0 0
    %3172 = vmatpush2.bf16.msra.mxu0 %v3123
    %3173 = vmatprep.subr.bf16.mxu0 0
    %3174 = vmatpush2.bf16.msra.mxu0 %v3122
    %3175 = vmatprep.subr.bf16.mxu0 0
    %3176 = vmatpush2.bf16.msra.mxu0 %v3121
    %3177 = vmatprep.mubr.bf16.mxu0 %v2524
    %3178 = vmatmul.mubr.bf16.gmra.mxu0 %v2523
    %v3179 = vpop.f32.mrf.mxu0
    %v3180 = vadd.f32 %v3044, %v3179
    %v3181 = vpop.f32.mrf.mxu0
    %v3182 = vpop.f32.mrf.mxu0
    %v3183 = vpop.f32.mrf.mxu0
    %3184 = vdwg.mxu0
    %3185 = vmatprep.subr.bf16.mxu0 %v2417
    %3186 = vmatpush1.bf16.msra.mxu0 %v2416
    %3187 = vmatprep.subr.bf16.mxu0 %v2415
    %3188 = vmatpush1.bf16.msra.mxu0 %v2414
    %3189 = vmatprep.subr.bf16.mxu0 %v2413
    %3190 = vmatpush1.bf16.msra.mxu0 %v2412
    %3191 = vmatprep.subr.bf16.mxu0 %v2411
    %3192 = vmatpush1.bf16.msra.mxu0 %v2410
    %3193 = vmatprep.subr.bf16.mxu0 %v2409
    %3194 = vmatpush1.bf16.msra.mxu0 %v2408
    %3195 = vmatprep.subr.bf16.mxu0 %v2407
    %3196 = vmatpush1.bf16.msra.mxu0 %v2406
    %3197 = vmatprep.subr.bf16.mxu0 %v2405
    %3198 = vmatpush1.bf16.msra.mxu0 %v2404
    %3199 = vmatprep.subr.bf16.mxu0 %v2403
    %3200 = vmatpush1.bf16.msra.mxu0 %v2402
    %3201 = vmatprep.subr.bf16.mxu0 %v2433
    %3202 = vmatpush2.bf16.msra.mxu0 %v2432
    %3203 = vmatprep.subr.bf16.mxu0 %v2431
    %3204 = vmatpush2.bf16.msra.mxu0 %v2430
    %3205 = vmatprep.subr.bf16.mxu0 %v2429
    %3206 = vmatpush2.bf16.msra.mxu0 %v2428
    %3207 = vmatprep.subr.bf16.mxu0 %v2427
    %3208 = vmatpush2.bf16.msra.mxu0 %v2426
    %3209 = vmatprep.subr.bf16.mxu0 %v2425
    %3210 = vmatpush2.bf16.msra.mxu0 %v2424
    %3211 = vmatprep.subr.bf16.mxu0 %v2423
    %3212 = vmatpush2.bf16.msra.mxu0 %v2422
    %3213 = vmatprep.subr.bf16.mxu0 %v2421
    %3214 = vmatpush2.bf16.msra.mxu0 %v2420
    %3215 = vmatprep.subr.bf16.mxu0 %v2419
    %3216 = vmatpush2.bf16.msra.mxu0 %v2418
    %3217 = vmatprep.mubr.bf16.mxu0 %v2032
    %3218 = vmatmul.mubr.bf16.gmra.mxu0 %v2031
    %v3219 = vpop.f32.mrf.mxu0
    %v3220 = vadd.f32 0.0, %v3219
    %v3221 = vpop.f32.mrf.mxu0
    %v3222 = vadd.f32 0.0, %v3221
    %v3223 = vpop.f32.mrf.mxu0
    %v3224 = vpop.f32.mrf.mxu0
    %3225 = vdwg.mxu0
    %3226 = vmatprep.subr.bf16.mxu0 %v2741
    %3227 = vmatpush1.bf16.msra.mxu0 %v2740
    %3228 = vmatprep.subr.bf16.mxu0 %v2739
    %3229 = vmatpush1.bf16.msra.mxu0 %v2738
    %3230 = vmatprep.subr.bf16.mxu0 %v2737
    %3231 = vmatpush1.bf16.msra.mxu0 %v2736
    %3232 = vmatprep.subr.bf16.mxu0 %v2735
    %3233 = vmatpush1.bf16.msra.mxu0 %v2734
    %3234 = vmatprep.subr.bf16.mxu0 %v2733
    %3235 = vmatpush1.bf16.msra.mxu0 %v2732
    %3236 = vmatprep.subr.bf16.mxu0 %v2731
    %3237 = vmatpush1.bf16.msra.mxu0 %v2730
    %3238 = vmatprep.subr.bf16.mxu0 %v2729
    %3239 = vmatpush1.bf16.msra.mxu0 %v2728
    %3240 = vmatprep.subr.bf16.mxu0 %v2727
    %3241 = vmatpush1.bf16.msra.mxu0 %v2726
    %3242 = vmatprep.subr.bf16.mxu0 %v2757
    %3243 = vmatpush2.bf16.msra.mxu0 %v2756
    %3244 = vmatprep.subr.bf16.mxu0 %v2755
    %3245 = vmatpush2.bf16.msra.mxu0 %v2754
    %3246 = vmatprep.subr.bf16.mxu0 %v2753
    %3247 = vmatpush2.bf16.msra.mxu0 %v2752
    %3248 = vmatprep.subr.bf16.mxu0 %v2751
    %3249 = vmatpush2.bf16.msra.mxu0 %v2750
    %3250 = vmatprep.subr.bf16.mxu0 %v2749
    %3251 = vmatpush2.bf16.msra.mxu0 %v2748
    %3252 = vmatprep.subr.bf16.mxu0 %v2747
    %3253 = vmatpush2.bf16.msra.mxu0 %v2746
    %3254 = vmatprep.subr.bf16.mxu0 %v2745
    %3255 = vmatpush2.bf16.msra.mxu0 %v2744
    %3256 = vmatprep.subr.bf16.mxu0 %v2743
    %3257 = vmatpush2.bf16.msra.mxu0 %v2742
    %3258 = vmatprep.mubr.bf16.mxu0 %v2030
    %3259 = vmatmul.mubr.bf16.gmra.mxu0 %v2029
    %v3260 = vpop.f32.mrf.mxu0
    %v3261 = vadd.f32 %v3220, %v3260
    %v3262 = vpop.f32.mrf.mxu0
    %v3263 = vadd.f32 %v3222, %v3262
    %v3264 = vpop.f32.mrf.mxu0
    %v3265 = vpop.f32.mrf.mxu0
    %3266 = vdwg.mxu0
    %3267 = vmatprep.subr.bf16.mxu0 %v2216
    %3268 = vmatpush1.bf16.msra.mxu0 %v2215
    %3269 = vmatprep.subr.bf16.mxu0 %v2214
    %3270 = vmatpush1.bf16.msra.mxu0 %v2213
    %3271 = vmatprep.subr.bf16.mxu0 %v2212
    %3272 = vmatpush1.bf16.msra.mxu0 %v2211
    %3273 = vmatprep.subr.bf16.mxu0 %v2210
    %3274 = vmatpush1.bf16.msra.mxu0 %v2209
    %3275 = vmatprep.subr.bf16.mxu0 %v2208
    %3276 = vmatpush1.bf16.msra.mxu0 %v2207
    %3277 = vmatprep.subr.bf16.mxu0 %v2206
    %3278 = vmatpush1.bf16.msra.mxu0 %v2205
    %3279 = vmatprep.subr.bf16.mxu0 %v2204
    %3280 = vmatpush1.bf16.msra.mxu0 %v2203
    %3281 = vmatprep.subr.bf16.mxu0 %v2202
    %3282 = vmatpush1.bf16.msra.mxu0 %v2201
    %3283 = vmatprep.subr.bf16.mxu0 %v2232
    %3284 = vmatpush2.bf16.msra.mxu0 %v2231
    %3285 = vmatprep.subr.bf16.mxu0 %v2230
    %3286 = vmatpush2.bf16.msra.mxu0 %v2229
    %3287 = vmatprep.subr.bf16.mxu0 %v2228
    %3288 = vmatpush2.bf16.msra.mxu0 %v2227
    %3289 = vmatprep.subr.bf16.mxu0 %v2226
    %3290 = vmatpush2.bf16.msra.mxu0 %v2225
    %3291 = vmatprep.subr.bf16.mxu0 %v2224
    %3292 = vmatpush2.bf16.msra.mxu0 %v2223
    %3293 = vmatprep.subr.bf16.mxu0 %v2222
    %3294 = vmatpush2.bf16.msra.mxu0 %v2221
    %3295 = vmatprep.subr.bf16.mxu0 %v2220
    %3296 = vmatpush2.bf16.msra.mxu0 %v2219
    %3297 = vmatprep.subr.bf16.mxu0 %v2218
    %3298 = vmatpush2.bf16.msra.mxu0 %v2217
    %3299 = vmatprep.mubr.bf16.mxu0 %v2034
    %3300 = vmatmul.mubr.bf16.gmra.mxu0 %v2033
    %v3301 = vpop.f32.mrf.mxu0
    %v3302 = vadd.f32 0.0, %v3301
    %v3303 = vpop.f32.mrf.mxu0
    %v3304 = vadd.f32 0.0, %v3303
    %v3305 = vpop.f32.mrf.mxu0
    %v3306 = vpop.f32.mrf.mxu0
    %3307 = vdwg.mxu0
    %v3308 = vadd.f32 %v3261, %v3302
    %v3309 = vadd.f32 %v3263, %v3304
    %v3310 = vadd.f32 %v3308, %v2512
    %v3311 = vadd.f32 %v3309, %v2516
    %v3312 = vmax.f32 %v3310, 0.0
    %v3313 = vmax.f32 %v3311, 0.0
    %v3314 = vpack.c.bf16 %v3312, %v3312
    %v3315 = vpack.c.bf16 %v3313, %v3313
    %s3316 = scalar_lea.vmem %s5, 256
    %v3317 = vld [vmem:[%s3316] sm:$0xf]
    %v3318 = vld [vmem:[%s3316 + $0x4] sm:$0xf]
    %v3319 = vld [vmem:[%s3316 + $0x8] sm:$0xf]
    %v3320 = vld [vmem:[%s3316 + $0xc] sm:$0xf]
    %v3321 = vld [vmem:[%s3316 + $0x10] sm:$0xf]
    %v3322 = vld [vmem:[%s3316 + $0x14] sm:$0xf]
    %v3323 = vld [vmem:[%s3316 + $0x18] sm:$0xf]
    %v3324 = vld [vmem:[%s3316 + $0x1c] sm:$0xf]
    %v3325 = vld [vmem:[%s3316 + $0x20] sm:$0xf]
    %v3326 = vld [vmem:[%s3316 + $0x24] sm:$0xf]
    %v3327 = vld [vmem:[%s3316 + $0x28] sm:$0xf]
    %v3328 = vld [vmem:[%s3316 + $0x2c] sm:$0xf]
    %v3329 = vld [vmem:[%s3316 + $0x30] sm:$0xf]
    %v3330 = vld [vmem:[%s3316 + $0x34] sm:$0xf]
    %v3331 = vld [vmem:[%s3316 + $0x38] sm:$0xf]
    %v3332 = vld [vmem:[%s3316 + $0x3c] sm:$0xf]
    %v3333 = vld [vmem:[%s3316 + $0x40] sm:$0xf]
    %v3334 = vld [vmem:[%s3316 + $0x44] sm:$0xf]
    %v3335 = vld [vmem:[%s3316 + $0x48] sm:$0xf]
    %v3336 = vld [vmem:[%s3316 + $0x4c] sm:$0xf]
    %v3337 = vld [vmem:[%s3316 + $0x50] sm:$0xf]
    %v3338 = vld [vmem:[%s3316 + $0x54] sm:$0xf]
    %v3339 = vld [vmem:[%s3316 + $0x58] sm:$0xf]
    %v3340 = vld [vmem:[%s3316 + $0x5c] sm:$0xf]
    %v3341 = vld [vmem:[%s3316 + $0x60] sm:$0xf]
    %v3342 = vld [vmem:[%s3316 + $0x64] sm:$0xf]
    %v3343 = vld [vmem:[%s3316 + $0x68] sm:$0xf]
    %v3344 = vld [vmem:[%s3316 + $0x6c] sm:$0xf]
    %v3345 = vld [vmem:[%s3316 + $0x70] sm:$0xf]
    %v3346 = vld [vmem:[%s3316 + $0x74] sm:$0xf]
    %v3347 = vld [vmem:[%s3316 + $0x78] sm:$0xf]
    %v3348 = vld [vmem:[%s3316 + $0x7c] sm:$0xf]
    %v3381 = vunpack.c.l.b16 %v3317
    %v3382 = vunpack.c.l.b16 %v3318
    %v3383 = vunpack.c.l.b16 %v3319
    %v3384 = vunpack.c.l.b16 %v3320
    %v3385 = vunpack.c.l.b16 %v3321
    %v3386 = vunpack.c.l.b16 %v3322
    %v3387 = vunpack.c.l.b16 %v3323
    %v3388 = vunpack.c.l.b16 %v3324
    %v3389 = vunpack.c.l.b16 %v3325
    %v3390 = vunpack.c.l.b16 %v3326
    %v3391 = vunpack.c.l.b16 %v3327
    %v3392 = vunpack.c.l.b16 %v3328
    %v3393 = vunpack.c.l.b16 %v3329
    %v3394 = vunpack.c.l.b16 %v3330
    %v3395 = vunpack.c.l.b16 %v3331
    %v3396 = vunpack.c.l.b16 %v3332
    %v3397 = vunpack.c.l.b16 %v3333
    %v3398 = vunpack.c.l.b16 %v3334
    %v3399 = vunpack.c.l.b16 %v3335
    %v3400 = vunpack.c.l.b16 %v3336
    %v3401 = vunpack.c.l.b16 %v3337
    %v3402 = vunpack.c.l.b16 %v3338
    %v3403 = vunpack.c.l.b16 %v3339
    %v3404 = vunpack.c.l.b16 %v3340
    %v3405 = vunpack.c.l.b16 %v3341
    %v3406 = vunpack.c.l.b16 %v3342
    %v3407 = vunpack.c.l.b16 %v3343
    %v3408 = vunpack.c.l.b16 %v3344
    %v3409 = vunpack.c.l.b16 %v3345
    %v3410 = vunpack.c.l.b16 %v3346
    %v3411 = vunpack.c.l.b16 %v3347
    %v3412 = vunpack.c.l.b16 %v3348
    %v3413 = vpack.c.b16 %v3382, %v3381
    %v3414 = vpack.c.b16 %v3384, %v3383
    %v3415 = vpack.c.b16 %v3386, %v3385
    %v3416 = vpack.c.b16 %v3388, %v3387
    %v3417 = vpack.c.b16 %v3390, %v3389
    %v3418 = vpack.c.b16 %v3392, %v3391
    %v3419 = vpack.c.b16 %v3394, %v3393
    %v3420 = vpack.c.b16 %v3396, %v3395
    %v3421 = vpack.c.b16 %v3398, %v3397
    %v3422 = vpack.c.b16 %v3400, %v3399
    %v3423 = vpack.c.b16 %v3402, %v3401
    %v3424 = vpack.c.b16 %v3404, %v3403
    %v3425 = vpack.c.b16 %v3406, %v3405
    %v3426 = vpack.c.b16 %v3408, %v3407
    %v3427 = vpack.c.b16 %v3410, %v3409
    %v3428 = vpack.c.b16 %v3412, %v3411
    %3445 = vmatprep.subr.bf16.mxu0 0
    %3446 = vmatpush1.bf16.msra.mxu0 %v3420
    %3447 = vmatprep.subr.bf16.mxu0 0
    %3448 = vmatpush1.bf16.msra.mxu0 %v3419
    %3449 = vmatprep.subr.bf16.mxu0 0
    %3450 = vmatpush1.bf16.msra.mxu0 %v3418
    %3451 = vmatprep.subr.bf16.mxu0 0
    %3452 = vmatpush1.bf16.msra.mxu0 %v3417
    %3453 = vmatprep.subr.bf16.mxu0 0
    %3454 = vmatpush1.bf16.msra.mxu0 %v3416
    %3455 = vmatprep.subr.bf16.mxu0 0
    %3456 = vmatpush1.bf16.msra.mxu0 %v3415
    %3457 = vmatprep.subr.bf16.mxu0 0
    %3458 = vmatpush1.bf16.msra.mxu0 %v3414
    %3459 = vmatprep.subr.bf16.mxu0 0
    %3460 = vmatpush1.bf16.msra.mxu0 %v3413
    %3461 = vmatprep.subr.bf16.mxu0 0
    %3462 = vmatpush2.bf16.msra.mxu0 %v3428
    %3463 = vmatprep.subr.bf16.mxu0 0
    %3464 = vmatpush2.bf16.msra.mxu0 %v3427
    %3465 = vmatprep.subr.bf16.mxu0 0
    %3466 = vmatpush2.bf16.msra.mxu0 %v3426
    %3467 = vmatprep.subr.bf16.mxu0 0
    %3468 = vmatpush2.bf16.msra.mxu0 %v3425
    %3469 = vmatprep.subr.bf16.mxu0 0
    %3470 = vmatpush2.bf16.msra.mxu0 %v3424
    %3471 = vmatprep.subr.bf16.mxu0 0
    %3472 = vmatpush2.bf16.msra.mxu0 %v3423
    %3473 = vmatprep.subr.bf16.mxu0 0
    %3474 = vmatpush2.bf16.msra.mxu0 %v3422
    %3475 = vmatprep.subr.bf16.mxu0 0
    %3476 = vmatpush2.bf16.msra.mxu0 %v3421
    %3477 = vmatprep.mubr.bf16.mxu0 %v3315
    %3478 = vmatmul.mubr.bf16.gmra.mxu0 %v3314
    %v3479 = vpop.f32.mrf.mxu0
    %v3480 = vadd.f32 0.0, %v3479
    %v3481 = vpop.f32.mrf.mxu0
    %v3482 = vpop.f32.mrf.mxu0
    %v3483 = vpop.f32.mrf.mxu0
    %3484 = vdwg.mxu0
    %v3485 = vadd.f32 %v3180, %v3480
    %3486 = vmatprep.subr.bf16.mxu0 %v2417
    %3487 = vmatpush1.bf16.msra.mxu0 %v2416
    %3488 = vmatprep.subr.bf16.mxu0 %v2415
    %3489 = vmatpush1.bf16.msra.mxu0 %v2414
    %3490 = vmatprep.subr.bf16.mxu0 %v2413
    %3491 = vmatpush1.bf16.msra.mxu0 %v2412
    %3492 = vmatprep.subr.bf16.mxu0 %v2411
    %3493 = vmatpush1.bf16.msra.mxu0 %v2410
    %3494 = vmatprep.subr.bf16.mxu0 %v2409
    %3495 = vmatpush1.bf16.msra.mxu0 %v2408
    %3496 = vmatprep.subr.bf16.mxu0 %v2407
    %3497 = vmatpush1.bf16.msra.mxu0 %v2406
    %3498 = vmatprep.subr.bf16.mxu0 %v2405
    %3499 = vmatpush1.bf16.msra.mxu0 %v2404
    %3500 = vmatprep.subr.bf16.mxu0 %v2403
    %3501 = vmatpush1.bf16.msra.mxu0 %v2402
    %3502 = vmatprep.subr.bf16.mxu0 %v2433
    %3503 = vmatpush2.bf16.msra.mxu0 %v2432
    %3504 = vmatprep.subr.bf16.mxu0 %v2431
    %3505 = vmatpush2.bf16.msra.mxu0 %v2430
    %3506 = vmatprep.subr.bf16.mxu0 %v2429
    %3507 = vmatpush2.bf16.msra.mxu0 %v2428
    %3508 = vmatprep.subr.bf16.mxu0 %v2427
    %3509 = vmatpush2.bf16.msra.mxu0 %v2426
    %3510 = vmatprep.subr.bf16.mxu0 %v2425
    %3511 = vmatpush2.bf16.msra.mxu0 %v2424
    %3512 = vmatprep.subr.bf16.mxu0 %v2423
    %3513 = vmatpush2.bf16.msra.mxu0 %v2422
    %3514 = vmatprep.subr.bf16.mxu0 %v2421
    %3515 = vmatpush2.bf16.msra.mxu0 %v2420
    %3516 = vmatprep.subr.bf16.mxu0 %v2419
    %3517 = vmatpush2.bf16.msra.mxu0 %v2418
    %3518 = vmatprep.mubr.bf16.mxu0 %v2036
    %3519 = vmatmul.mubr.bf16.gmra.mxu0 %v2035
    %v3520 = vpop.f32.mrf.mxu0
    %v3521 = vadd.f32 0.0, %v3520
    %v3522 = vpop.f32.mrf.mxu0
    %v3523 = vadd.f32 0.0, %v3522
    %v3524 = vpop.f32.mrf.mxu0
    %v3525 = vpop.f32.mrf.mxu0
    %3526 = vdwg.mxu0
    %3527 = vmatprep.subr.bf16.mxu0 %v2741
    %3528 = vmatpush1.bf16.msra.mxu0 %v2740
    %3529 = vmatprep.subr.bf16.mxu0 %v2739
    %3530 = vmatpush1.bf16.msra.mxu0 %v2738
    %3531 = vmatprep.subr.bf16.mxu0 %v2737
    %3532 = vmatpush1.bf16.msra.mxu0 %v2736
    %3533 = vmatprep.subr.bf16.mxu0 %v2735
    %3534 = vmatpush1.bf16.msra.mxu0 %v2734
    %3535 = vmatprep.subr.bf16.mxu0 %v2733
    %3536 = vmatpush1.bf16.msra.mxu0 %v2732
    %3537 = vmatprep.subr.bf16.mxu0 %v2731
    %3538 = vmatpush1.bf16.msra.mxu0 %v2730
    %3539 = vmatprep.subr.bf16.mxu0 %v2729
    %3540 = vmatpush1.bf16.msra.mxu0 %v2728
    %3541 = vmatprep.subr.bf16.mxu0 %v2727
    %3542 = vmatpush1.bf16.msra.mxu0 %v2726
    %3543 = vmatprep.subr.bf16.mxu0 %v2757
    %3544 = vmatpush2.bf16.msra.mxu0 %v2756
    %3545 = vmatprep.subr.bf16.mxu0 %v2755
    %3546 = vmatpush2.bf16.msra.mxu0 %v2754
    %3547 = vmatprep.subr.bf16.mxu0 %v2753
    %3548 = vmatpush2.bf16.msra.mxu0 %v2752
    %3549 = vmatprep.subr.bf16.mxu0 %v2751
    %3550 = vmatpush2.bf16.msra.mxu0 %v2750
    %3551 = vmatprep.subr.bf16.mxu0 %v2749
    %3552 = vmatpush2.bf16.msra.mxu0 %v2748
    %3553 = vmatprep.subr.bf16.mxu0 %v2747
    %3554 = vmatpush2.bf16.msra.mxu0 %v2746
    %3555 = vmatprep.subr.bf16.mxu0 %v2745
    %3556 = vmatpush2.bf16.msra.mxu0 %v2744
    %3557 = vmatprep.subr.bf16.mxu0 %v2743
    %3558 = vmatpush2.bf16.msra.mxu0 %v2742
    %3559 = vmatprep.mubr.bf16.mxu0 %v2034
    %3560 = vmatmul.mubr.bf16.gmra.mxu0 %v2033
    %v3561 = vpop.f32.mrf.mxu0
    %v3562 = vadd.f32 %v3521, %v3561
    %v3563 = vpop.f32.mrf.mxu0
    %v3564 = vadd.f32 %v3523, %v3563
    %v3565 = vpop.f32.mrf.mxu0
    %v3566 = vpop.f32.mrf.mxu0
    %3567 = vdwg.mxu0
    %3568 = vmatprep.subr.bf16.mxu0 %v2216
    %3569 = vmatpush1.bf16.msra.mxu0 %v2215
    %3570 = vmatprep.subr.bf16.mxu0 %v2214
    %3571 = vmatpush1.bf16.msra.mxu0 %v2213
    %3572 = vmatprep.subr.bf16.mxu0 %v2212
    %3573 = vmatpush1.bf16.msra.mxu0 %v2211
    %3574 = vmatprep.subr.bf16.mxu0 %v2210
    %3575 = vmatpush1.bf16.msra.mxu0 %v2209
    %3576 = vmatprep.subr.bf16.mxu0 %v2208
    %3577 = vmatpush1.bf16.msra.mxu0 %v2207
    %3578 = vmatprep.subr.bf16.mxu0 %v2206
    %3579 = vmatpush1.bf16.msra.mxu0 %v2205
    %3580 = vmatprep.subr.bf16.mxu0 %v2204
    %3581 = vmatpush1.bf16.msra.mxu0 %v2203
    %3582 = vmatprep.subr.bf16.mxu0 %v2202
    %3583 = vmatpush1.bf16.msra.mxu0 %v2201
    %3584 = vmatprep.subr.bf16.mxu0 %v2232
    %3585 = vmatpush2.bf16.msra.mxu0 %v2231
    %3586 = vmatprep.subr.bf16.mxu0 %v2230
    %3587 = vmatpush2.bf16.msra.mxu0 %v2229
    %3588 = vmatprep.subr.bf16.mxu0 %v2228
    %3589 = vmatpush2.bf16.msra.mxu0 %v2227
    %3590 = vmatprep.subr.bf16.mxu0 %v2226
    %3591 = vmatpush2.bf16.msra.mxu0 %v2225
    %3592 = vmatprep.subr.bf16.mxu0 %v2224
    %3593 = vmatpush2.bf16.msra.mxu0 %v2223
    %3594 = vmatprep.subr.bf16.mxu0 %v2222
    %3595 = vmatpush2.bf16.msra.mxu0 %v2221
    %3596 = vmatprep.subr.bf16.mxu0 %v2220
    %3597 = vmatpush2.bf16.msra.mxu0 %v2219
    %3598 = vmatprep.subr.bf16.mxu0 %v2218
    %3599 = vmatpush2.bf16.msra.mxu0 %v2217
    %3600 = vmatprep.mubr.bf16.mxu0 %v2038
    %3601 = vmatmul.mubr.bf16.gmra.mxu0 %v2037
    %v3602 = vpop.f32.mrf.mxu0
    %v3603 = vadd.f32 0.0, %v3602
    %v3604 = vpop.f32.mrf.mxu0
    %v3605 = vadd.f32 0.0, %v3604
    %v3606 = vpop.f32.mrf.mxu0
    %v3607 = vpop.f32.mrf.mxu0
    %3608 = vdwg.mxu0
    %v3609 = vadd.f32 %v3562, %v3603
    %v3610 = vadd.f32 %v3564, %v3605
    %v3611 = vadd.f32 %v3609, %v2512
    %v3612 = vadd.f32 %v3610, %v2516
    %v3613 = vmax.f32 %v3611, 0.0
    %v3614 = vmax.f32 %v3612, 0.0
    %v3615 = vpack.c.bf16 %v3613, %v3613
    %v3616 = vpack.c.bf16 %v3614, %v3614
    %s3617 = scalar_lea.vmem %s5, 384
    %v3618 = vld [vmem:[%s3617] sm:$0xf]
    %v3619 = vld [vmem:[%s3617 + $0x4] sm:$0xf]
    %v3620 = vld [vmem:[%s3617 + $0x8] sm:$0xf]
    %v3621 = vld [vmem:[%s3617 + $0xc] sm:$0xf]
    %v3622 = vld [vmem:[%s3617 + $0x10] sm:$0xf]
    %v3623 = vld [vmem:[%s3617 + $0x14] sm:$0xf]
    %v3624 = vld [vmem:[%s3617 + $0x18] sm:$0xf]
    %v3625 = vld [vmem:[%s3617 + $0x1c] sm:$0xf]
    %v3626 = vld [vmem:[%s3617 + $0x20] sm:$0xf]
    %v3627 = vld [vmem:[%s3617 + $0x24] sm:$0xf]
    %v3628 = vld [vmem:[%s3617 + $0x28] sm:$0xf]
    %v3629 = vld [vmem:[%s3617 + $0x2c] sm:$0xf]
    %v3630 = vld [vmem:[%s3617 + $0x30] sm:$0xf]
    %v3631 = vld [vmem:[%s3617 + $0x34] sm:$0xf]
    %v3632 = vld [vmem:[%s3617 + $0x38] sm:$0xf]
    %v3633 = vld [vmem:[%s3617 + $0x3c] sm:$0xf]
    %v3634 = vld [vmem:[%s3617 + $0x40] sm:$0xf]
    %v3635 = vld [vmem:[%s3617 + $0x44] sm:$0xf]
    %v3636 = vld [vmem:[%s3617 + $0x48] sm:$0xf]
    %v3637 = vld [vmem:[%s3617 + $0x4c] sm:$0xf]
    %v3638 = vld [vmem:[%s3617 + $0x50] sm:$0xf]
    %v3639 = vld [vmem:[%s3617 + $0x54] sm:$0xf]
    %v3640 = vld [vmem:[%s3617 + $0x58] sm:$0xf]
    %v3641 = vld [vmem:[%s3617 + $0x5c] sm:$0xf]
    %v3642 = vld [vmem:[%s3617 + $0x60] sm:$0xf]
    %v3643 = vld [vmem:[%s3617 + $0x64] sm:$0xf]
    %v3644 = vld [vmem:[%s3617 + $0x68] sm:$0xf]
    %v3645 = vld [vmem:[%s3617 + $0x6c] sm:$0xf]
    %v3646 = vld [vmem:[%s3617 + $0x70] sm:$0xf]
    %v3647 = vld [vmem:[%s3617 + $0x74] sm:$0xf]
    %v3648 = vld [vmem:[%s3617 + $0x78] sm:$0xf]
    %v3649 = vld [vmem:[%s3617 + $0x7c] sm:$0xf]
    %v3682 = vunpack.c.l.b16 %v3618
    %v3683 = vunpack.c.l.b16 %v3619
    %v3684 = vunpack.c.l.b16 %v3620
    %v3685 = vunpack.c.l.b16 %v3621
    %v3686 = vunpack.c.l.b16 %v3622
    %v3687 = vunpack.c.l.b16 %v3623
    %v3688 = vunpack.c.l.b16 %v3624
    %v3689 = vunpack.c.l.b16 %v3625
    %v3690 = vunpack.c.l.b16 %v3626
    %v3691 = vunpack.c.l.b16 %v3627
    %v3692 = vunpack.c.l.b16 %v3628
    %v3693 = vunpack.c.l.b16 %v3629
    %v3694 = vunpack.c.l.b16 %v3630
    %v3695 = vunpack.c.l.b16 %v3631
    %v3696 = vunpack.c.l.b16 %v3632
    %v3697 = vunpack.c.l.b16 %v3633
    %v3698 = vunpack.c.l.b16 %v3634
    %v3699 = vunpack.c.l.b16 %v3635
    %v3700 = vunpack.c.l.b16 %v3636
    %v3701 = vunpack.c.l.b16 %v3637
    %v3702 = vunpack.c.l.b16 %v3638
    %v3703 = vunpack.c.l.b16 %v3639
    %v3704 = vunpack.c.l.b16 %v3640
    %v3705 = vunpack.c.l.b16 %v3641
    %v3706 = vunpack.c.l.b16 %v3642
    %v3707 = vunpack.c.l.b16 %v3643
    %v3708 = vunpack.c.l.b16 %v3644
    %v3709 = vunpack.c.l.b16 %v3645
    %v3710 = vunpack.c.l.b16 %v3646
    %v3711 = vunpack.c.l.b16 %v3647
    %v3712 = vunpack.c.l.b16 %v3648
    %v3713 = vunpack.c.l.b16 %v3649
    %v3714 = vpack.c.b16 %v3683, %v3682
    %v3715 = vpack.c.b16 %v3685, %v3684
    %v3716 = vpack.c.b16 %v3687, %v3686
    %v3717 = vpack.c.b16 %v3689, %v3688
    %v3718 = vpack.c.b16 %v3691, %v3690
    %v3719 = vpack.c.b16 %v3693, %v3692
    %v3720 = vpack.c.b16 %v3695, %v3694
    %v3721 = vpack.c.b16 %v3697, %v3696
    %v3722 = vpack.c.b16 %v3699, %v3698
    %v3723 = vpack.c.b16 %v3701, %v3700
    %v3724 = vpack.c.b16 %v3703, %v3702
    %v3725 = vpack.c.b16 %v3705, %v3704
    %v3726 = vpack.c.b16 %v3707, %v3706
    %v3727 = vpack.c.b16 %v3709, %v3708
    %v3728 = vpack.c.b16 %v3711, %v3710
    %v3729 = vpack.c.b16 %v3713, %v3712
    %3746 = vmatprep.subr.bf16.mxu0 0
    %3747 = vmatpush1.bf16.msra.mxu0 %v3721
    %3748 = vmatprep.subr.bf16.mxu0 0
    %3749 = vmatpush1.bf16.msra.mxu0 %v3720
    %3750 = vmatprep.subr.bf16.mxu0 0
    %3751 = vmatpush1.bf16.msra.mxu0 %v3719
    %3752 = vmatprep.subr.bf16.mxu0 0
    %3753 = vmatpush1.bf16.msra.mxu0 %v3718
    %3754 = vmatprep.subr.bf16.mxu0 0
    %3755 = vmatpush1.bf16.msra.mxu0 %v3717
    %3756 = vmatprep.subr.bf16.mxu0 0
    %3757 = vmatpush1.bf16.msra.mxu0 %v3716
    %3758 = vmatprep.subr.bf16.mxu0 0
    %3759 = vmatpush1.bf16.msra.mxu0 %v3715
    %3760 = vmatprep.subr.bf16.mxu0 0
    %3761 = vmatpush1.bf16.msra.mxu0 %v3714
    %3762 = vmatprep.subr.bf16.mxu0 0
    %3763 = vmatpush2.bf16.msra.mxu0 %v3729
    %3764 = vmatprep.subr.bf16.mxu0 0
    %3765 = vmatpush2.bf16.msra.mxu0 %v3728
    %3766 = vmatprep.subr.bf16.mxu0 0
    %3767 = vmatpush2.bf16.msra.mxu0 %v3727
    %3768 = vmatprep.subr.bf16.mxu0 0
    %3769 = vmatpush2.bf16.msra.mxu0 %v3726
    %3770 = vmatprep.subr.bf16.mxu0 0
    %3771 = vmatpush2.bf16.msra.mxu0 %v3725
    %3772 = vmatprep.subr.bf16.mxu0 0
    %3773 = vmatpush2.bf16.msra.mxu0 %v3724
    %3774 = vmatprep.subr.bf16.mxu0 0
    %3775 = vmatpush2.bf16.msra.mxu0 %v3723
    %3776 = vmatprep.subr.bf16.mxu0 0
    %3777 = vmatpush2.bf16.msra.mxu0 %v3722
    %3778 = vmatprep.mubr.bf16.mxu0 %v3616
    %3779 = vmatmul.mubr.bf16.gmra.mxu0 %v3615
    %v3780 = vpop.f32.mrf.mxu0
    %v3781 = vadd.f32 0.0, %v3780
    %v3782 = vpop.f32.mrf.mxu0
    %v3783 = vpop.f32.mrf.mxu0
    %v3784 = vpop.f32.mrf.mxu0
    %3785 = vdwg.mxu0
    %v3786 = vadd.f32 %v3485, %v3781
    %v3787 = vld [vmem:[%s6] sm:$0x1]
    %v3789 = vlaneseq
    %v3790 = vshrl.u32 %v3789, 7
    %v3791 = vsub.s32 0, %v3790
    %v3792 = vrot.slane %v3787, %v3791
    %v3794 = vadd.f32 %v3786, %v3792
    %vm3795 = vcmask 130048
    %3796 = vst.msk [vmem:[%s7] sm:$0xff] %vm3795, %v3794
    // Predicated region
    $region38: #{_encoder_forward.1} parent=1 // pred_check
      _
    $region39: #{_encoder_forward.1} parent=1 // pred_check_branch
      %3798 = sbr.rel (0) target = $region41
    $region40: #{_encoder_forward.1} parent=1 // pred_region
      _
    $region41: #{_encoder_forward.1} parent=1 // pred_fallthru
      _
    // Predicated region
    $region42: #{_encoder_forward.1} parent=1 // pred_check
      _
    $region43: #{_encoder_forward.1} parent=1 // pred_check_branch
      %3800 = sbr.rel (0) target = $region45
    $region44: #{_encoder_forward.1} parent=1 // pred_region
      _
    $region45: #{_encoder_forward.1} parent=1 // pred_fallthru
      _
    %3801 = vsyncpa [#allocation3], 1
    %3802 = vsyncpa [#allocation5], 1

</llo_original>
